<compile_context>
chip_gen: v7x
topology: tpu7x:2x2x1
jax: 0.10.0
libtpu: 0.0.40
codegen_flags: <defaults>
</compile_context>

<pallas_src>
import math

import jax
import jax.numpy as jnp
from jax import lax
from jax.experimental import pallas as pl
from jax.experimental.pallas import tpu as pltpu


# ----------------------------------------------------------------------------
# Kernel
# ----------------------------------------------------------------------------
def _make_icl_attn_kernel(approx_recip, unroll_heads):
    def kernel(q_ref, k_ref, v_ref,
               wq_ref, wqr_ref, wk_ref, wkr_ref, wvo_ref,
               cos_ref, sin_ref,
               o_ref,
               qh_scr, kh_scr, vh_scr, acc_scr):
        S = q_ref.shape[1]
        E = q_ref.shape[2]
        H = qh_scr.shape[0]
        cdt = wq_ref.dtype                      # MXU operand dtype (bf16/f32)

        q = q_ref[0]                            # (S, E)
        k = k_ref[0]
        v = v_ref[0]

        cos = cos_ref[...]                      # (S, H*E) f32, tiled per head
        sin = sin_ref[...]

        # Head-fused projections; RoPE folded into the weights:
        #   rope(x @ W) = (x @ W) * cos + (x @ rot_half(W)) * sin
        # 1/d_embed scaling is pre-folded into the q-side slabs; W_o is
        # pre-folded into the V slab (wvo).  One full-lane-width VPU RoPE
        # pass per slab and a single cast to compute dtype.
        qh = (jnp.dot(q, wq_ref[...], preferred_element_type=jnp.float32) * cos
              + jnp.dot(q, wqr_ref[...], preferred_element_type=jnp.float32) * sin
              ).astype(cdt)
        kh = (jnp.dot(k, wk_ref[...], preferred_element_type=jnp.float32) * cos
              + jnp.dot(k, wkr_ref[...], preferred_element_type=jnp.float32) * sin
              ).astype(cdt)
        vh = jnp.dot(v, wvo_ref[...],
                     preferred_element_type=jnp.float32).astype(cdt)

        # Stage per-head (S, E) tiles into (H, S, E) scratch so the head loop
        # can index the leading (untiled) dim dynamically.
        for h in range(H):
            sl = slice(h * E, (h + 1) * E)
            qh_scr[h] = qh[:, sl]
            kh_scr[h] = kh[:, sl]
            vh_scr[h] = vh[:, sl]

        acc_scr[...] = jnp.zeros_like(acc_scr)

        def head_body(h, carry):
            qs = qh_scr[h]                      # (S, E) cdt
            ks = kh_scr[h]
            vs = vh_scr[h]

            # scores[q, k] = <qs[q], ks[k]>  (1/d_embed already folded in).
            scores = lax.dot_general(
                qs, ks, (((1,), (1,)), ((), ())),
                preferred_element_type=jnp.float32)

            # In-kernel masks: iota + compare, cheap VPU filler under MXU.
            row = lax.broadcasted_iota(jnp.int32, (S, S), 0)
            col = lax.broadcasted_iota(jnp.int32, (S, S), 1)
            scores = jnp.where(col > row, jnp.float32(-1e30), scores)

            m = jnp.max(scores, axis=-1, keepdims=True)
            e = jnp.exp(scores - m)
            l = jnp.sum(e, axis=-1, keepdims=True)
            probs = e * pl.reciprocal(l, approx=approx_recip)
            # Diagonal zeroed AFTER normalization, no renorm (per reference).
            probs = jnp.where(col == row, jnp.float32(0.0), probs)

            # Reference contracts over the *query* axis ('bhzs,bhzd->bhsd'):
            # out = P^T @ V.  dot_general with lhs contracting dim 0 lets the
            # MXU consume the transposed form directly (no explicit XLU
            # transpose of the (S,S) tile).
            acc_scr[...] += lax.dot_general(
                probs.astype(cdt), vs, (((0,), (0,)), ((), ())),
                preferred_element_type=jnp.float32)
            return carry

        lax.fori_loop(0, H, head_body, 0, unroll=unroll_heads)

        o_ref[0] = acc_scr[...].astype(o_ref.dtype)

    return kernel


# ----------------------------------------------------------------------------
# Wrapper helpers
# ----------------------------------------------------------------------------
def _rope_tables(S, E, base=10000.0):
    half = E // 2
    inv_freq = 1.0 / (base ** (jnp.arange(0, half, dtype=jnp.float32) / half))
    pos = jnp.arange(S, dtype=jnp.float32)
    freqs = pos[:, None] * inv_freq[None, :]                     # (S, E/2)
    cos = jnp.concatenate([jnp.cos(freqs), jnp.cos(freqs)], -1)  # (S, E)
    sin = jnp.concatenate([jnp.sin(freqs), jnp.sin(freqs)], -1)  # (S, E)
    return cos, sin


def _rotate_half_cols(W):
    """rot_half on the output (last) dim of W, so rot_half(x @ W) == x @ rot(W)."""
    half = W.shape[-1] // 2
    return jnp.concatenate([-W[..., half:], W[..., :half]], axis=-1)


def _stack_heads(W):
    """(H, E, E) -> (E, H*E); column h*E + d holds W[h, :, d]."""
    H, E, _ = W.shape
    return jnp.transpose(W, (1, 0, 2)).reshape(E, H * E)


def _estimate_vmem_bytes(S, E, H, cdt_bytes, out_bytes):
    HE = H * E
    const = 5 * E * HE * cdt_bytes + 2 * S * HE * 4        # weight slabs + cos/sin
    io = 2 * (3 * S * E * cdt_bytes + S * E * out_bytes)   # double-buffered q/k/v/out
    slabs = 3 * S * HE * (4 + cdt_bytes)                   # f32 RoPE combine + cdt copies
    scratch = 3 * H * S * E * cdt_bytes + S * E * 4        # (H,S,E)x3 + f32 accumulator
    per_head = 5 * S * S * 4                               # scores / e / probs / iotas
    return const + io + slabs + scratch + per_head


# ----------------------------------------------------------------------------
# Public entry point
# ----------------------------------------------------------------------------
def icl_attention_alt(q, k, v, W_q, W_k, W_v, W_o, *,
                      compute_dtype=jnp.bfloat16,
                      out_dtype=None,
                      approx_reciprocal=True,
                      unroll_heads=None,
                      single_buffer_constants=True,
                      vmem_limit_bytes=None):
    """Pallas forward of ICLAttentionAlt (eval mode: dropouts are identity)."""
    B, S, E = q.shape
    H = W_q.shape[0]
    HE = H * E
    cdt = jnp.dtype(compute_dtype)
    odt = jnp.dtype(out_dtype) if out_dtype is not None else jnp.dtype(q.dtype)
    if unroll_heads is None:
        unroll_heads = bool(S <= 128)

    scale = 1.0 / E                               # attn_scaling, folded into q slabs
    cos, sin = _rope_tables(S, E)
    cos_he = jnp.tile(cos, (1, H))                # (S, H*E): full-lane-width RoPE pass
    sin_he = jnp.tile(sin, (1, H))

    wq_lin = _stack_heads(W_q) * scale
    wq_rot = _stack_heads(_rotate_half_cols(W_q)) * scale
    wk_lin = _stack_heads(W_k)
    wk_rot = _stack_heads(_rotate_half_cols(W_k))

    # Fold W_o into V projection: head_out_h @ W_o_h == P_h^T @ (v @ (W_v_h @ W_o_h)).
    W_o_heads = W_o.reshape(H, E, E)
    W_vo = jnp.einsum('hij,hjk->hik', W_v, W_o_heads,
                      precision=lax.Precision.HIGHEST)
    wvo = _stack_heads(W_vo)

    if vmem_limit_bytes is None:
        est = _estimate_vmem_bytes(S, E, H, cdt.itemsize, odt.itemsize)
        limit = max(int(est * 1.5), 32 * 1024 * 1024)
        try:
            cap = int(0.9 * pltpu.get_tpu_info().vmem_capacity_bytes)
        except Exception:
            cap = 64 * 1024 * 1024
        vmem_limit_bytes = min(limit, cap)

    kernel = _make_icl_attn_kernel(approx_reciprocal, unroll_heads)

    def _call(single_buffer):
        if single_buffer:
            def cspec(shape):
                return pl.BlockSpec(shape, lambda b: (0, 0),
                                    pipeline_mode=pl.Buffered(1))
        else:
            def cspec(shape):
                return pl.BlockSpec(shape, lambda b: (0, 0))

        grid_spec = pltpu.PrefetchScalarGridSpec(
            num_scalar_prefetch=0,
            grid=(B,),
            in_specs=[
                pl.BlockSpec((1, S, E), lambda b: (b, 0, 0)),   # q
                pl.BlockSpec((1, S, E), lambda b: (b, 0, 0)),   # k
                pl.BlockSpec((1, S, E), lambda b: (b, 0, 0)),   # v
                cspec((E, HE)),                                 # W_q (stacked, scaled)
                cspec((E, HE)),                                 # rot_half(W_q) scaled
                cspec((E, HE)),                                 # W_k (stacked)
                cspec((E, HE)),                                 # rot_half(W_k)
                cspec((E, HE)),                                 # W_v @ W_o (folded)
                cspec((S, HE)),                                 # cos tiled to H*E lanes
                cspec((S, HE)),                                 # sin tiled to H*E lanes
            ],
            out_specs=pl.BlockSpec((1, S, E), lambda b: (b, 0, 0)),
            scratch_shapes=[
                pltpu.VMEM((H, S, E), cdt),          # per-head RoPE'd q
                pltpu.VMEM((H, S, E), cdt),          # per-head RoPE'd k
                pltpu.VMEM((H, S, E), cdt),          # per-head folded v
                pltpu.VMEM((S, E), jnp.float32),     # output accumulator
            ],
        )
        fn = pl.pallas_call(
            kernel,
            out_shape=jax.ShapeDtypeStruct((B, S, E), odt),
            grid_spec=grid_spec,
            compiler_params=pltpu.CompilerParams(
                dimension_semantics=("parallel",),
                vmem_limit_bytes=int(vmem_limit_bytes)),
        )
        out = fn(q.astype(cdt), k.astype(cdt), v.astype(cdt),
                 wq_lin.astype(cdt), wq_rot.astype(cdt),
                 wk_lin.astype(cdt), wk_rot.astype(cdt), wvo.astype(cdt),
                 cos_he, sin_he)
        return jax.block_until_ready(out)

    if single_buffer_constants:
        try:
            return _call(True)
        except Exception:
            pass  # pl.Buffered(1) not supported on this build -> default buffering
    return _call(False)


# ----------------------------------------------------------------------------
# Pure-JAX reference (transcription of the PyTorch forward, eval mode)
# ----------------------------------------------------------------------------
def icl_attention_reference(q, k, v, W_q, W_k, W_v, W_o):
    B, S, E = q.shape
    cos, sin = _rope_tables(S, E)

    qh = jnp.einsum('bsz,hzd->bhsd', q, W_q)
    kh = jnp.einsum('bsz,hzd->bhsd', k, W_k)
    vh = jnp.einsum('bsz,hzd->bhsd', v, W_v)

    def rope(x):
        half = E // 2
        rot = jnp.concatenate([-x[..., half:], x[..., :half]], axis=-1)
        return x * cos + rot * sin

    qh = rope(qh)
    kh = rope(kh)

    scores = jnp.einsum('bhqd,bhkd->bhqk', qh, kh)
    causal = jnp.triu(jnp.ones((S, S), dtype=bool), 1)
    scores = jnp.where(causal, -jnp.inf, scores) * (1.0 / E)
    probs = jax.nn.softmax(scores, axis=-1)
    probs = probs * (1.0 - jnp.eye(S, dtype=probs.dtype))
    attn_out = jnp.einsum('bhzs,bhzd->bhsd', probs, vh)
    H = W_q.shape[0]
    attn_out = jnp.transpose(attn_out, (0, 2, 1, 3)).reshape(B, S, H * E)
    return jnp.einsum('bsz,zd->bsd', attn_out, W_o)


if __name__ == "__main__":
    B, H, S, E = 2, 2, 8, 32   # batch, n_heads, seq, d_embed
    key = jax.random.PRNGKey(0)
    ks = jax.random.split(key, 7)
    q = jax.random.normal(ks[0], (B, S, E), jnp.float32)
    k = jax.random.normal(ks[1], (B, S, E), jnp.float32)
    v = jax.random.normal(ks[2], (B, S, E), jnp.float32)

    # Module __init__ uses zero weights; use small deterministic random
    # weights so the kernel path is actually exercised.
    w_scale = 1.0 / math.sqrt(E)
    W_q = jax.random.normal(ks[3], (H, E, E), jnp.float32) * w_scale
    W_k = jax.random.normal(ks[4], (H, E, E), jnp.float32) * w_scale
    W_v = jax.random.normal(ks[5], (H, E, E), jnp.float32) * w_scale
    W_o = jax.random.normal(ks[6], (H * E, E), jnp.float32) * w_scale

    ref = icl_attention_reference(q, k, v, W_q, W_k, W_v, W_o)

    # Exact path (f32 MXU operands, exact reciprocal): tight check.
    out_f32 = jax.block_until_ready(
        icl_attention_alt(q, k, v, W_q, W_k, W_v, W_o,
                          compute_dtype=jnp.float32,
                          approx_reciprocal=False))
    assert out_f32.shape == (B, S, E)
    assert jnp.allclose(out_f32, ref, atol=5e-3, rtol=5e-3), \
        "f32 kernel mismatch vs reference"

    # Default performance path (bf16 MXU operands, approx reciprocal).
    out_bf16 = jax.block_until_ready(
        icl_attention_alt(q, k, v, W_q, W_k, W_v, W_o))
    assert out_bf16.shape == (B, S, E)
    assert jnp.allclose(out_bf16, ref, atol=5e-2, rtol=5e-2), \
        "bf16 kernel mismatch vs reference"

    print("KERNEL_OK")
</pallas_src>

<mosaic_0001>
module attributes {stable_mosaic.version = 11 : i64} {
  func.func @kernel(%arg0: i32, %arg1: memref<1x8x32xf32, #tpu.memory_space<vmem>>, %arg2: memref<1x8x32xf32, #tpu.memory_space<vmem>>, %arg3: memref<1x8x32xf32, #tpu.memory_space<vmem>>, %arg4: memref<32x64xf32, #tpu.memory_space<vmem>>, %arg5: memref<32x64xf32, #tpu.memory_space<vmem>>, %arg6: memref<32x64xf32, #tpu.memory_space<vmem>>, %arg7: memref<32x64xf32, #tpu.memory_space<vmem>>, %arg8: memref<32x64xf32, #tpu.memory_space<vmem>>, %arg9: memref<8x64xf32, #tpu.memory_space<vmem>>, %arg10: memref<8x64xf32, #tpu.memory_space<vmem>>, %arg11: memref<1x8x32xf32, #tpu.memory_space<vmem>>, %arg12: memref<2x8x32xf32, #tpu.memory_space<vmem>>, %arg13: memref<2x8x32xf32, #tpu.memory_space<vmem>>, %arg14: memref<2x8x32xf32, #tpu.memory_space<vmem>>, %arg15: memref<8x32xf32, #tpu.memory_space<vmem>>) attributes {dimension_semantics = [#tpu.dimension_semantics<parallel>], iteration_bounds = array<i64: 2>, scalar_prefetch = 0 : i64, scratch_operands = 4 : i64, tpu.core_type = #tpu.core_type<tc>, window_params = [{transform_indices = @transform_0, window_bounds = array<i64: 1, 8, 32>}, {transform_indices = @transform_1, window_bounds = array<i64: 1, 8, 32>}, {transform_indices = @transform_2, window_bounds = array<i64: 1, 8, 32>}, {pipeline_mode = #tpu.pipeline_mode<synchronous>, transform_indices = @transform_3, window_bounds = array<i64: 32, 64>}, {pipeline_mode = #tpu.pipeline_mode<synchronous>, transform_indices = @transform_4, window_bounds = array<i64: 32, 64>}, {pipeline_mode = #tpu.pipeline_mode<synchronous>, transform_indices = @transform_5, window_bounds = array<i64: 32, 64>}, {pipeline_mode = #tpu.pipeline_mode<synchronous>, transform_indices = @transform_6, window_bounds = array<i64: 32, 64>}, {pipeline_mode = #tpu.pipeline_mode<synchronous>, transform_indices = @transform_7, window_bounds = array<i64: 32, 64>}, {pipeline_mode = #tpu.pipeline_mode<synchronous>, transform_indices = @transform_8, window_bounds = array<i64: 8, 64>}, {pipeline_mode = #tpu.pipeline_mode<synchronous>, transform_indices = @transform_9, window_bounds = array<i64: 8, 64>}, {transform_indices = @transform_10, window_bounds = array<i64: 1, 8, 32>}]} {
    %c0 = arith.constant 0 : index
    %c0_0 = arith.constant 0 : index
    %c0_1 = arith.constant 0 : index
    %0 = vector.load %arg1[%c0, %c0_0, %c0_1] : memref<1x8x32xf32, #tpu.memory_space<vmem>>, vector<1x8x32xf32>
    %1 = vector.shape_cast %0 : vector<1x8x32xf32> to vector<8x32xf32>
    %c0_2 = arith.constant 0 : index
    %c0_3 = arith.constant 0 : index
    %c0_4 = arith.constant 0 : index
    %2 = vector.load %arg2[%c0_2, %c0_3, %c0_4] : memref<1x8x32xf32, #tpu.memory_space<vmem>>, vector<1x8x32xf32>
    %3 = vector.shape_cast %2 : vector<1x8x32xf32> to vector<8x32xf32>
    %c0_5 = arith.constant 0 : index
    %c0_6 = arith.constant 0 : index
    %c0_7 = arith.constant 0 : index
    %4 = vector.load %arg3[%c0_5, %c0_6, %c0_7] : memref<1x8x32xf32, #tpu.memory_space<vmem>>, vector<1x8x32xf32>
    %5 = vector.shape_cast %4 : vector<1x8x32xf32> to vector<8x32xf32>
    %c0_8 = arith.constant 0 : index
    %c0_9 = arith.constant 0 : index
    %6 = vector.load %arg9[%c0_8, %c0_9] : memref<8x64xf32, #tpu.memory_space<vmem>>, vector<8x64xf32>
    %c0_10 = arith.constant 0 : index
    %c0_11 = arith.constant 0 : index
    %7 = vector.load %arg10[%c0_10, %c0_11] : memref<8x64xf32, #tpu.memory_space<vmem>>, vector<8x64xf32>
    %c0_12 = arith.constant 0 : index
    %c0_13 = arith.constant 0 : index
    %8 = vector.load %arg4[%c0_12, %c0_13] : memref<32x64xf32, #tpu.memory_space<vmem>>, vector<32x64xf32>
    %cst = arith.constant dense<0.000000e+00> : vector<8x64xf32>
    %9 = tpu.matmul %1, %8, %cst {dimension_numbers = #tpu.dot_dimension_numbers<[1], [0], [0], [1], [0, 0, 1, 1], [], []>} : vector<8x32xf32>, vector<32x64xf32>, vector<8x64xf32> -> vector<8x64xf32>
    %10 = arith.mulf %9, %6 : vector<8x64xf32>
    %c0_14 = arith.constant 0 : index
    %c0_15 = arith.constant 0 : index
    %11 = vector.load %arg5[%c0_14, %c0_15] : memref<32x64xf32, #tpu.memory_space<vmem>>, vector<32x64xf32>
    %cst_16 = arith.constant dense<0.000000e+00> : vector<8x64xf32>
    %12 = tpu.matmul %1, %11, %cst_16 {dimension_numbers = #tpu.dot_dimension_numbers<[1], [0], [0], [1], [0, 0, 1, 1], [], []>} : vector<8x32xf32>, vector<32x64xf32>, vector<8x64xf32> -> vector<8x64xf32>
    %13 = arith.mulf %12, %7 : vector<8x64xf32>
    %14 = arith.addf %10, %13 : vector<8x64xf32>
    %c0_17 = arith.constant 0 : index
    %c0_18 = arith.constant 0 : index
    %15 = vector.load %arg6[%c0_17, %c0_18] : memref<32x64xf32, #tpu.memory_space<vmem>>, vector<32x64xf32>
    %cst_19 = arith.constant dense<0.000000e+00> : vector<8x64xf32>
    %16 = tpu.matmul %3, %15, %cst_19 {dimension_numbers = #tpu.dot_dimension_numbers<[1], [0], [0], [1], [0, 0, 1, 1], [], []>} : vector<8x32xf32>, vector<32x64xf32>, vector<8x64xf32> -> vector<8x64xf32>
    %17 = arith.mulf %16, %6 : vector<8x64xf32>
    %c0_20 = arith.constant 0 : index
    %c0_21 = arith.constant 0 : index
    %18 = vector.load %arg7[%c0_20, %c0_21] : memref<32x64xf32, #tpu.memory_space<vmem>>, vector<32x64xf32>
    %cst_22 = arith.constant dense<0.000000e+00> : vector<8x64xf32>
    %19 = tpu.matmul %3, %18, %cst_22 {dimension_numbers = #tpu.dot_dimension_numbers<[1], [0], [0], [1], [0, 0, 1, 1], [], []>} : vector<8x32xf32>, vector<32x64xf32>, vector<8x64xf32> -> vector<8x64xf32>
    %20 = arith.mulf %19, %7 : vector<8x64xf32>
    %21 = arith.addf %17, %20 : vector<8x64xf32>
    %c0_23 = arith.constant 0 : index
    %c0_24 = arith.constant 0 : index
    %22 = vector.load %arg8[%c0_23, %c0_24] : memref<32x64xf32, #tpu.memory_space<vmem>>, vector<32x64xf32>
    %cst_25 = arith.constant dense<0.000000e+00> : vector<8x64xf32>
    %23 = tpu.matmul %5, %22, %cst_25 {dimension_numbers = #tpu.dot_dimension_numbers<[1], [0], [0], [1], [0, 0, 1, 1], [], []>} : vector<8x32xf32>, vector<32x64xf32>, vector<8x64xf32> -> vector<8x64xf32>
    %24 = vector.extract_strided_slice %14 {offsets = [0, 0], sizes = [8, 32], strides = [1, 1]} : vector<8x64xf32> to vector<8x32xf32>
    %c0_26 = arith.constant 0 : index
    %c0_27 = arith.constant 0 : index
    %c0_28 = arith.constant 0 : index
    %25 = vector.load %arg12[%c0_26, %c0_27, %c0_28] : memref<2x8x32xf32, #tpu.memory_space<vmem>>, vector<1x8x32xf32>
    %26 = vector.shape_cast %25 : vector<1x8x32xf32> to vector<8x32xf32>
    %27 = vector.shape_cast %24 : vector<8x32xf32> to vector<1x8x32xf32>
    tpu.vector_store %arg12[%c0_26, %c0_27, %c0_28], %27 {strides = array<i32>} : memref<2x8x32xf32, #tpu.memory_space<vmem>>, vector<1x8x32xf32>,
    %28 = vector.extract_strided_slice %21 {offsets = [0, 0], sizes = [8, 32], strides = [1, 1]} : vector<8x64xf32> to vector<8x32xf32>
    %c0_29 = arith.constant 0 : index
    %c0_30 = arith.constant 0 : index
    %c0_31 = arith.constant 0 : index
    %29 = vector.load %arg13[%c0_29, %c0_30, %c0_31] : memref<2x8x32xf32, #tpu.memory_space<vmem>>, vector<1x8x32xf32>
    %30 = vector.shape_cast %29 : vector<1x8x32xf32> to vector<8x32xf32>
    %31 = vector.shape_cast %28 : vector<8x32xf32> to vector<1x8x32xf32>
    tpu.vector_store %arg13[%c0_29, %c0_30, %c0_31], %31 {strides = array<i32>} : memref<2x8x32xf32, #tpu.memory_space<vmem>>, vector<1x8x32xf32>,
    %32 = vector.extract_strided_slice %23 {offsets = [0, 0], sizes = [8, 32], strides = [1, 1]} : vector<8x64xf32> to vector<8x32xf32>
    %c0_32 = arith.constant 0 : index
    %c0_33 = arith.constant 0 : index
    %c0_34 = arith.constant 0 : index
    %33 = vector.load %arg14[%c0_32, %c0_33, %c0_34] : memref<2x8x32xf32, #tpu.memory_space<vmem>>, vector<1x8x32xf32>
    %34 = vector.shape_cast %33 : vector<1x8x32xf32> to vector<8x32xf32>
    %35 = vector.shape_cast %32 : vector<8x32xf32> to vector<1x8x32xf32>
    tpu.vector_store %arg14[%c0_32, %c0_33, %c0_34], %35 {strides = array<i32>} : memref<2x8x32xf32, #tpu.memory_space<vmem>>, vector<1x8x32xf32>,
    %36 = vector.extract_strided_slice %14 {offsets = [0, 32], sizes = [8, 32], strides = [1, 1]} : vector<8x64xf32> to vector<8x32xf32>
    %c1 = arith.constant 1 : index
    %c0_35 = arith.constant 0 : index
    %c0_36 = arith.constant 0 : index
    %37 = vector.load %arg12[%c1, %c0_35, %c0_36] : memref<2x8x32xf32, #tpu.memory_space<vmem>>, vector<1x8x32xf32>
    %38 = vector.shape_cast %37 : vector<1x8x32xf32> to vector<8x32xf32>
    %39 = vector.shape_cast %36 : vector<8x32xf32> to vector<1x8x32xf32>
    tpu.vector_store %arg12[%c1, %c0_35, %c0_36], %39 {strides = array<i32>} : memref<2x8x32xf32, #tpu.memory_space<vmem>>, vector<1x8x32xf32>,
    %40 = vector.extract_strided_slice %21 {offsets = [0, 32], sizes = [8, 32], strides = [1, 1]} : vector<8x64xf32> to vector<8x32xf32>
    %c1_37 = arith.constant 1 : index
    %c0_38 = arith.constant 0 : index
    %c0_39 = arith.constant 0 : index
    %41 = vector.load %arg13[%c1_37, %c0_38, %c0_39] : memref<2x8x32xf32, #tpu.memory_space<vmem>>, vector<1x8x32xf32>
    %42 = vector.shape_cast %41 : vector<1x8x32xf32> to vector<8x32xf32>
    %43 = vector.shape_cast %40 : vector<8x32xf32> to vector<1x8x32xf32>
    tpu.vector_store %arg13[%c1_37, %c0_38, %c0_39], %43 {strides = array<i32>} : memref<2x8x32xf32, #tpu.memory_space<vmem>>, vector<1x8x32xf32>,
    %44 = vector.extract_strided_slice %23 {offsets = [0, 32], sizes = [8, 32], strides = [1, 1]} : vector<8x64xf32> to vector<8x32xf32>
    %c1_40 = arith.constant 1 : index
    %c0_41 = arith.constant 0 : index
    %c0_42 = arith.constant 0 : index
    %45 = vector.load %arg14[%c1_40, %c0_41, %c0_42] : memref<2x8x32xf32, #tpu.memory_space<vmem>>, vector<1x8x32xf32>
    %46 = vector.shape_cast %45 : vector<1x8x32xf32> to vector<8x32xf32>
    %47 = vector.shape_cast %44 : vector<8x32xf32> to vector<1x8x32xf32>
    tpu.vector_store %arg14[%c1_40, %c0_41, %c0_42], %47 {strides = array<i32>} : memref<2x8x32xf32, #tpu.memory_space<vmem>>, vector<1x8x32xf32>,
    %cst_43 = arith.constant 0.000000e+00 : f32
    %48 = vector.broadcast %cst_43 : f32 to vector<8x32xf32>
    %c0_44 = arith.constant 0 : index
    %c0_45 = arith.constant 0 : index
    %49 = vector.load %arg15[%c0_44, %c0_45] : memref<8x32xf32, #tpu.memory_space<vmem>>, vector<8x32xf32>
    tpu.vector_store %arg15[%c0_44, %c0_45], %48 {strides = array<i32>} : memref<8x32xf32, #tpu.memory_space<vmem>>, vector<8x32xf32>,
    %c0_i32 = arith.constant 0 : i32
    %50 = arith.index_cast %c0_i32 : i32 to index
    %c0_46 = arith.constant 0 : index
    %c0_47 = arith.constant 0 : index
    %51 = vector.load %arg12[%50, %c0_46, %c0_47] : memref<2x8x32xf32, #tpu.memory_space<vmem>>, vector<1x8x32xf32>
    %52 = vector.shape_cast %51 : vector<1x8x32xf32> to vector<8x32xf32>
    %53 = arith.index_cast %c0_i32 : i32 to index
    %c0_48 = arith.constant 0 : index
    %c0_49 = arith.constant 0 : index
    %54 = vector.load %arg13[%53, %c0_48, %c0_49] : memref<2x8x32xf32, #tpu.memory_space<vmem>>, vector<1x8x32xf32>
    %55 = vector.shape_cast %54 : vector<1x8x32xf32> to vector<8x32xf32>
    %56 = arith.index_cast %c0_i32 : i32 to index
    %c0_50 = arith.constant 0 : index
    %c0_51 = arith.constant 0 : index
    %57 = vector.load %arg14[%56, %c0_50, %c0_51] : memref<2x8x32xf32, #tpu.memory_space<vmem>>, vector<1x8x32xf32>
    %58 = vector.shape_cast %57 : vector<1x8x32xf32> to vector<8x32xf32>
    %cst_52 = arith.constant dense<0.000000e+00> : vector<8x8xf32>
    %59 = tpu.matmul %52, %55, %cst_52 {dimension_numbers = #tpu.dot_dimension_numbers<[1], [1], [0], [0], [0, 0, 1, 0], [], []>} : vector<8x32xf32>, vector<8x32xf32>, vector<8x8xf32> -> vector<8x8xf32>
    %60 = tpu.iota {dimensions = array<i32: 0>} : vector<8x8xi32>
    %61 = tpu.iota {dimensions = array<i32: 1>} : vector<8x8xi32>
    %62 = arith.cmpi sgt, %61, %60 : vector<8x8xi32>
    %cst_53 = arith.constant -1.000000e+30 : f32
    %63 = vector.broadcast %cst_53 : f32 to vector<8x8xf32>
    %64 = arith.select %62, %63, %59 : vector<8x8xi1>, vector<8x8xf32>
    %cst_54 = arith.constant dense<0xFF800000> : vector<8xf32>
    %65 = vector.multi_reduction <maximumf>, %64, %cst_54 [1] : vector<8x8xf32> to vector<8xf32>
    %66 = vector.shape_cast %65 : vector<8xf32> to vector<8x1xf32>
    %67 = vector.broadcast %66 : vector<8x1xf32> to vector<8x8xf32>
    %68 = arith.subf %64, %67 : vector<8x8xf32>
    %69 = math.exp %68 : vector<8x8xf32>
    %cst_55 = arith.constant dense<0.000000e+00> : vector<8xf32>
    %70 = vector.multi_reduction <add>, %69, %cst_55 [1] : vector<8x8xf32> to vector<8xf32>
    %71 = vector.shape_cast %70 : vector<8xf32> to vector<8x1xf32>
    %72 = tpu.reciprocal %71 : vector<8x1xf32> -> vector<8x1xf32>
    %73 = vector.broadcast %72 : vector<8x1xf32> to vector<8x8xf32>
    %74 = arith.mulf %69, %73 : vector<8x8xf32>
    %75 = arith.cmpi eq, %61, %60 : vector<8x8xi32>
    %cst_56 = arith.constant 0.000000e+00 : f32
    %76 = vector.broadcast %cst_56 : f32 to vector<8x8xf32>
    %77 = arith.select %75, %76, %74 : vector<8x8xi1>, vector<8x8xf32>
    %c0_57 = arith.constant 0 : index
    %c0_58 = arith.constant 0 : index
    %78 = vector.load %arg15[%c0_57, %c0_58] : memref<8x32xf32, #tpu.memory_space<vmem>>, vector<8x32xf32>
    %cst_59 = arith.constant dense<0.000000e+00> : vector<8x32xf32>
    %79 = tpu.matmul %77, %58, %cst_59 {dimension_numbers = #tpu.dot_dimension_numbers<[0], [0], [1], [1], [0, 1, 1, 1], [], []>} : vector<8x8xf32>, vector<8x32xf32>, vector<8x32xf32> -> vector<8x32xf32>
    %80 = arith.addf %78, %79 : vector<8x32xf32>
    %c0_60 = arith.constant 0 : index
    %c0_61 = arith.constant 0 : index
    %81 = vector.load %arg15[%c0_60, %c0_61] : memref<8x32xf32, #tpu.memory_space<vmem>>, vector<8x32xf32>
    tpu.vector_store %arg15[%c0_60, %c0_61], %80 {strides = array<i32>} : memref<8x32xf32, #tpu.memory_space<vmem>>, vector<8x32xf32>,
    %c1_i32 = arith.constant 1 : i32
    %82 = arith.index_cast %c1_i32 : i32 to index
    %c0_62 = arith.constant 0 : index
    %c0_63 = arith.constant 0 : index
    %83 = vector.load %arg12[%82, %c0_62, %c0_63] : memref<2x8x32xf32, #tpu.memory_space<vmem>>, vector<1x8x32xf32>
    %84 = vector.shape_cast %83 : vector<1x8x32xf32> to vector<8x32xf32>
    %85 = arith.index_cast %c1_i32 : i32 to index
    %c0_64 = arith.constant 0 : index
    %c0_65 = arith.constant 0 : index
    %86 = vector.load %arg13[%85, %c0_64, %c0_65] : memref<2x8x32xf32, #tpu.memory_space<vmem>>, vector<1x8x32xf32>
    %87 = vector.shape_cast %86 : vector<1x8x32xf32> to vector<8x32xf32>
    %88 = arith.index_cast %c1_i32 : i32 to index
    %c0_66 = arith.constant 0 : index
    %c0_67 = arith.constant 0 : index
    %89 = vector.load %arg14[%88, %c0_66, %c0_67] : memref<2x8x32xf32, #tpu.memory_space<vmem>>, vector<1x8x32xf32>
    %90 = vector.shape_cast %89 : vector<1x8x32xf32> to vector<8x32xf32>
    %cst_68 = arith.constant dense<0.000000e+00> : vector<8x8xf32>
    %91 = tpu.matmul %84, %87, %cst_68 {dimension_numbers = #tpu.dot_dimension_numbers<[1], [1], [0], [0], [0, 0, 1, 0], [], []>} : vector<8x32xf32>, vector<8x32xf32>, vector<8x8xf32> -> vector<8x8xf32>
    %92 = tpu.iota {dimensions = array<i32: 0>} : vector<8x8xi32>
    %93 = tpu.iota {dimensions = array<i32: 1>} : vector<8x8xi32>
    %94 = arith.cmpi sgt, %93, %92 : vector<8x8xi32>
    %cst_69 = arith.constant -1.000000e+30 : f32
    %95 = vector.broadcast %cst_69 : f32 to vector<8x8xf32>
    %96 = arith.select %94, %95, %91 : vector<8x8xi1>, vector<8x8xf32>
    %cst_70 = arith.constant dense<0xFF800000> : vector<8xf32>
    %97 = vector.multi_reduction <maximumf>, %96, %cst_70 [1] : vector<8x8xf32> to vector<8xf32>
    %98 = vector.shape_cast %97 : vector<8xf32> to vector<8x1xf32>
    %99 = vector.broadcast %98 : vector<8x1xf32> to vector<8x8xf32>
    %100 = arith.subf %96, %99 : vector<8x8xf32>
    %101 = math.exp %100 : vector<8x8xf32>
    %cst_71 = arith.constant dense<0.000000e+00> : vector<8xf32>
    %102 = vector.multi_reduction <add>, %101, %cst_71 [1] : vector<8x8xf32> to vector<8xf32>
    %103 = vector.shape_cast %102 : vector<8xf32> to vector<8x1xf32>
    %104 = tpu.reciprocal %103 : vector<8x1xf32> -> vector<8x1xf32>
    %105 = vector.broadcast %104 : vector<8x1xf32> to vector<8x8xf32>
    %106 = arith.mulf %101, %105 : vector<8x8xf32>
    %107 = arith.cmpi eq, %93, %92 : vector<8x8xi32>
    %cst_72 = arith.constant 0.000000e+00 : f32
    %108 = vector.broadcast %cst_72 : f32 to vector<8x8xf32>
    %109 = arith.select %107, %108, %106 : vector<8x8xi1>, vector<8x8xf32>
    %c0_73 = arith.constant 0 : index
    %c0_74 = arith.constant 0 : index
    %110 = vector.load %arg15[%c0_73, %c0_74] : memref<8x32xf32, #tpu.memory_space<vmem>>, vector<8x32xf32>
    %cst_75 = arith.constant dense<0.000000e+00> : vector<8x32xf32>
    %111 = tpu.matmul %109, %90, %cst_75 {dimension_numbers = #tpu.dot_dimension_numbers<[0], [0], [1], [1], [0, 1, 1, 1], [], []>} : vector<8x8xf32>, vector<8x32xf32>, vector<8x32xf32> -> vector<8x32xf32>
    %112 = arith.addf %110, %111 : vector<8x32xf32>
    %c0_76 = arith.constant 0 : index
    %c0_77 = arith.constant 0 : index
    %113 = vector.load %arg15[%c0_76, %c0_77] : memref<8x32xf32, #tpu.memory_space<vmem>>, vector<8x32xf32>
    tpu.vector_store %arg15[%c0_76, %c0_77], %112 {strides = array<i32>} : memref<8x32xf32, #tpu.memory_space<vmem>>, vector<8x32xf32>,
    %c2_i32 = arith.constant 2 : i32
    %c0_78 = arith.constant 0 : index
    %c0_79 = arith.constant 0 : index
    %114 = vector.load %arg15[%c0_78, %c0_79] : memref<8x32xf32, #tpu.memory_space<vmem>>, vector<8x32xf32>
    %c0_80 = arith.constant 0 : index
    %c0_81 = arith.constant 0 : index
    %c0_82 = arith.constant 0 : index
    %115 = vector.load %arg11[%c0_80, %c0_81, %c0_82] : memref<1x8x32xf32, #tpu.memory_space<vmem>>, vector<1x8x32xf32>
    %116 = vector.shape_cast %115 : vector<1x8x32xf32> to vector<8x32xf32>
    %117 = vector.shape_cast %114 : vector<8x32xf32> to vector<1x8x32xf32>
    tpu.vector_store %arg11[%c0_80, %c0_81, %c0_82], %117 {strides = array<i32>} : memref<1x8x32xf32, #tpu.memory_space<vmem>>, vector<1x8x32xf32>,
    return
  }
  func.func @transform_0(%arg0: i32) -> (i32, i32, i32) {
    %c0_i32 = arith.constant 0 : i32
    %c0_i32_0 = arith.constant 0 : i32
    %c0_i32_1 = arith.constant 0 : i32
    return %arg0, %c0_i32, %c0_i32_0 : i32, i32, i32
  }
  func.func @transform_1(%arg0: i32) -> (i32, i32, i32) {
    %c0_i32 = arith.constant 0 : i32
    %c0_i32_0 = arith.constant 0 : i32
    %c0_i32_1 = arith.constant 0 : i32
    return %arg0, %c0_i32, %c0_i32_0 : i32, i32, i32
  }
  func.func @transform_2(%arg0: i32) -> (i32, i32, i32) {
    %c0_i32 = arith.constant 0 : i32
    %c0_i32_0 = arith.constant 0 : i32
    %c0_i32_1 = arith.constant 0 : i32
    return %arg0, %c0_i32, %c0_i32_0 : i32, i32, i32
  }
  func.func @transform_3(%arg0: i32) -> (i32, i32) {
    %c0_i32 = arith.constant 0 : i32
    %c0_i32_0 = arith.constant 0 : i32
    %c0_i32_1 = arith.constant 0 : i32
    return %c0_i32, %c0_i32_0 : i32, i32
  }
  func.func @transform_4(%arg0: i32) -> (i32, i32) {
    %c0_i32 = arith.constant 0 : i32
    %c0_i32_0 = arith.constant 0 : i32
    %c0_i32_1 = arith.constant 0 : i32
    return %c0_i32, %c0_i32_0 : i32, i32
  }
  func.func @transform_5(%arg0: i32) -> (i32, i32) {
    %c0_i32 = arith.constant 0 : i32
    %c0_i32_0 = arith.constant 0 : i32
    %c0_i32_1 = arith.constant 0 : i32
    return %c0_i32, %c0_i32_0 : i32, i32
  }
  func.func @transform_6(%arg0: i32) -> (i32, i32) {
    %c0_i32 = arith.constant 0 : i32
    %c0_i32_0 = arith.constant 0 : i32
    %c0_i32_1 = arith.constant 0 : i32
    return %c0_i32, %c0_i32_0 : i32, i32
  }
  func.func @transform_7(%arg0: i32) -> (i32, i32) {
    %c0_i32 = arith.constant 0 : i32
    %c0_i32_0 = arith.constant 0 : i32
    %c0_i32_1 = arith.constant 0 : i32
    return %c0_i32, %c0_i32_0 : i32, i32
  }
  func.func @transform_8(%arg0: i32) -> (i32, i32) {
    %c0_i32 = arith.constant 0 : i32
    %c0_i32_0 = arith.constant 0 : i32
    %c0_i32_1 = arith.constant 0 : i32
    return %c0_i32, %c0_i32_0 : i32, i32
  }
  func.func @transform_9(%arg0: i32) -> (i32, i32) {
    %c0_i32 = arith.constant 0 : i32
    %c0_i32_0 = arith.constant 0 : i32
    %c0_i32_1 = arith.constant 0 : i32
    return %c0_i32, %c0_i32_0 : i32, i32
  }
  func.func @transform_10(%arg0: i32) -> (i32, i32, i32) {
    %c0_i32 = arith.constant 0 : i32
    %c0_i32_0 = arith.constant 0 : i32
    %c0_i32_1 = arith.constant 0 : i32
    return %arg0, %c0_i32, %c0_i32_0 : i32, i32, i32
  }
}

module attributes {stable_mosaic.version = 11 : i64} {
  func.func @kernel(%arg0: i32, %arg1: memref<1x8x32xf32, #tpu.memory_space<vmem>>, %arg2: memref<1x8x32xf32, #tpu.memory_space<vmem>>, %arg3: memref<1x8x32xf32, #tpu.memory_space<vmem>>, %arg4: memref<32x64xf32, #tpu.memory_space<vmem>>, %arg5: memref<32x64xf32, #tpu.memory_space<vmem>>, %arg6: memref<32x64xf32, #tpu.memory_space<vmem>>, %arg7: memref<32x64xf32, #tpu.memory_space<vmem>>, %arg8: memref<32x64xf32, #tpu.memory_space<vmem>>, %arg9: memref<8x64xf32, #tpu.memory_space<vmem>>, %arg10: memref<8x64xf32, #tpu.memory_space<vmem>>, %arg11: memref<1x8x32xf32, #tpu.memory_space<vmem>>, %arg12: memref<2x8x32xf32, #tpu.memory_space<vmem>>, %arg13: memref<2x8x32xf32, #tpu.memory_space<vmem>>, %arg14: memref<2x8x32xf32, #tpu.memory_space<vmem>>, %arg15: memref<8x32xf32, #tpu.memory_space<vmem>>) attributes {dimension_semantics = [#tpu.dimension_semantics<parallel>], iteration_bounds = array<i64: 2>, scalar_prefetch = 0 : i64, scratch_operands = 4 : i64, tpu.core_type = #tpu.core_type<tc>, window_params = [{transform_indices = @transform_0, window_bounds = array<i64: 1, 8, 32>}, {transform_indices = @transform_1, window_bounds = array<i64: 1, 8, 32>}, {transform_indices = @transform_2, window_bounds = array<i64: 1, 8, 32>}, {pipeline_mode = #tpu.pipeline_mode<synchronous>, transform_indices = @transform_3, window_bounds = array<i64: 32, 64>}, {pipeline_mode = #tpu.pipeline_mode<synchronous>, transform_indices = @transform_4, window_bounds = array<i64: 32, 64>}, {pipeline_mode = #tpu.pipeline_mode<synchronous>, transform_indices = @transform_5, window_bounds = array<i64: 32, 64>}, {pipeline_mode = #tpu.pipeline_mode<synchronous>, transform_indices = @transform_6, window_bounds = array<i64: 32, 64>}, {pipeline_mode = #tpu.pipeline_mode<synchronous>, transform_indices = @transform_7, window_bounds = array<i64: 32, 64>}, {pipeline_mode = #tpu.pipeline_mode<synchronous>, transform_indices = @transform_8, window_bounds = array<i64: 8, 64>}, {pipeline_mode = #tpu.pipeline_mode<synchronous>, transform_indices = @transform_9, window_bounds = array<i64: 8, 64>}, {transform_indices = @transform_10, window_bounds = array<i64: 1, 8, 32>}]} {
    %c0 = arith.constant 0 : index
    %c0_0 = arith.constant 0 : index
    %c0_1 = arith.constant 0 : index
    %0 = vector.load %arg1[%c0, %c0_0, %c0_1] : memref<1x8x32xf32, #tpu.memory_space<vmem>>, vector<1x8x32xf32>
    %1 = vector.shape_cast %0 : vector<1x8x32xf32> to vector<8x32xf32>
    %c0_2 = arith.constant 0 : index
    %c0_3 = arith.constant 0 : index
    %c0_4 = arith.constant 0 : index
    %2 = vector.load %arg2[%c0_2, %c0_3, %c0_4] : memref<1x8x32xf32, #tpu.memory_space<vmem>>, vector<1x8x32xf32>
    %3 = vector.shape_cast %2 : vector<1x8x32xf32> to vector<8x32xf32>
    %c0_5 = arith.constant 0 : index
    %c0_6 = arith.constant 0 : index
    %c0_7 = arith.constant 0 : index
    %4 = vector.load %arg3[%c0_5, %c0_6, %c0_7] : memref<1x8x32xf32, #tpu.memory_space<vmem>>, vector<1x8x32xf32>
    %5 = vector.shape_cast %4 : vector<1x8x32xf32> to vector<8x32xf32>
    %c0_8 = arith.constant 0 : index
    %c0_9 = arith.constant 0 : index
    %6 = vector.load %arg9[%c0_8, %c0_9] : memref<8x64xf32, #tpu.memory_space<vmem>>, vector<8x64xf32>
    %c0_10 = arith.constant 0 : index
    %c0_11 = arith.constant 0 : index
    %7 = vector.load %arg10[%c0_10, %c0_11] : memref<8x64xf32, #tpu.memory_space<vmem>>, vector<8x64xf32>
    %c0_12 = arith.constant 0 : index
    %c0_13 = arith.constant 0 : index
    %8 = vector.load %arg4[%c0_12, %c0_13] : memref<32x64xf32, #tpu.memory_space<vmem>>, vector<32x64xf32>
    %cst = arith.constant dense<0.000000e+00> : vector<8x64xf32>
    %9 = tpu.matmul %1, %8, %cst {dimension_numbers = #tpu.dot_dimension_numbers<[1], [0], [0], [1], [0, 0, 1, 1], [], []>} : vector<8x32xf32>, vector<32x64xf32>, vector<8x64xf32> -> vector<8x64xf32>
    %10 = arith.mulf %9, %6 : vector<8x64xf32>
    %c0_14 = arith.constant 0 : index
    %c0_15 = arith.constant 0 : index
    %11 = vector.load %arg5[%c0_14, %c0_15] : memref<32x64xf32, #tpu.memory_space<vmem>>, vector<32x64xf32>
    %cst_16 = arith.constant dense<0.000000e+00> : vector<8x64xf32>
    %12 = tpu.matmul %1, %11, %cst_16 {dimension_numbers = #tpu.dot_dimension_numbers<[1], [0], [0], [1], [0, 0, 1, 1], [], []>} : vector<8x32xf32>, vector<32x64xf32>, vector<8x64xf32> -> vector<8x64xf32>
    %13 = arith.mulf %12, %7 : vector<8x64xf32>
    %14 = arith.addf %10, %13 : vector<8x64xf32>
    %c0_17 = arith.constant 0 : index
    %c0_18 = arith.constant 0 : index
    %15 = vector.load %arg6[%c0_17, %c0_18] : memref<32x64xf32, #tpu.memory_space<vmem>>, vector<32x64xf32>
    %cst_19 = arith.constant dense<0.000000e+00> : vector<8x64xf32>
    %16 = tpu.matmul %3, %15, %cst_19 {dimension_numbers = #tpu.dot_dimension_numbers<[1], [0], [0], [1], [0, 0, 1, 1], [], []>} : vector<8x32xf32>, vector<32x64xf32>, vector<8x64xf32> -> vector<8x64xf32>
    %17 = arith.mulf %16, %6 : vector<8x64xf32>
    %c0_20 = arith.constant 0 : index
    %c0_21 = arith.constant 0 : index
    %18 = vector.load %arg7[%c0_20, %c0_21] : memref<32x64xf32, #tpu.memory_space<vmem>>, vector<32x64xf32>
    %cst_22 = arith.constant dense<0.000000e+00> : vector<8x64xf32>
    %19 = tpu.matmul %3, %18, %cst_22 {dimension_numbers = #tpu.dot_dimension_numbers<[1], [0], [0], [1], [0, 0, 1, 1], [], []>} : vector<8x32xf32>, vector<32x64xf32>, vector<8x64xf32> -> vector<8x64xf32>
    %20 = arith.mulf %19, %7 : vector<8x64xf32>
    %21 = arith.addf %17, %20 : vector<8x64xf32>
    %c0_23 = arith.constant 0 : index
    %c0_24 = arith.constant 0 : index
    %22 = vector.load %arg8[%c0_23, %c0_24] : memref<32x64xf32, #tpu.memory_space<vmem>>, vector<32x64xf32>
    %cst_25 = arith.constant dense<0.000000e+00> : vector<8x64xf32>
    %23 = tpu.matmul %5, %22, %cst_25 {dimension_numbers = #tpu.dot_dimension_numbers<[1], [0], [0], [1], [0, 0, 1, 1], [], []>} : vector<8x32xf32>, vector<32x64xf32>, vector<8x64xf32> -> vector<8x64xf32>
    %24 = vector.extract_strided_slice %14 {offsets = [0, 0], sizes = [8, 32], strides = [1, 1]} : vector<8x64xf32> to vector<8x32xf32>
    %c0_26 = arith.constant 0 : index
    %c0_27 = arith.constant 0 : index
    %c0_28 = arith.constant 0 : index
    %25 = vector.load %arg12[%c0_26, %c0_27, %c0_28] : memref<2x8x32xf32, #tpu.memory_space<vmem>>, vector<1x8x32xf32>
    %26 = vector.shape_cast %25 : vector<1x8x32xf32> to vector<8x32xf32>
    %27 = vector.shape_cast %24 : vector<8x32xf32> to vector<1x8x32xf32>
    tpu.vector_store %arg12[%c0_26, %c0_27, %c0_28], %27 {strides = array<i32>} : memref<2x8x32xf32, #tpu.memory_space<vmem>>, vector<1x8x32xf32>,
    %28 = vector.extract_strided_slice %21 {offsets = [0, 0], sizes = [8, 32], strides = [1, 1]} : vector<8x64xf32> to vector<8x32xf32>
    %c0_29 = arith.constant 0 : index
    %c0_30 = arith.constant 0 : index
    %c0_31 = arith.constant 0 : index
    %29 = vector.load %arg13[%c0_29, %c0_30, %c0_31] : memref<2x8x32xf32, #tpu.memory_space<vmem>>, vector<1x8x32xf32>
    %30 = vector.shape_cast %29 : vector<1x8x32xf32> to vector<8x32xf32>
    %31 = vector.shape_cast %28 : vector<8x32xf32> to vector<1x8x32xf32>
    tpu.vector_store %arg13[%c0_29, %c0_30, %c0_31], %31 {strides = array<i32>} : memref<2x8x32xf32, #tpu.memory_space<vmem>>, vector<1x8x32xf32>,
    %32 = vector.extract_strided_slice %23 {offsets = [0, 0], sizes = [8, 32], strides = [1, 1]} : vector<8x64xf32> to vector<8x32xf32>
    %c0_32 = arith.constant 0 : index
    %c0_33 = arith.constant 0 : index
    %c0_34 = arith.constant 0 : index
    %33 = vector.load %arg14[%c0_32, %c0_33, %c0_34] : memref<2x8x32xf32, #tpu.memory_space<vmem>>, vector<1x8x32xf32>
    %34 = vector.shape_cast %33 : vector<1x8x32xf32> to vector<8x32xf32>
    %35 = vector.shape_cast %32 : vector<8x32xf32> to vector<1x8x32xf32>
    tpu.vector_store %arg14[%c0_32, %c0_33, %c0_34], %35 {strides = array<i32>} : memref<2x8x32xf32, #tpu.memory_space<vmem>>, vector<1x8x32xf32>,
    %36 = vector.extract_strided_slice %14 {offsets = [0, 32], sizes = [8, 32], strides = [1, 1]} : vector<8x64xf32> to vector<8x32xf32>
    %c1 = arith.constant 1 : index
    %c0_35 = arith.constant 0 : index
    %c0_36 = arith.constant 0 : index
    %37 = vector.load %arg12[%c1, %c0_35, %c0_36] : memref<2x8x32xf32, #tpu.memory_space<vmem>>, vector<1x8x32xf32>
    %38 = vector.shape_cast %37 : vector<1x8x32xf32> to vector<8x32xf32>
    %39 = vector.shape_cast %36 : vector<8x32xf32> to vector<1x8x32xf32>
    tpu.vector_store %arg12[%c1, %c0_35, %c0_36], %39 {strides = array<i32>} : memref<2x8x32xf32, #tpu.memory_space<vmem>>, vector<1x8x32xf32>,
    %40 = vector.extract_strided_slice %21 {offsets = [0, 32], sizes = [8, 32], strides = [1, 1]} : vector<8x64xf32> to vector<8x32xf32>
    %c1_37 = arith.constant 1 : index
    %c0_38 = arith.constant 0 : index
    %c0_39 = arith.constant 0 : index
    %41 = vector.load %arg13[%c1_37, %c0_38, %c0_39] : memref<2x8x32xf32, #tpu.memory_space<vmem>>, vector<1x8x32xf32>
    %42 = vector.shape_cast %41 : vector<1x8x32xf32> to vector<8x32xf32>
    %43 = vector.shape_cast %40 : vector<8x32xf32> to vector<1x8x32xf32>
    tpu.vector_store %arg13[%c1_37, %c0_38, %c0_39], %43 {strides = array<i32>} : memref<2x8x32xf32, #tpu.memory_space<vmem>>, vector<1x8x32xf32>,
    %44 = vector.extract_strided_slice %23 {offsets = [0, 32], sizes = [8, 32], strides = [1, 1]} : vector<8x64xf32> to vector<8x32xf32>
    %c1_40 = arith.constant 1 : index
    %c0_41 = arith.constant 0 : index
    %c0_42 = arith.constant 0 : index
    %45 = vector.load %arg14[%c1_40, %c0_41, %c0_42] : memref<2x8x32xf32, #tpu.memory_space<vmem>>, vector<1x8x32xf32>
    %46 = vector.shape_cast %45 : vector<1x8x32xf32> to vector<8x32xf32>
    %47 = vector.shape_cast %44 : vector<8x32xf32> to vector<1x8x32xf32>
    tpu.vector_store %arg14[%c1_40, %c0_41, %c0_42], %47 {strides = array<i32>} : memref<2x8x32xf32, #tpu.memory_space<vmem>>, vector<1x8x32xf32>,
    %cst_43 = arith.constant 0.000000e+00 : f32
    %48 = vector.broadcast %cst_43 : f32 to vector<8x32xf32>
    %c0_44 = arith.constant 0 : index
    %c0_45 = arith.constant 0 : index
    %49 = vector.load %arg15[%c0_44, %c0_45] : memref<8x32xf32, #tpu.memory_space<vmem>>, vector<8x32xf32>
    tpu.vector_store %arg15[%c0_44, %c0_45], %48 {strides = array<i32>} : memref<8x32xf32, #tpu.memory_space<vmem>>, vector<8x32xf32>,
    %c0_i32 = arith.constant 0 : i32
    %50 = arith.index_cast %c0_i32 : i32 to index
    %c0_46 = arith.constant 0 : index
    %c0_47 = arith.constant 0 : index
    %51 = vector.load %arg12[%50, %c0_46, %c0_47] : memref<2x8x32xf32, #tpu.memory_space<vmem>>, vector<1x8x32xf32>
    %52 = vector.shape_cast %51 : vector<1x8x32xf32> to vector<8x32xf32>
    %53 = arith.index_cast %c0_i32 : i32 to index
    %c0_48 = arith.constant 0 : index
    %c0_49 = arith.constant 0 : index
    %54 = vector.load %arg13[%53, %c0_48, %c0_49] : memref<2x8x32xf32, #tpu.memory_space<vmem>>, vector<1x8x32xf32>
    %55 = vector.shape_cast %54 : vector<1x8x32xf32> to vector<8x32xf32>
    %56 = arith.index_cast %c0_i32 : i32 to index
    %c0_50 = arith.constant 0 : index
    %c0_51 = arith.constant 0 : index
    %57 = vector.load %arg14[%56, %c0_50, %c0_51] : memref<2x8x32xf32, #tpu.memory_space<vmem>>, vector<1x8x32xf32>
    %58 = vector.shape_cast %57 : vector<1x8x32xf32> to vector<8x32xf32>
    %cst_52 = arith.constant dense<0.000000e+00> : vector<8x8xf32>
    %59 = tpu.matmul %52, %55, %cst_52 {dimension_numbers = #tpu.dot_dimension_numbers<[1], [1], [0], [0], [0, 0, 1, 0], [], []>} : vector<8x32xf32>, vector<8x32xf32>, vector<8x8xf32> -> vector<8x8xf32>
    %60 = tpu.iota {dimensions = array<i32: 0>} : vector<8x8xi32>
    %61 = tpu.iota {dimensions = array<i32: 1>} : vector<8x8xi32>
    %62 = arith.cmpi sgt, %61, %60 : vector<8x8xi32>
    %cst_53 = arith.constant -1.000000e+30 : f32
    %63 = vector.broadcast %cst_53 : f32 to vector<8x8xf32>
    %64 = arith.select %62, %63, %59 : vector<8x8xi1>, vector<8x8xf32>
    %cst_54 = arith.constant dense<0xFF800000> : vector<8xf32>
    %65 = vector.multi_reduction <maximumf>, %64, %cst_54 [1] : vector<8x8xf32> to vector<8xf32>
    %66 = vector.shape_cast %65 : vector<8xf32> to vector<8x1xf32>
    %67 = vector.broadcast %66 : vector<8x1xf32> to vector<8x8xf32>
    %68 = arith.subf %64, %67 : vector<8x8xf32>
    %69 = math.exp %68 : vector<8x8xf32>
    %cst_55 = arith.constant dense<0.000000e+00> : vector<8xf32>
    %70 = vector.multi_reduction <add>, %69, %cst_55 [1] : vector<8x8xf32> to vector<8xf32>
    %71 = vector.shape_cast %70 : vector<8xf32> to vector<8x1xf32>
    %72 = tpu.reciprocal %71 : vector<8x1xf32> -> vector<8x1xf32>
    %73 = vector.broadcast %72 : vector<8x1xf32> to vector<8x8xf32>
    %74 = arith.mulf %69, %73 : vector<8x8xf32>
    %75 = arith.cmpi eq, %61, %60 : vector<8x8xi32>
    %cst_56 = arith.constant 0.000000e+00 : f32
    %76 = vector.broadcast %cst_56 : f32 to vector<8x8xf32>
    %77 = arith.select %75, %76, %74 : vector<8x8xi1>, vector<8x8xf32>
    %c0_57 = arith.constant 0 : index
    %c0_58 = arith.constant 0 : index
    %78 = vector.load %arg15[%c0_57, %c0_58] : memref<8x32xf32, #tpu.memory_space<vmem>>, vector<8x32xf32>
    %cst_59 = arith.constant dense<0.000000e+00> : vector<8x32xf32>
    %79 = tpu.matmul %77, %58, %cst_59 {dimension_numbers = #tpu.dot_dimension_numbers<[0], [0], [1], [1], [0, 1, 1, 1], [], []>} : vector<8x8xf32>, vector<8x32xf32>, vector<8x32xf32> -> vector<8x32xf32>
    %80 = arith.addf %78, %79 : vector<8x32xf32>
    %c0_60 = arith.constant 0 : index
    %c0_61 = arith.constant 0 : index
    %81 = vector.load %arg15[%c0_60, %c0_61] : memref<8x32xf32, #tpu.memory_space<vmem>>, vector<8x32xf32>
    tpu.vector_store %arg15[%c0_60, %c0_61], %80 {strides = array<i32>} : memref<8x32xf32, #tpu.memory_space<vmem>>, vector<8x32xf32>,
    %c1_i32 = arith.constant 1 : i32
    %82 = arith.index_cast %c1_i32 : i32 to index
    %c0_62 = arith.constant 0 : index
    %c0_63 = arith.constant 0 : index
    %83 = vector.load %arg12[%82, %c0_62, %c0_63] : memref<2x8x32xf32, #tpu.memory_space<vmem>>, vector<1x8x32xf32>
    %84 = vector.shape_cast %83 : vector<1x8x32xf32> to vector<8x32xf32>
    %85 = arith.index_cast %c1_i32 : i32 to index
    %c0_64 = arith.constant 0 : index
    %c0_65 = arith.constant 0 : index
    %86 = vector.load %arg13[%85, %c0_64, %c0_65] : memref<2x8x32xf32, #tpu.memory_space<vmem>>, vector<1x8x32xf32>
    %87 = vector.shape_cast %86 : vector<1x8x32xf32> to vector<8x32xf32>
    %88 = arith.index_cast %c1_i32 : i32 to index
    %c0_66 = arith.constant 0 : index
    %c0_67 = arith.constant 0 : index
    %89 = vector.load %arg14[%88, %c0_66, %c0_67] : memref<2x8x32xf32, #tpu.memory_space<vmem>>, vector<1x8x32xf32>
    %90 = vector.shape_cast %89 : vector<1x8x32xf32> to vector<8x32xf32>
    %cst_68 = arith.constant dense<0.000000e+00> : vector<8x8xf32>
    %91 = tpu.matmul %84, %87, %cst_68 {dimension_numbers = #tpu.dot_dimension_numbers<[1], [1], [0], [0], [0, 0, 1, 0], [], []>} : vector<8x32xf32>, vector<8x32xf32>, vector<8x8xf32> -> vector<8x8xf32>
    %92 = tpu.iota {dimensions = array<i32: 0>} : vector<8x8xi32>
    %93 = tpu.iota {dimensions = array<i32: 1>} : vector<8x8xi32>
    %94 = arith.cmpi sgt, %93, %92 : vector<8x8xi32>
    %cst_69 = arith.constant -1.000000e+30 : f32
    %95 = vector.broadcast %cst_69 : f32 to vector<8x8xf32>
    %96 = arith.select %94, %95, %91 : vector<8x8xi1>, vector<8x8xf32>
    %cst_70 = arith.constant dense<0xFF800000> : vector<8xf32>
    %97 = vector.multi_reduction <maximumf>, %96, %cst_70 [1] : vector<8x8xf32> to vector<8xf32>
    %98 = vector.shape_cast %97 : vector<8xf32> to vector<8x1xf32>
    %99 = vector.broadcast %98 : vector<8x1xf32> to vector<8x8xf32>
    %100 = arith.subf %96, %99 : vector<8x8xf32>
    %101 = math.exp %100 : vector<8x8xf32>
    %cst_71 = arith.constant dense<0.000000e+00> : vector<8xf32>
    %102 = vector.multi_reduction <add>, %101, %cst_71 [1] : vector<8x8xf32> to vector<8xf32>
    %103 = vector.shape_cast %102 : vector<8xf32> to vector<8x1xf32>
    %104 = tpu.reciprocal %103 : vector<8x1xf32> -> vector<8x1xf32>
    %105 = vector.broadcast %104 : vector<8x1xf32> to vector<8x8xf32>
    %106 = arith.mulf %101, %105 : vector<8x8xf32>
    %107 = arith.cmpi eq, %93, %92 : vector<8x8xi32>
    %cst_72 = arith.constant 0.000000e+00 : f32
    %108 = vector.broadcast %cst_72 : f32 to vector<8x8xf32>
    %109 = arith.select %107, %108, %106 : vector<8x8xi1>, vector<8x8xf32>
    %c0_73 = arith.constant 0 : index
    %c0_74 = arith.constant 0 : index
    %110 = vector.load %arg15[%c0_73, %c0_74] : memref<8x32xf32, #tpu.memory_space<vmem>>, vector<8x32xf32>
    %cst_75 = arith.constant dense<0.000000e+00> : vector<8x32xf32>
    %111 = tpu.matmul %109, %90, %cst_75 {dimension_numbers = #tpu.dot_dimension_numbers<[0], [0], [1], [1], [0, 1, 1, 1], [], []>} : vector<8x8xf32>, vector<8x32xf32>, vector<8x32xf32> -> vector<8x32xf32>
    %112 = arith.addf %110, %111 : vector<8x32xf32>
    %c0_76 = arith.constant 0 : index
    %c0_77 = arith.constant 0 : index
    %113 = vector.load %arg15[%c0_76, %c0_77] : memref<8x32xf32, #tpu.memory_space<vmem>>, vector<8x32xf32>
    tpu.vector_store %arg15[%c0_76, %c0_77], %112 {strides = array<i32>} : memref<8x32xf32, #tpu.memory_space<vmem>>, vector<8x32xf32>,
    %c2_i32 = arith.constant 2 : i32
    %c0_78 = arith.constant 0 : index
    %c0_79 = arith.constant 0 : index
    %114 = vector.load %arg15[%c0_78, %c0_79] : memref<8x32xf32, #tpu.memory_space<vmem>>, vector<8x32xf32>
    %c0_80 = arith.constant 0 : index
    %c0_81 = arith.constant 0 : index
    %c0_82 = arith.constant 0 : index
    %115 = vector.load %arg11[%c0_80, %c0_81, %c0_82] : memref<1x8x32xf32, #tpu.memory_space<vmem>>, vector<1x8x32xf32>
    %116 = vector.shape_cast %115 : vector<1x8x32xf32> to vector<8x32xf32>
    %117 = vector.shape_cast %114 : vector<8x32xf32> to vector<1x8x32xf32>
    tpu.vector_store %arg11[%c0_80, %c0_81, %c0_82], %117 {strides = array<i32>} : memref<1x8x32xf32, #tpu.memory_space<vmem>>, vector<1x8x32xf32>,
    return
  }
  func.func @transform_0(%arg0: i32) -> (i32, i32, i32) {
    %c0_i32 = arith.constant 0 : i32
    %c0_i32_0 = arith.constant 0 : i32
    %c0_i32_1 = arith.constant 0 : i32
    return %arg0, %c0_i32, %c0_i32_0 : i32, i32, i32
  }
  func.func @transform_1(%arg0: i32) -> (i32, i32, i32) {
    %c0_i32 = arith.constant 0 : i32
    %c0_i32_0 = arith.constant 0 : i32
    %c0_i32_1 = arith.constant 0 : i32
    return %arg0, %c0_i32, %c0_i32_0 : i32, i32, i32
  }
  func.func @transform_2(%arg0: i32) -> (i32, i32, i32) {
    %c0_i32 = arith.constant 0 : i32
    %c0_i32_0 = arith.constant 0 : i32
    %c0_i32_1 = arith.constant 0 : i32
    return %arg0, %c0_i32, %c0_i32_0 : i32, i32, i32
  }
  func.func @transform_3(%arg0: i32) -> (i32, i32) {
    %c0_i32 = arith.constant 0 : i32
    %c0_i32_0 = arith.constant 0 : i32
    %c0_i32_1 = arith.constant 0 : i32
    return %c0_i32, %c0_i32_0 : i32, i32
  }
  func.func @transform_4(%arg0: i32) -> (i32, i32) {
    %c0_i32 = arith.constant 0 : i32
    %c0_i32_0 = arith.constant 0 : i32
    %c0_i32_1 = arith.constant 0 : i32
    return %c0_i32, %c0_i32_0 : i32, i32
  }
  func.func @transform_5(%arg0: i32) -> (i32, i32) {
    %c0_i32 = arith.constant 0 : i32
    %c0_i32_0 = arith.constant 0 : i32
    %c0_i32_1 = arith.constant 0 : i32
    return %c0_i32, %c0_i32_0 : i32, i32
  }
  func.func @transform_6(%arg0: i32) -> (i32, i32) {
    %c0_i32 = arith.constant 0 : i32
    %c0_i32_0 = arith.constant 0 : i32
    %c0_i32_1 = arith.constant 0 : i32
    return %c0_i32, %c0_i32_0 : i32, i32
  }
  func.func @transform_7(%arg0: i32) -> (i32, i32) {
    %c0_i32 = arith.constant 0 : i32
    %c0_i32_0 = arith.constant 0 : i32
    %c0_i32_1 = arith.constant 0 : i32
    return %c0_i32, %c0_i32_0 : i32, i32
  }
  func.func @transform_8(%arg0: i32) -> (i32, i32) {
    %c0_i32 = arith.constant 0 : i32
    %c0_i32_0 = arith.constant 0 : i32
    %c0_i32_1 = arith.constant 0 : i32
    return %c0_i32, %c0_i32_0 : i32, i32
  }
  func.func @transform_9(%arg0: i32) -> (i32, i32) {
    %c0_i32 = arith.constant 0 : i32
    %c0_i32_0 = arith.constant 0 : i32
    %c0_i32_1 = arith.constant 0 : i32
    return %c0_i32, %c0_i32_0 : i32, i32
  }
  func.func @transform_10(%arg0: i32) -> (i32, i32, i32) {
    %c0_i32 = arith.constant 0 : i32
    %c0_i32_0 = arith.constant 0 : i32
    %c0_i32_1 = arith.constant 0 : i32
    return %arg0, %c0_i32, %c0_i32_0 : i32, i32, i32
  }
}

</mosaic_0001>

<llo_original>
// kernel: tpu_custom_call.1
$region0: #{tpu_custom_call.1}
  #allocation0 [shape = 'u32[]', space=smem, size = 0x4, offset = 0x4, fixed_abs, tag = 'smem constant byte address 0x4 - core index']
  #allocation1 [shape = 'u32[144,128]{1,0:T(1,128)}', space=vmem, size = 0x12000, scoped, tag = 'internal scratch']
  #allocation2 [shape = 'f32[2,8,32]{2,1,0:T(8,128)}', space=vmem, size = 0x2000, scoped, tag = 'scratch operand']
  #allocation3 [shape = 'f32[2,8,32]{2,1,0:T(8,128)}', space=vmem, size = 0x2000, scoped, tag = 'scratch operand']
  #allocation4 [shape = 'f32[2,8,32]{2,1,0:T(8,128)}', space=vmem, size = 0x2000, scoped, tag = 'scratch operand']
  #allocation5 [shape = 'f32[8,32]{1,0:T(8,128)}', space=vmem, size = 0x1000, scoped, tag = 'scratch operand']
  %s0 = inlined_call_operand.hbm [shape: f32[2,8,32], index: 0, kind: input, shape index: {}]
  %s1 = inlined_call_operand.hbm [shape: f32[2,8,32], index: 1, kind: input, shape index: {}]
  %s2 = inlined_call_operand.hbm [shape: f32[2,8,32], index: 2, kind: input, shape index: {}]
  %s3 = inlined_call_operand.hbm [shape: f32[32,64], index: 3, kind: input, shape index: {}]
  %s4 = inlined_call_operand.hbm [shape: f32[32,64], index: 4, kind: input, shape index: {}]
  %s5 = inlined_call_operand.hbm [shape: f32[32,64], index: 5, kind: input, shape index: {}]
  %s6 = inlined_call_operand.hbm [shape: f32[32,64], index: 6, kind: input, shape index: {}]
  %s7 = inlined_call_operand.hbm [shape: f32[32,64], index: 7, kind: input, shape index: {}]
  %s8 = inlined_call_operand.vmem [shape: f32[8,64], index: 8, kind: input, shape index: {}]
  %s9 = inlined_call_operand.vmem [shape: f32[8,64], index: 9, kind: input, shape index: {}]
  %s10 = inlined_call_operand.hbm [shape: f32[2,8,32], index: 10, kind: output, shape index: {}]
  %s11 = sld [smem:[#allocation0]]
  $region105: #{tpu_custom_call.1} parent=0
    _
  %s13 = ssub.s32 1, %s11
  %s14 = scalar_select 0, %s13, %s11
  $region1: #{tpu_custom_call.1} parent=0
    #allocation6 [shape = 'u8[8192]{0}', space=vmem, size = 0x2000, scoped, tag = 'input window, operand 0']
    #allocation7 [shape = 's32[2]{0}', space=sflag, size = 0x8, scoped, tag = 'scoped memory for tpu_custom_call.1']
    #allocation8 [shape = 's32[2]{0}', space=sflag, size = 0x8, scoped, tag = 'scoped memory for tpu_custom_call.1']
    #allocation9 [shape = 'u8[8192]{0}', space=vmem, size = 0x2000, scoped, tag = 'input window, operand 1']
    #allocation10 [shape = 's32[2]{0}', space=sflag, size = 0x8, scoped, tag = 'scoped memory for tpu_custom_call.1']
    #allocation11 [shape = 'u8[8192]{0}', space=vmem, size = 0x2000, scoped, tag = 'input window, operand 2']
    #allocation12 [shape = 'u8[16384]{0}', space=vmem, size = 0x4000, scoped, tag = 'input window, operand 3, single buffered']
    #allocation13 [shape = 's32[1]{0}', space=sflag, size = 0x4, scoped, tag = 'scoped memory for tpu_custom_call.1']
    #allocation14 [shape = 'u8[16384]{0}', space=vmem, size = 0x4000, scoped, tag = 'input window, operand 4, single buffered']
    #allocation15 [shape = 'u8[16384]{0}', space=vmem, size = 0x4000, scoped, tag = 'input window, operand 5, single buffered']
    #allocation16 [shape = 's32[1]{0}', space=sflag, size = 0x4, scoped, tag = 'scoped memory for tpu_custom_call.1']
    #allocation17 [shape = 'u8[16384]{0}', space=vmem, size = 0x4000, scoped, tag = 'input window, operand 6, single buffered']
    #allocation18 [shape = 'u8[16384]{0}', space=vmem, size = 0x4000, scoped, tag = 'input window, operand 7, single buffered']
    #allocation19 [shape = 's32[1]{0}', space=sflag, size = 0x4, scoped, tag = 'scoped memory for tpu_custom_call.1']
    #allocation20 [shape = 'u8[8192]{0}', space=vmem, size = 0x2000, scoped, tag = 'output window, operand 0']
    %15 = vsyncpa [#allocation7], 0
    %s16 = scalar_lea.sflag [#allocation7], 1
    %17 = vsyncpa %s16, 0
    %18 = vsyncpa [#allocation10], 0
    %s19 = scalar_lea.sflag [#allocation10], 1
    %20 = vsyncpa %s19, 0
    %21 = vsyncpa [#allocation13], 0
    %22 = vsyncpa [#allocation16], 0
    %23 = vsyncpa [#allocation19], 0
    %24 = vsyncpa [#allocation8], 0
    %s25 = scalar_lea.sflag [#allocation8], 1
    %26 = vsyncpa %s25, 0
    loop: start=0, step=1, limit=4
    $region2: #{tpu_custom_call.1} parent=1 // loop_pre_header
      _
    $region3: #{tpu_custom_call.1} parent=1 // loop_header
      %s28 = sphi 0, %s32
      %p29 = scmp.ge.s32.totalorder %s28, 4
      %s38 = sphi 0, %s40
      %s41 = sphi 0, %s38
      %s42 = sphi 0, %s41
      %s58 = sphi 0, %s42
      %s64 = sphi 0, %s66
      %s67 = sphi 0, %s64
      %s68 = sphi 0, %s67
      %s84 = sphi 0, %s68
      %s90 = sphi 0, %s92
      %s93 = sphi 0, %s90
      %s94 = sphi 0, %s93
      %s110 = sphi 0, %s94
      %s114 = sphi 0, %s114
      %s116 = sphi 0, %s114
      %s117 = sphi 0, %s116
      %s131 = sphi 0, %s117
      %s135 = sphi 0, %s135
      %s137 = sphi 0, %s135
      %s138 = sphi 0, %s137
      %s152 = sphi 0, %s138
      %s156 = sphi 0, %s156
      %s158 = sphi 0, %s156
      %s159 = sphi 0, %s158
      %s173 = sphi 0, %s159
      %s177 = sphi 0, %s177
      %s179 = sphi 0, %s177
      %s180 = sphi 0, %s179
      %s194 = sphi 0, %s180
      %s198 = sphi 0, %s198
      %s200 = sphi 0, %s198
      %s201 = sphi 0, %s200
      %s215 = sphi 0, %s201
      %s219 = sphi 0, %s219
      %s221 = sphi 0, %s219
      %s222 = sphi 0, %s221
      %s236 = sphi 0, %s222
      %s240 = sphi 0, %s240
      %s242 = sphi 0, %s240
      %s243 = sphi 0, %s242
      %s257 = sphi 0, %s243
      %s263 = sphi 0, %s265
      %s266 = sphi 0, %s263
      %s267 = sphi 0, %s266
      %s283 = sphi 0, %s267
    $region4: #{tpu_custom_call.1} parent=1 // loop_header_branch
      %31 = sbr.rel (%p29) target = $region8
    $region5: #{tpu_custom_call.1} parent=1 // loop_body
      %s33 = ssub.s32 %s28, 1
      %s34 = ssub.s32 %s28, 2
      %s35 = sadd.s32 %s28, 1
      %s36 = ssub.s32 %s28, %s35
      %p37 = scmp.eq.s32.totalorder %s36, 0
      %s39 = sadd.s32 %s38, 1
      %s40 = scalar_select %p37, %s38, %s39
      %p43 = pneg %p37
      %p44 = scmp.eq.s32.totalorder %s28, 1
      %p45 = por %p43, %p44
      %p46 = scmp.ne.s32.totalorder %s38, %s41
      %p47 = scmp.eq.s32.totalorder %s28, 0
      %p48 = por %p46, %p47
      %p49 = scmp.ne.s32.totalorder %s38, %s41
      %p50 = scmp.eq.s32.totalorder %s33, 1
      %p51 = por %p49, %p50
      %p52 = scmp.ne.s32.totalorder %s41, %s42
      %p53 = scmp.eq.s32.totalorder %s33, 0
      %p54 = por %p52, %p53
      %p55 = scmp.ne.s32.totalorder %s41, %s42
      %p56 = scmp.eq.s32.totalorder %s34, 1
      %p57 = por %p55, %p56
      %p59 = scmp.ne.s32.totalorder %s42, %s58
      %p60 = scmp.eq.s32.totalorder %s34, 0
      %p61 = por %p59, %p60
      %s62 = ssub.s32 %s28, %s35
      %p63 = scmp.eq.s32.totalorder %s62, 0
      %s65 = sadd.s32 %s64, 1
      %s66 = scalar_select %p63, %s64, %s65
      %p69 = pneg %p63
      %p70 = scmp.eq.s32.totalorder %s28, 1
      %p71 = por %p69, %p70
      %p72 = scmp.ne.s32.totalorder %s64, %s67
      %p73 = scmp.eq.s32.totalorder %s28, 0
      %p74 = por %p72, %p73
      %p75 = scmp.ne.s32.totalorder %s64, %s67
      %p76 = scmp.eq.s32.totalorder %s33, 1
      %p77 = por %p75, %p76
      %p78 = scmp.ne.s32.totalorder %s67, %s68
      %p79 = scmp.eq.s32.totalorder %s33, 0
      %p80 = por %p78, %p79
      %p81 = scmp.ne.s32.totalorder %s67, %s68
      %p82 = scmp.eq.s32.totalorder %s34, 1
      %p83 = por %p81, %p82
      %p85 = scmp.ne.s32.totalorder %s68, %s84
      %p86 = scmp.eq.s32.totalorder %s34, 0
      %p87 = por %p85, %p86
      %s88 = ssub.s32 %s28, %s35
      %p89 = scmp.eq.s32.totalorder %s88, 0
      %s91 = sadd.s32 %s90, 1
      %s92 = scalar_select %p89, %s90, %s91
      %p95 = pneg %p89
      %p96 = scmp.eq.s32.totalorder %s28, 1
      %p97 = por %p95, %p96
      %p98 = scmp.ne.s32.totalorder %s90, %s93
      %p99 = scmp.eq.s32.totalorder %s28, 0
      %p100 = por %p98, %p99
      %p101 = scmp.ne.s32.totalorder %s90, %s93
      %p102 = scmp.eq.s32.totalorder %s33, 1
      %p103 = por %p101, %p102
      %p104 = scmp.ne.s32.totalorder %s93, %s94
      %p105 = scmp.eq.s32.totalorder %s33, 0
      %p106 = por %p104, %p105
      %p107 = scmp.ne.s32.totalorder %s93, %s94
      %p108 = scmp.eq.s32.totalorder %s34, 1
      %p109 = por %p107, %p108
      %p111 = scmp.ne.s32.totalorder %s94, %s110
      %p112 = scmp.eq.s32.totalorder %s34, 0
      %p113 = por %p111, %p112
      %s115 = sadd.s32 %s114, 1
      %p118 = scmp.eq.s32.totalorder %s28, 1
      %p119 = scmp.ne.s32.totalorder %s114, %s116
      %p120 = scmp.eq.s32.totalorder %s28, 0
      %p121 = por %p119, %p120
      %p122 = scmp.ne.s32.totalorder %s114, %s116
      %p123 = scmp.eq.s32.totalorder %s33, 1
      %p124 = por %p122, %p123
      %p125 = scmp.ne.s32.totalorder %s116, %s117
      %p126 = scmp.eq.s32.totalorder %s33, 0
      %p127 = por %p125, %p126
      %p128 = scmp.ne.s32.totalorder %s116, %s117
      %p129 = scmp.eq.s32.totalorder %s34, 1
      %p130 = por %p128, %p129
      %p132 = scmp.ne.s32.totalorder %s117, %s131
      %p133 = scmp.eq.s32.totalorder %s34, 0
      %p134 = por %p132, %p133
      %s136 = sadd.s32 %s135, 1
      %p139 = scmp.eq.s32.totalorder %s28, 1
      %p140 = scmp.ne.s32.totalorder %s135, %s137
      %p141 = scmp.eq.s32.totalorder %s28, 0
      %p142 = por %p140, %p141
      %p143 = scmp.ne.s32.totalorder %s135, %s137
      %p144 = scmp.eq.s32.totalorder %s33, 1
      %p145 = por %p143, %p144
      %p146 = scmp.ne.s32.totalorder %s137, %s138
      %p147 = scmp.eq.s32.totalorder %s33, 0
      %p148 = por %p146, %p147
      %p149 = scmp.ne.s32.totalorder %s137, %s138
      %p150 = scmp.eq.s32.totalorder %s34, 1
      %p151 = por %p149, %p150
      %p153 = scmp.ne.s32.totalorder %s138, %s152
      %p154 = scmp.eq.s32.totalorder %s34, 0
      %p155 = por %p153, %p154
      %s157 = sadd.s32 %s156, 1
      %p160 = scmp.eq.s32.totalorder %s28, 1
      %p161 = scmp.ne.s32.totalorder %s156, %s158
      %p162 = scmp.eq.s32.totalorder %s28, 0
      %p163 = por %p161, %p162
      %p164 = scmp.ne.s32.totalorder %s156, %s158
      %p165 = scmp.eq.s32.totalorder %s33, 1
      %p166 = por %p164, %p165
      %p167 = scmp.ne.s32.totalorder %s158, %s159
      %p168 = scmp.eq.s32.totalorder %s33, 0
      %p169 = por %p167, %p168
      %p170 = scmp.ne.s32.totalorder %s158, %s159
      %p171 = scmp.eq.s32.totalorder %s34, 1
      %p172 = por %p170, %p171
      %p174 = scmp.ne.s32.totalorder %s159, %s173
      %p175 = scmp.eq.s32.totalorder %s34, 0
      %p176 = por %p174, %p175
      %s178 = sadd.s32 %s177, 1
      %p181 = scmp.eq.s32.totalorder %s28, 1
      %p182 = scmp.ne.s32.totalorder %s177, %s179
      %p183 = scmp.eq.s32.totalorder %s28, 0
      %p184 = por %p182, %p183
      %p185 = scmp.ne.s32.totalorder %s177, %s179
      %p186 = scmp.eq.s32.totalorder %s33, 1
      %p187 = por %p185, %p186
      %p188 = scmp.ne.s32.totalorder %s179, %s180
      %p189 = scmp.eq.s32.totalorder %s33, 0
      %p190 = por %p188, %p189
      %p191 = scmp.ne.s32.totalorder %s179, %s180
      %p192 = scmp.eq.s32.totalorder %s34, 1
      %p193 = por %p191, %p192
      %p195 = scmp.ne.s32.totalorder %s180, %s194
      %p196 = scmp.eq.s32.totalorder %s34, 0
      %p197 = por %p195, %p196
      %s199 = sadd.s32 %s198, 1
      %p202 = scmp.eq.s32.totalorder %s28, 1
      %p203 = scmp.ne.s32.totalorder %s198, %s200
      %p204 = scmp.eq.s32.totalorder %s28, 0
      %p205 = por %p203, %p204
      %p206 = scmp.ne.s32.totalorder %s198, %s200
      %p207 = scmp.eq.s32.totalorder %s33, 1
      %p208 = por %p206, %p207
      %p209 = scmp.ne.s32.totalorder %s200, %s201
      %p210 = scmp.eq.s32.totalorder %s33, 0
      %p211 = por %p209, %p210
      %p212 = scmp.ne.s32.totalorder %s200, %s201
      %p213 = scmp.eq.s32.totalorder %s34, 1
      %p214 = por %p212, %p213
      %p216 = scmp.ne.s32.totalorder %s201, %s215
      %p217 = scmp.eq.s32.totalorder %s34, 0
      %p218 = por %p216, %p217
      %s220 = sadd.s32 %s219, 1
      %p223 = scmp.eq.s32.totalorder %s28, 1
      %p224 = scmp.ne.s32.totalorder %s219, %s221
      %p225 = scmp.eq.s32.totalorder %s28, 0
      %p226 = por %p224, %p225
      %p227 = scmp.ne.s32.totalorder %s219, %s221
      %p228 = scmp.eq.s32.totalorder %s33, 1
      %p229 = por %p227, %p228
      %p230 = scmp.ne.s32.totalorder %s221, %s222
      %p231 = scmp.eq.s32.totalorder %s33, 0
      %p232 = por %p230, %p231
      %p233 = scmp.ne.s32.totalorder %s221, %s222
      %p234 = scmp.eq.s32.totalorder %s34, 1
      %p235 = por %p233, %p234
      %p237 = scmp.ne.s32.totalorder %s222, %s236
      %p238 = scmp.eq.s32.totalorder %s34, 0
      %p239 = por %p237, %p238
      %s241 = sadd.s32 %s240, 1
      %p244 = scmp.eq.s32.totalorder %s28, 1
      %p245 = scmp.ne.s32.totalorder %s240, %s242
      %p246 = scmp.eq.s32.totalorder %s28, 0
      %p247 = por %p245, %p246
      %p248 = scmp.ne.s32.totalorder %s240, %s242
      %p249 = scmp.eq.s32.totalorder %s33, 1
      %p250 = por %p248, %p249
      %p251 = scmp.ne.s32.totalorder %s242, %s243
      %p252 = scmp.eq.s32.totalorder %s33, 0
      %p253 = por %p251, %p252
      %p254 = scmp.ne.s32.totalorder %s242, %s243
      %p255 = scmp.eq.s32.totalorder %s34, 1
      %p256 = por %p254, %p255
      %p258 = scmp.ne.s32.totalorder %s243, %s257
      %p259 = scmp.eq.s32.totalorder %s34, 0
      %p260 = por %p258, %p259
      %s261 = ssub.s32 %s28, %s35
      %p262 = scmp.eq.s32.totalorder %s261, 0
      %s264 = sadd.s32 %s263, 1
      %s265 = scalar_select %p262, %s263, %s264
      %p268 = pneg %p262
      %p269 = scmp.eq.s32.totalorder %s28, 1
      %p270 = por %p268, %p269
      %p271 = scmp.ne.s32.totalorder %s263, %s266
      %p272 = scmp.eq.s32.totalorder %s28, 0
      %p273 = por %p271, %p272
      %p274 = scmp.ne.s32.totalorder %s263, %s266
      %p275 = scmp.eq.s32.totalorder %s33, 1
      %p276 = por %p274, %p275
      %p277 = scmp.ne.s32.totalorder %s266, %s267
      %p278 = scmp.eq.s32.totalorder %s33, 0
      %p279 = por %p277, %p278
      %p280 = scmp.ne.s32.totalorder %s266, %s267
      %p281 = scmp.eq.s32.totalorder %s34, 1
      %p282 = por %p280, %p281
      %p284 = scmp.ne.s32.totalorder %s267, %s283
      %p285 = scmp.eq.s32.totalorder %s34, 0
      %p286 = por %p284, %p285
      %p287 = scmp.le.s32.totalorder 1, %s28
      %p288 = scmp.lt.s32.totalorder %s28, 3
      %p289 = pnand %p287, %p288
      %p290 = pneg %p289
      // Predicated region
      $region9: #{tpu_custom_call.1} parent=5 // pred_check
        _
      $region10: #{tpu_custom_call.1} parent=5 // pred_check_branch
        %292 = sbr.rel (%p289) target = $region12
      $region11: #{tpu_custom_call.1} parent=5 // pred_region
        %s293 = ssub.s32 %s28, 1
        // Predicated region
        $region13: #{tpu_custom_call.1} parent=11 // pred_check
          %p294 = pneg %p127
        $region14: #{tpu_custom_call.1} parent=11 // pred_check_branch
          %296 = sbr.rel (%p294) target = $region16
        $region15: #{tpu_custom_call.1} parent=11 // pred_region
          %s298 = ssub.s32 512, 512
          %299 = vsyncadd [#allocation13], %s298
          %s300 = sshll.u32 [#allocation12], 4
          %s301 = int_to_ptr.vmem [resolvable:$true] %s300
          %306 = dma.hbm_to_vmem [thread:$0]  %s3, 512, %s301, [#allocation13], 128, 128, 8
        $region16: #{tpu_custom_call.1} parent=11 // pred_fallthru
          _
        // Predicated region
        $region17: #{tpu_custom_call.1} parent=11 // pred_check
          %p307 = pneg %p148
        $region18: #{tpu_custom_call.1} parent=11 // pred_check_branch
          %309 = sbr.rel (%p307) target = $region20
        $region19: #{tpu_custom_call.1} parent=11 // pred_region
          %s311 = ssub.s32 512, 512
          %312 = vsyncadd [#allocation13], %s311
          %s313 = sshll.u32 [#allocation14], 4
          %s314 = int_to_ptr.vmem [resolvable:$true] %s313
          %319 = dma.hbm_to_vmem [thread:$0]  %s4, 512, %s314, [#allocation13], 128, 128, 8
        $region20: #{tpu_custom_call.1} parent=11 // pred_fallthru
          _
        // Predicated region
        $region21: #{tpu_custom_call.1} parent=11 // pred_check
          %p320 = pneg %p169
        $region22: #{tpu_custom_call.1} parent=11 // pred_check_branch
          %322 = sbr.rel (%p320) target = $region24
        $region23: #{tpu_custom_call.1} parent=11 // pred_region
          %s324 = ssub.s32 512, 512
          %325 = vsyncadd [#allocation16], %s324
          %s326 = sshll.u32 [#allocation15], 4
          %s327 = int_to_ptr.vmem [resolvable:$true] %s326
          %332 = dma.hbm_to_vmem [thread:$0]  %s5, 512, %s327, [#allocation16], 128, 128, 8
        $region24: #{tpu_custom_call.1} parent=11 // pred_fallthru
          _
        // Predicated region
        $region25: #{tpu_custom_call.1} parent=11 // pred_check
          %p333 = pneg %p190
        $region26: #{tpu_custom_call.1} parent=11 // pred_check_branch
          %335 = sbr.rel (%p333) target = $region28
        $region27: #{tpu_custom_call.1} parent=11 // pred_region
          %s337 = ssub.s32 512, 512
          %338 = vsyncadd [#allocation16], %s337
          %s339 = sshll.u32 [#allocation17], 4
          %s340 = int_to_ptr.vmem [resolvable:$true] %s339
          %345 = dma.hbm_to_vmem [thread:$0]  %s6, 512, %s340, [#allocation16], 128, 128, 8
        $region28: #{tpu_custom_call.1} parent=11 // pred_fallthru
          _
        // Predicated region
        $region29: #{tpu_custom_call.1} parent=11 // pred_check
          %p346 = pneg %p211
        $region30: #{tpu_custom_call.1} parent=11 // pred_check_branch
          %348 = sbr.rel (%p346) target = $region32
        $region31: #{tpu_custom_call.1} parent=11 // pred_region
          %s350 = ssub.s32 512, 512
          %351 = vsyncadd [#allocation19], %s350
          %s352 = sshll.u32 [#allocation18], 4
          %s353 = int_to_ptr.vmem [resolvable:$true] %s352
          %358 = dma.hbm_to_vmem [thread:$0]  %s7, 512, %s353, [#allocation19], 128, 128, 8
        $region32: #{tpu_custom_call.1} parent=11 // pred_fallthru
          _
        // Predicated region
        $region33: #{tpu_custom_call.1} parent=11 // pred_check
          %p359 = pneg %p232
        $region34: #{tpu_custom_call.1} parent=11 // pred_check_branch
          %361 = sbr.rel (%p359) target = $region36
        $region35: #{tpu_custom_call.1} parent=11 // pred_region
          _
        $region36: #{tpu_custom_call.1} parent=11 // pred_fallthru
          _
        // Predicated region
        $region37: #{tpu_custom_call.1} parent=11 // pred_check
          %p362 = pneg %p253
        $region38: #{tpu_custom_call.1} parent=11 // pred_check_branch
          %364 = sbr.rel (%p362) target = $region40
        $region39: #{tpu_custom_call.1} parent=11 // pred_region
          _
        $region40: #{tpu_custom_call.1} parent=11 // pred_fallthru
          _
      $region12: #{tpu_custom_call.1} parent=5 // pred_fallthru
        _
      %p365 = scmp.lt.s32.totalorder %s28, 2
      // Predicated region
      $region41: #{tpu_custom_call.1} parent=5 // pred_check
        %p366 = pneg %p365
      $region42: #{tpu_custom_call.1} parent=5 // pred_check_branch
        %368 = sbr.rel (%p366) target = $region44
      $region43: #{tpu_custom_call.1} parent=5 // pred_region
        // Predicated region
        $region45: #{tpu_custom_call.1} parent=43 // pred_check
          %p369 = pneg %p48
        $region46: #{tpu_custom_call.1} parent=43 // pred_check_branch
          %371 = sbr.rel (%p369) target = $region48
        $region47: #{tpu_custom_call.1} parent=43 // pred_region
          %s372 = sand.u32 %s38, 1
          %s373 = scalar_lea.sflag [#allocation7], %s372
          %s374 = sand.u32 %s38, 1
          %s375 = smul.addr %s374, 8
          %s376 = scalar_lea.vmem [#allocation6], %s375
          %s378 = ssub.s32 128, 128
          %379 = vsyncadd %s373, %s378
          %s380 = smul.addr %s28, 128
          %s381 = scalar_lea.hbm %s0, %s380
          %s383 = sshll.u32 %s376, 4
          %s384 = int_to_ptr.vmem [resolvable:$true] %s383
          %386 = dma.hbm_to_vmem [thread:$0]  %s381, 128, %s384, %s373
        $region48: #{tpu_custom_call.1} parent=43 // pred_fallthru
          _
        // Predicated region
        $region49: #{tpu_custom_call.1} parent=43 // pred_check
          %p387 = pneg %p74
        $region50: #{tpu_custom_call.1} parent=43 // pred_check_branch
          %389 = sbr.rel (%p387) target = $region52
        $region51: #{tpu_custom_call.1} parent=43 // pred_region
          %s390 = sand.u32 %s28, 1
          %s391 = scalar_lea.sflag [#allocation10], %s390
          %s392 = sand.u32 %s64, 1
          %s393 = smul.addr %s392, 8
          %s394 = scalar_lea.vmem [#allocation9], %s393
          %s396 = ssub.s32 128, 128
          %397 = vsyncadd %s391, %s396
          %s398 = smul.addr %s28, 128
          %s399 = scalar_lea.hbm %s1, %s398
          %s401 = sshll.u32 %s394, 4
          %s402 = int_to_ptr.vmem [resolvable:$true] %s401
          %404 = dma.hbm_to_vmem [thread:$0]  %s399, 128, %s402, %s391
        $region52: #{tpu_custom_call.1} parent=43 // pred_fallthru
          _
        // Predicated region
        $region53: #{tpu_custom_call.1} parent=43 // pred_check
          %p405 = pneg %p100
        $region54: #{tpu_custom_call.1} parent=43 // pred_check_branch
          %407 = sbr.rel (%p405) target = $region56
        $region55: #{tpu_custom_call.1} parent=43 // pred_region
          %s408 = sand.u32 %s28, 1
          %s409 = scalar_lea.sflag [#allocation10], %s408
          %s410 = sand.u32 %s90, 1
          %s411 = smul.addr %s410, 8
          %s412 = scalar_lea.vmem [#allocation11], %s411
          %s414 = ssub.s32 128, 128
          %415 = vsyncadd %s409, %s414
          %s416 = smul.addr %s28, 128
          %s417 = scalar_lea.hbm %s2, %s416
          %s419 = sshll.u32 %s412, 4
          %s420 = int_to_ptr.vmem [resolvable:$true] %s419
          %422 = dma.hbm_to_vmem [thread:$0]  %s417, 128, %s420, %s409
        $region56: #{tpu_custom_call.1} parent=43 // pred_fallthru
          _
      $region44: #{tpu_custom_call.1} parent=5 // pred_fallthru
        _
      %p423 = scmp.le.s32.totalorder 1, %s28
      %p424 = scmp.lt.s32.totalorder %s28, 3
      %p425 = pnand %p423, %p424
      %p426 = pneg %p425
      // Predicated region
      $region57: #{tpu_custom_call.1} parent=5 // pred_check
        _
      $region58: #{tpu_custom_call.1} parent=5 // pred_check_branch
        %428 = sbr.rel (%p425) target = $region60
      $region59: #{tpu_custom_call.1} parent=5 // pred_region
        %s429 = ssub.s32 %s28, 1
        %s430 = sand.u32 %s41, 1
        %s431 = scalar_lea.sflag [#allocation7], %s430
        %s432 = sand.u32 %s41, 1
        %s433 = smul.addr %s432, 8
        %s434 = scalar_lea.vmem [#allocation6], %s433
        // Predicated region
        $region61: #{tpu_custom_call.1} parent=59 // pred_check
          %p435 = pneg %p54
        $region62: #{tpu_custom_call.1} parent=59 // pred_check_branch
          %437 = sbr.rel (%p435) target = $region64
        $region63: #{tpu_custom_call.1} parent=59 // pred_region
          %438 = dma.done %s431, 128
        $region64: #{tpu_custom_call.1} parent=59 // pred_fallthru
          _
        %s439 = sand.u32 %s33, 1
        %s440 = scalar_lea.sflag [#allocation10], %s439
        %s441 = sand.u32 %s67, 1
        %s442 = smul.addr %s441, 8
        %s443 = scalar_lea.vmem [#allocation9], %s442
        // Predicated region
        $region65: #{tpu_custom_call.1} parent=59 // pred_check
          %p444 = pneg %p80
        $region66: #{tpu_custom_call.1} parent=59 // pred_check_branch
          %446 = sbr.rel (%p444) target = $region68
        $region67: #{tpu_custom_call.1} parent=59 // pred_region
          %447 = dma.done %s440, 128
        $region68: #{tpu_custom_call.1} parent=59 // pred_fallthru
          _
        %s448 = sand.u32 %s33, 1
        %s449 = scalar_lea.sflag [#allocation10], %s448
        %s450 = sand.u32 %s93, 1
        %s451 = smul.addr %s450, 8
        %s452 = scalar_lea.vmem [#allocation11], %s451
        // Predicated region
        $region69: #{tpu_custom_call.1} parent=59 // pred_check
          %p453 = pneg %p106
        $region70: #{tpu_custom_call.1} parent=59 // pred_check_branch
          %455 = sbr.rel (%p453) target = $region72
        $region71: #{tpu_custom_call.1} parent=59 // pred_region
          %456 = dma.done %s449, 128
        $region72: #{tpu_custom_call.1} parent=59 // pred_fallthru
          _
        // Predicated region
        $region73: #{tpu_custom_call.1} parent=59 // pred_check
          %p457 = pneg %p127
        $region74: #{tpu_custom_call.1} parent=59 // pred_check_branch
          %459 = sbr.rel (%p457) target = $region76
        $region75: #{tpu_custom_call.1} parent=59 // pred_region
          %460 = dma.done [#allocation13], 512
        $region76: #{tpu_custom_call.1} parent=59 // pred_fallthru
          _
        // Predicated region
        $region77: #{tpu_custom_call.1} parent=59 // pred_check
          %p461 = pneg %p148
        $region78: #{tpu_custom_call.1} parent=59 // pred_check_branch
          %463 = sbr.rel (%p461) target = $region80
        $region79: #{tpu_custom_call.1} parent=59 // pred_region
          %464 = dma.done [#allocation13], 512
        $region80: #{tpu_custom_call.1} parent=59 // pred_fallthru
          _
        // Predicated region
        $region81: #{tpu_custom_call.1} parent=59 // pred_check
          %p465 = pneg %p169
        $region82: #{tpu_custom_call.1} parent=59 // pred_check_branch
          %467 = sbr.rel (%p465) target = $region84
        $region83: #{tpu_custom_call.1} parent=59 // pred_region
          %468 = dma.done [#allocation16], 512
        $region84: #{tpu_custom_call.1} parent=59 // pred_fallthru
          _
        // Predicated region
        $region85: #{tpu_custom_call.1} parent=59 // pred_check
          %p469 = pneg %p190
        $region86: #{tpu_custom_call.1} parent=59 // pred_check_branch
          %471 = sbr.rel (%p469) target = $region88
        $region87: #{tpu_custom_call.1} parent=59 // pred_region
          %472 = dma.done [#allocation16], 512
        $region88: #{tpu_custom_call.1} parent=59 // pred_fallthru
          _
        // Predicated region
        $region89: #{tpu_custom_call.1} parent=59 // pred_check
          %p473 = pneg %p211
        $region90: #{tpu_custom_call.1} parent=59 // pred_check_branch
          %475 = sbr.rel (%p473) target = $region92
        $region91: #{tpu_custom_call.1} parent=59 // pred_region
          %476 = dma.done [#allocation19], 512
        $region92: #{tpu_custom_call.1} parent=59 // pred_fallthru
          _
        %s477 = sand.u32 %s41, 1
        %s478 = scalar_lea.sflag [#allocation7], %s477
        %s479 = sand.u32 %s41, 1
        %s480 = smul.addr %s479, 8
        %s481 = scalar_lea.vmem [#allocation6], %s480
        %p482 = pneg %p54
        %p483 = pneg %p51
        %s484 = sand.u32 %s33, 1
        %s485 = scalar_lea.sflag [#allocation10], %s484
        %s486 = sand.u32 %s67, 1
        %s487 = smul.addr %s486, 8
        %s488 = scalar_lea.vmem [#allocation9], %s487
        %p489 = pneg %p80
        %p490 = pneg %p77
        %s491 = sand.u32 %s33, 1
        %s492 = scalar_lea.sflag [#allocation10], %s491
        %s493 = sand.u32 %s93, 1
        %s494 = smul.addr %s493, 8
        %s495 = scalar_lea.vmem [#allocation11], %s494
        %p496 = pneg %p106
        %p497 = pneg %p103
        %p498 = pneg %p127
        %p499 = pneg %p124
        %p500 = pneg %p148
        %p501 = pneg %p145
        %p502 = pneg %p169
        %p503 = pneg %p166
        %p504 = pneg %p190
        %p505 = pneg %p187
        %p506 = pneg %p211
        %p507 = pneg %p208
        %p508 = pneg %p232
        %p509 = pneg %p229
        %p510 = pneg %p253
        %p511 = pneg %p250
        %p512 = pneg %p279
        %p513 = pneg %p276
        %s514 = sand.u32 %s266, 1
        %s515 = scalar_lea.sflag [#allocation8], %s514
        %s516 = sand.u32 %s266, 1
        %s517 = smul.addr %s516, 8
        %s518 = scalar_lea.vmem [#allocation20], %s517
        %v519 = vld [vmem:[%s434] sm:$0xff]
        %v520 = vld [vmem:[%s443] sm:$0xff]
        %v521 = vld [vmem:[%s452] sm:$0xff]
        %v522 = vld [vmem:[%s8] sm:$0xff]
        %v523 = vld [vmem:[%s9] sm:$0xff]
        %v524 = vld [vmem:[#allocation12] sm:$0xff]
        %v525 = vld [vmem:[#allocation12 + $0x8] sm:$0xff]
        %v526 = vld [vmem:[#allocation12 + $0x10] sm:$0xff]
        %v527 = vld [vmem:[#allocation12 + $0x18] sm:$0xff]
        %vm528 = vcmask 261120
        %v530 = vsel %vm528, %v519, 0
        %532 = vmatprep.subr.mxu0 0.0
        %533 = vmatpush1.msra.mxu0 %v524
        %534 = vmatprep.subr.mxu0 0.0
        %535 = vmatpush1.msra.mxu0 %v525
        %536 = vmatprep.subr.mxu0 0.0
        %537 = vmatpush1.msra.mxu0 %v526
        %538 = vmatprep.subr.mxu0 0.0
        %539 = vmatpush1.msra.mxu0 %v527
        %540 = vmatprep.subr.mxu0 0.0
        %541 = vmatpush1.msra.mxu0 0.0
        %542 = vmatprep.subr.mxu0 0.0
        %543 = vmatpush1.msra.mxu0 0.0
        %544 = vmatprep.subr.mxu0 0.0
        %545 = vmatpush1.msra.mxu0 0.0
        %546 = vmatprep.subr.mxu0 0.0
        %547 = vmatpush1.msra.mxu0 0.0
        %548 = vmatprep.subr.mxu0 0.0
        %549 = vmatpush1.msra.mxu0 0.0
        %550 = vmatprep.subr.mxu0 0.0
        %551 = vmatpush1.msra.mxu0 0.0
        %552 = vmatprep.subr.mxu0 0.0
        %553 = vmatpush1.msra.mxu0 0.0
        %554 = vmatprep.subr.mxu0 0.0
        %555 = vmatpush1.msra.mxu0 0.0
        %556 = vmatprep.subr.mxu0 0.0
        %557 = vmatpush1.msra.mxu0 0.0
        %558 = vmatprep.subr.mxu0 0.0
        %559 = vmatpush1.msra.mxu0 0.0
        %560 = vmatprep.subr.mxu0 0.0
        %561 = vmatpush1.msra.mxu0 0.0
        %562 = vmatprep.subr.mxu0 0.0
        %563 = vmatpush1.msra.mxu0 0.0
        %564 = vmatprep.subr.mxu0 0.0
        %565 = vmatpush1.msra.mxu0 0.0
        %566 = vmatprep.subr.mxu0 0.0
        %567 = vmatpush1.msra.mxu0 0.0
        %568 = vmatprep.subr.mxu0 0.0
        %569 = vmatpush1.msra.mxu0 0.0
        %570 = vmatprep.subr.mxu0 0.0
        %571 = vmatpush1.msra.mxu0 0.0
        %572 = vmatprep.subr.mxu0 0.0
        %573 = vmatpush1.msra.mxu0 0.0
        %574 = vmatprep.subr.mxu0 0.0
        %575 = vmatpush1.msra.mxu0 0.0
        %576 = vmatprep.subr.mxu0 0.0
        %577 = vmatpush1.msra.mxu0 0.0
        %578 = vmatprep.subr.mxu0 0.0
        %579 = vmatpush1.msra.mxu0 0.0
        %580 = vmatprep.subr.mxu0 0.0
        %581 = vmatpush1.msra.mxu0 0.0
        %582 = vmatprep.subr.mxu0 0.0
        %583 = vmatpush1.msra.mxu0 0.0
        %584 = vmatprep.subr.mxu0 0.0
        %585 = vmatpush1.msra.mxu0 0.0
        %586 = vmatprep.subr.mxu0 0.0
        %587 = vmatpush1.msra.mxu0 0.0
        %588 = vmatprep.subr.mxu0 0.0
        %589 = vmatpush1.msra.mxu0 0.0
        %590 = vmatprep.subr.mxu0 0.0
        %591 = vmatpush1.msra.mxu0 0.0
        %592 = vmatprep.subr.mxu0 0.0
        %593 = vmatpush1.msra.mxu0 0.0
        %594 = vmatprep.subr.mxu0 0.0
        %595 = vmatpush1.msra.mxu0 0.0
        %596 = vmatprep.mubr.f32.mxu0 0.0
        %597 = vmatmul.mubr.f32.gmra.mrb[0].mxu0 %v530
        %v598 = vpop.f32.mrb[0].mxu0
        %v599 = vadd.f32 0.0, %v598
        %v600 = vpop.f32.mrb[0].mxu0
        %601 = vdwg.mxu0
        %v602 = vmul.f32 %v599, %v522
        %v603 = vld [vmem:[#allocation14] sm:$0xff]
        %v604 = vld [vmem:[#allocation14 + $0x8] sm:$0xff]
        %v605 = vld [vmem:[#allocation14 + $0x10] sm:$0xff]
        %v606 = vld [vmem:[#allocation14 + $0x18] sm:$0xff]
        %607 = vmatprep.subr.mxu0 0.0
        %608 = vmatpush1.msra.mxu0 %v603
        %609 = vmatprep.subr.mxu0 0.0
        %610 = vmatpush1.msra.mxu0 %v604
        %611 = vmatprep.subr.mxu0 0.0
        %612 = vmatpush1.msra.mxu0 %v605
        %613 = vmatprep.subr.mxu0 0.0
        %614 = vmatpush1.msra.mxu0 %v606
        %615 = vmatprep.subr.mxu0 0.0
        %616 = vmatpush1.msra.mxu0 0.0
        %617 = vmatprep.subr.mxu0 0.0
        %618 = vmatpush1.msra.mxu0 0.0
        %619 = vmatprep.subr.mxu0 0.0
        %620 = vmatpush1.msra.mxu0 0.0
        %621 = vmatprep.subr.mxu0 0.0
        %622 = vmatpush1.msra.mxu0 0.0
        %623 = vmatprep.subr.mxu0 0.0
        %624 = vmatpush1.msra.mxu0 0.0
        %625 = vmatprep.subr.mxu0 0.0
        %626 = vmatpush1.msra.mxu0 0.0
        %627 = vmatprep.subr.mxu0 0.0
        %628 = vmatpush1.msra.mxu0 0.0
        %629 = vmatprep.subr.mxu0 0.0
        %630 = vmatpush1.msra.mxu0 0.0
        %631 = vmatprep.subr.mxu0 0.0
        %632 = vmatpush1.msra.mxu0 0.0
        %633 = vmatprep.subr.mxu0 0.0
        %634 = vmatpush1.msra.mxu0 0.0
        %635 = vmatprep.subr.mxu0 0.0
        %636 = vmatpush1.msra.mxu0 0.0
        %637 = vmatprep.subr.mxu0 0.0
        %638 = vmatpush1.msra.mxu0 0.0
        %639 = vmatprep.subr.mxu0 0.0
        %640 = vmatpush1.msra.mxu0 0.0
        %641 = vmatprep.subr.mxu0 0.0
        %642 = vmatpush1.msra.mxu0 0.0
        %643 = vmatprep.subr.mxu0 0.0
        %644 = vmatpush1.msra.mxu0 0.0
        %645 = vmatprep.subr.mxu0 0.0
        %646 = vmatpush1.msra.mxu0 0.0
        %647 = vmatprep.subr.mxu0 0.0
        %648 = vmatpush1.msra.mxu0 0.0
        %649 = vmatprep.subr.mxu0 0.0
        %650 = vmatpush1.msra.mxu0 0.0
        %651 = vmatprep.subr.mxu0 0.0
        %652 = vmatpush1.msra.mxu0 0.0
        %653 = vmatprep.subr.mxu0 0.0
        %654 = vmatpush1.msra.mxu0 0.0
        %655 = vmatprep.subr.mxu0 0.0
        %656 = vmatpush1.msra.mxu0 0.0
        %657 = vmatprep.subr.mxu0 0.0
        %658 = vmatpush1.msra.mxu0 0.0
        %659 = vmatprep.subr.mxu0 0.0
        %660 = vmatpush1.msra.mxu0 0.0
        %661 = vmatprep.subr.mxu0 0.0
        %662 = vmatpush1.msra.mxu0 0.0
        %663 = vmatprep.subr.mxu0 0.0
        %664 = vmatpush1.msra.mxu0 0.0
        %665 = vmatprep.subr.mxu0 0.0
        %666 = vmatpush1.msra.mxu0 0.0
        %667 = vmatprep.subr.mxu0 0.0
        %668 = vmatpush1.msra.mxu0 0.0
        %669 = vmatprep.subr.mxu0 0.0
        %670 = vmatpush1.msra.mxu0 0.0
        %671 = vmatprep.mubr.f32.mxu0 0.0
        %672 = vmatmul.mubr.f32.gmra.mrb[0].mxu0 %v530
        %v673 = vpop.f32.mrb[0].mxu0
        %v674 = vadd.f32 0.0, %v673
        %v675 = vpop.f32.mrb[0].mxu0
        %676 = vdwg.mxu0
        %v677 = vmul.f32 %v674, %v523
        %v678 = vadd.f32 %v602, %v677
        %v679 = vld [vmem:[#allocation15] sm:$0xff]
        %v680 = vld [vmem:[#allocation15 + $0x8] sm:$0xff]
        %v681 = vld [vmem:[#allocation15 + $0x10] sm:$0xff]
        %v682 = vld [vmem:[#allocation15 + $0x18] sm:$0xff]
        %v684 = vsel %vm528, %v520, 0
        %686 = vmatprep.subr.mxu0 0.0
        %687 = vmatpush1.msra.mxu0 %v679
        %688 = vmatprep.subr.mxu0 0.0
        %689 = vmatpush1.msra.mxu0 %v680
        %690 = vmatprep.subr.mxu0 0.0
        %691 = vmatpush1.msra.mxu0 %v681
        %692 = vmatprep.subr.mxu0 0.0
        %693 = vmatpush1.msra.mxu0 %v682
        %694 = vmatprep.subr.mxu0 0.0
        %695 = vmatpush1.msra.mxu0 0.0
        %696 = vmatprep.subr.mxu0 0.0
        %697 = vmatpush1.msra.mxu0 0.0
        %698 = vmatprep.subr.mxu0 0.0
        %699 = vmatpush1.msra.mxu0 0.0
        %700 = vmatprep.subr.mxu0 0.0
        %701 = vmatpush1.msra.mxu0 0.0
        %702 = vmatprep.subr.mxu0 0.0
        %703 = vmatpush1.msra.mxu0 0.0
        %704 = vmatprep.subr.mxu0 0.0
        %705 = vmatpush1.msra.mxu0 0.0
        %706 = vmatprep.subr.mxu0 0.0
        %707 = vmatpush1.msra.mxu0 0.0
        %708 = vmatprep.subr.mxu0 0.0
        %709 = vmatpush1.msra.mxu0 0.0
        %710 = vmatprep.subr.mxu0 0.0
        %711 = vmatpush1.msra.mxu0 0.0
        %712 = vmatprep.subr.mxu0 0.0
        %713 = vmatpush1.msra.mxu0 0.0
        %714 = vmatprep.subr.mxu0 0.0
        %715 = vmatpush1.msra.mxu0 0.0
        %716 = vmatprep.subr.mxu0 0.0
        %717 = vmatpush1.msra.mxu0 0.0
        %718 = vmatprep.subr.mxu0 0.0
        %719 = vmatpush1.msra.mxu0 0.0
        %720 = vmatprep.subr.mxu0 0.0
        %721 = vmatpush1.msra.mxu0 0.0
        %722 = vmatprep.subr.mxu0 0.0
        %723 = vmatpush1.msra.mxu0 0.0
        %724 = vmatprep.subr.mxu0 0.0
        %725 = vmatpush1.msra.mxu0 0.0
        %726 = vmatprep.subr.mxu0 0.0
        %727 = vmatpush1.msra.mxu0 0.0
        %728 = vmatprep.subr.mxu0 0.0
        %729 = vmatpush1.msra.mxu0 0.0
        %730 = vmatprep.subr.mxu0 0.0
        %731 = vmatpush1.msra.mxu0 0.0
        %732 = vmatprep.subr.mxu0 0.0
        %733 = vmatpush1.msra.mxu0 0.0
        %734 = vmatprep.subr.mxu0 0.0
        %735 = vmatpush1.msra.mxu0 0.0
        %736 = vmatprep.subr.mxu0 0.0
        %737 = vmatpush1.msra.mxu0 0.0
        %738 = vmatprep.subr.mxu0 0.0
        %739 = vmatpush1.msra.mxu0 0.0
        %740 = vmatprep.subr.mxu0 0.0
        %741 = vmatpush1.msra.mxu0 0.0
        %742 = vmatprep.subr.mxu0 0.0
        %743 = vmatpush1.msra.mxu0 0.0
        %744 = vmatprep.subr.mxu0 0.0
        %745 = vmatpush1.msra.mxu0 0.0
        %746 = vmatprep.subr.mxu0 0.0
        %747 = vmatpush1.msra.mxu0 0.0
        %748 = vmatprep.subr.mxu0 0.0
        %749 = vmatpush1.msra.mxu0 0.0
        %750 = vmatprep.mubr.f32.mxu0 0.0
        %751 = vmatmul.mubr.f32.gmra.mrb[0].mxu0 %v684
        %v752 = vpop.f32.mrb[0].mxu0
        %v753 = vadd.f32 0.0, %v752
        %v754 = vpop.f32.mrb[0].mxu0
        %755 = vdwg.mxu0
        %v756 = vmul.f32 %v753, %v522
        %v757 = vld [vmem:[#allocation17] sm:$0xff]
        %v758 = vld [vmem:[#allocation17 + $0x8] sm:$0xff]
        %v759 = vld [vmem:[#allocation17 + $0x10] sm:$0xff]
        %v760 = vld [vmem:[#allocation17 + $0x18] sm:$0xff]
        %761 = vmatprep.subr.mxu0 0.0
        %762 = vmatpush1.msra.mxu0 %v757
        %763 = vmatprep.subr.mxu0 0.0
        %764 = vmatpush1.msra.mxu0 %v758
        %765 = vmatprep.subr.mxu0 0.0
        %766 = vmatpush1.msra.mxu0 %v759
        %767 = vmatprep.subr.mxu0 0.0
        %768 = vmatpush1.msra.mxu0 %v760
        %769 = vmatprep.subr.mxu0 0.0
        %770 = vmatpush1.msra.mxu0 0.0
        %771 = vmatprep.subr.mxu0 0.0
        %772 = vmatpush1.msra.mxu0 0.0
        %773 = vmatprep.subr.mxu0 0.0
        %774 = vmatpush1.msra.mxu0 0.0
        %775 = vmatprep.subr.mxu0 0.0
        %776 = vmatpush1.msra.mxu0 0.0
        %777 = vmatprep.subr.mxu0 0.0
        %778 = vmatpush1.msra.mxu0 0.0
        %779 = vmatprep.subr.mxu0 0.0
        %780 = vmatpush1.msra.mxu0 0.0
        %781 = vmatprep.subr.mxu0 0.0
        %782 = vmatpush1.msra.mxu0 0.0
        %783 = vmatprep.subr.mxu0 0.0
        %784 = vmatpush1.msra.mxu0 0.0
        %785 = vmatprep.subr.mxu0 0.0
        %786 = vmatpush1.msra.mxu0 0.0
        %787 = vmatprep.subr.mxu0 0.0
        %788 = vmatpush1.msra.mxu0 0.0
        %789 = vmatprep.subr.mxu0 0.0
        %790 = vmatpush1.msra.mxu0 0.0
        %791 = vmatprep.subr.mxu0 0.0
        %792 = vmatpush1.msra.mxu0 0.0
        %793 = vmatprep.subr.mxu0 0.0
        %794 = vmatpush1.msra.mxu0 0.0
        %795 = vmatprep.subr.mxu0 0.0
        %796 = vmatpush1.msra.mxu0 0.0
        %797 = vmatprep.subr.mxu0 0.0
        %798 = vmatpush1.msra.mxu0 0.0
        %799 = vmatprep.subr.mxu0 0.0
        %800 = vmatpush1.msra.mxu0 0.0
        %801 = vmatprep.subr.mxu0 0.0
        %802 = vmatpush1.msra.mxu0 0.0
        %803 = vmatprep.subr.mxu0 0.0
        %804 = vmatpush1.msra.mxu0 0.0
        %805 = vmatprep.subr.mxu0 0.0
        %806 = vmatpush1.msra.mxu0 0.0
        %807 = vmatprep.subr.mxu0 0.0
        %808 = vmatpush1.msra.mxu0 0.0
        %809 = vmatprep.subr.mxu0 0.0
        %810 = vmatpush1.msra.mxu0 0.0
        %811 = vmatprep.subr.mxu0 0.0
        %812 = vmatpush1.msra.mxu0 0.0
        %813 = vmatprep.subr.mxu0 0.0
        %814 = vmatpush1.msra.mxu0 0.0
        %815 = vmatprep.subr.mxu0 0.0
        %816 = vmatpush1.msra.mxu0 0.0
        %817 = vmatprep.subr.mxu0 0.0
        %818 = vmatpush1.msra.mxu0 0.0
        %819 = vmatprep.subr.mxu0 0.0
        %820 = vmatpush1.msra.mxu0 0.0
        %821 = vmatprep.subr.mxu0 0.0
        %822 = vmatpush1.msra.mxu0 0.0
        %823 = vmatprep.subr.mxu0 0.0
        %824 = vmatpush1.msra.mxu0 0.0
        %825 = vmatprep.mubr.f32.mxu0 0.0
        %826 = vmatmul.mubr.f32.gmra.mrb[0].mxu0 %v684
        %v827 = vpop.f32.mrb[0].mxu0
        %v828 = vadd.f32 0.0, %v827
        %v829 = vpop.f32.mrb[0].mxu0
        %830 = vdwg.mxu0
        %v831 = vmul.f32 %v828, %v523
        %v832 = vadd.f32 %v756, %v831
        %v833 = vld [vmem:[#allocation18] sm:$0xff]
        %v834 = vld [vmem:[#allocation18 + $0x8] sm:$0xff]
        %v835 = vld [vmem:[#allocation18 + $0x10] sm:$0xff]
        %v836 = vld [vmem:[#allocation18 + $0x18] sm:$0xff]
        %v838 = vsel %vm528, %v521, 0
        %840 = vmatprep.subr.mxu0 0.0
        %841 = vmatpush1.msra.mxu0 %v833
        %842 = vmatprep.subr.mxu0 0.0
        %843 = vmatpush1.msra.mxu0 %v834
        %844 = vmatprep.subr.mxu0 0.0
        %845 = vmatpush1.msra.mxu0 %v835
        %846 = vmatprep.subr.mxu0 0.0
        %847 = vmatpush1.msra.mxu0 %v836
        %848 = vmatprep.subr.mxu0 0.0
        %849 = vmatpush1.msra.mxu0 0.0
        %850 = vmatprep.subr.mxu0 0.0
        %851 = vmatpush1.msra.mxu0 0.0
        %852 = vmatprep.subr.mxu0 0.0
        %853 = vmatpush1.msra.mxu0 0.0
        %854 = vmatprep.subr.mxu0 0.0
        %855 = vmatpush1.msra.mxu0 0.0
        %856 = vmatprep.subr.mxu0 0.0
        %857 = vmatpush1.msra.mxu0 0.0
        %858 = vmatprep.subr.mxu0 0.0
        %859 = vmatpush1.msra.mxu0 0.0
        %860 = vmatprep.subr.mxu0 0.0
        %861 = vmatpush1.msra.mxu0 0.0
        %862 = vmatprep.subr.mxu0 0.0
        %863 = vmatpush1.msra.mxu0 0.0
        %864 = vmatprep.subr.mxu0 0.0
        %865 = vmatpush1.msra.mxu0 0.0
        %866 = vmatprep.subr.mxu0 0.0
        %867 = vmatpush1.msra.mxu0 0.0
        %868 = vmatprep.subr.mxu0 0.0
        %869 = vmatpush1.msra.mxu0 0.0
        %870 = vmatprep.subr.mxu0 0.0
        %871 = vmatpush1.msra.mxu0 0.0
        %872 = vmatprep.subr.mxu0 0.0
        %873 = vmatpush1.msra.mxu0 0.0
        %874 = vmatprep.subr.mxu0 0.0
        %875 = vmatpush1.msra.mxu0 0.0
        %876 = vmatprep.subr.mxu0 0.0
        %877 = vmatpush1.msra.mxu0 0.0
        %878 = vmatprep.subr.mxu0 0.0
        %879 = vmatpush1.msra.mxu0 0.0
        %880 = vmatprep.subr.mxu0 0.0
        %881 = vmatpush1.msra.mxu0 0.0
        %882 = vmatprep.subr.mxu0 0.0
        %883 = vmatpush1.msra.mxu0 0.0
        %884 = vmatprep.subr.mxu0 0.0
        %885 = vmatpush1.msra.mxu0 0.0
        %886 = vmatprep.subr.mxu0 0.0
        %887 = vmatpush1.msra.mxu0 0.0
        %888 = vmatprep.subr.mxu0 0.0
        %889 = vmatpush1.msra.mxu0 0.0
        %890 = vmatprep.subr.mxu0 0.0
        %891 = vmatpush1.msra.mxu0 0.0
        %892 = vmatprep.subr.mxu0 0.0
        %893 = vmatpush1.msra.mxu0 0.0
        %894 = vmatprep.subr.mxu0 0.0
        %895 = vmatpush1.msra.mxu0 0.0
        %896 = vmatprep.subr.mxu0 0.0
        %897 = vmatpush1.msra.mxu0 0.0
        %898 = vmatprep.subr.mxu0 0.0
        %899 = vmatpush1.msra.mxu0 0.0
        %900 = vmatprep.subr.mxu0 0.0
        %901 = vmatpush1.msra.mxu0 0.0
        %902 = vmatprep.subr.mxu0 0.0
        %903 = vmatpush1.msra.mxu0 0.0
        %904 = vmatprep.mubr.f32.mxu0 0.0
        %905 = vmatmul.mubr.f32.gmra.mrb[0].mxu0 %v838
        %v906 = vpop.f32.mrb[0].mxu0
        %v907 = vadd.f32 0.0, %v906
        %v908 = vpop.f32.mrb[0].mxu0
        %909 = vdwg.mxu0
        %910 = vst.msk [vmem:[#allocation2] sm:$0xff] %vm528, %v678
        %911 = vst.msk [vmem:[#allocation3] sm:$0xff] %vm528, %v832
        %912 = vst.msk [vmem:[#allocation4] sm:$0xff] %vm528, %v907
        %914 = vrot.lane.b32.xlu0 %v678, 96
        %v915 = vpop.permute.xlu0 %914
        %s917 = scalar_lea.vmem [#allocation2], 8
        %918 = vst.msk [vmem:[%s917] sm:$0xff] %vm528, %v915
        %920 = vrot.lane.b32.xlu0 %v832, 96
        %v921 = vpop.permute.xlu0 %920
        %s923 = scalar_lea.vmem [#allocation3], 8
        %924 = vst.msk [vmem:[%s923] sm:$0xff] %vm528, %v921
        %926 = vrot.lane.b32.xlu0 %v907, 96
        %v927 = vpop.permute.xlu0 %926
        %s929 = scalar_lea.vmem [#allocation4], 8
        %930 = vst.msk [vmem:[%s929] sm:$0xff] %vm528, %v927
        %931 = vst.msk [vmem:[#allocation5] sm:$0xff] %vm528, 0.0
        %v932 = vld [vmem:[#allocation2] sm:$0xff]
        %v933 = vld [vmem:[#allocation3] sm:$0xff]
        %v934 = vld [vmem:[#allocation4] sm:$0xff]
        %v936 = vsel %vm528, %v932, 0
        %v939 = vsel %vm528, %v933, 0
        %941 = vmatprep.subr.mxu0 0.0
        %942 = vmatpush1.xpose.msra.mxu0 %v939
        %943 = vmatprep.subr.mxu0 0.0
        %944 = vmatpush1.xpose.msra.mxu0 0.0
        %945 = vmatprep.subr.mxu0 0.0
        %946 = vmatpush1.xpose.msra.mxu0 0.0
        %947 = vmatprep.subr.mxu0 0.0
        %948 = vmatpush1.xpose.msra.mxu0 0.0
        %949 = vmatprep.subr.mxu0 0.0
        %950 = vmatpush1.xpose.msra.mxu0 0.0
        %951 = vmatprep.subr.mxu0 0.0
        %952 = vmatpush1.xpose.msra.mxu0 0.0
        %953 = vmatprep.subr.mxu0 0.0
        %954 = vmatpush1.xpose.msra.mxu0 0.0
        %955 = vmatprep.subr.mxu0 0.0
        %956 = vmatpush1.xpose.msra.mxu0 0.0
        %957 = vmatprep.subr.mxu0 0.0
        %958 = vmatpush1.xpose.msra.mxu0 0.0
        %959 = vmatprep.subr.mxu0 0.0
        %960 = vmatpush1.xpose.msra.mxu0 0.0
        %961 = vmatprep.subr.mxu0 0.0
        %962 = vmatpush1.xpose.msra.mxu0 0.0
        %963 = vmatprep.subr.mxu0 0.0
        %964 = vmatpush1.xpose.msra.mxu0 0.0
        %965 = vmatprep.subr.mxu0 0.0
        %966 = vmatpush1.xpose.msra.mxu0 0.0
        %967 = vmatprep.subr.mxu0 0.0
        %968 = vmatpush1.xpose.msra.mxu0 0.0
        %969 = vmatprep.subr.mxu0 0.0
        %970 = vmatpush1.xpose.msra.mxu0 0.0
        %971 = vmatprep.subr.mxu0 0.0
        %972 = vmatpush1.xpose.msra.mxu0 0.0
        %973 = vmatprep.subr.mxu0 0.0
        %974 = vmatpush1.xpose.msra.mxu0 0.0
        %975 = vmatprep.subr.mxu0 0.0
        %976 = vmatpush1.xpose.msra.mxu0 0.0
        %977 = vmatprep.subr.mxu0 0.0
        %978 = vmatpush1.xpose.msra.mxu0 0.0
        %979 = vmatprep.subr.mxu0 0.0
        %980 = vmatpush1.xpose.msra.mxu0 0.0
        %981 = vmatprep.subr.mxu0 0.0
        %982 = vmatpush1.xpose.msra.mxu0 0.0
        %983 = vmatprep.subr.mxu0 0.0
        %984 = vmatpush1.xpose.msra.mxu0 0.0
        %985 = vmatprep.subr.mxu0 0.0
        %986 = vmatpush1.xpose.msra.mxu0 0.0
        %987 = vmatprep.subr.mxu0 0.0
        %988 = vmatpush1.xpose.msra.mxu0 0.0
        %989 = vmatprep.subr.mxu0 0.0
        %990 = vmatpush1.xpose.msra.mxu0 0.0
        %991 = vmatprep.subr.mxu0 0.0
        %992 = vmatpush1.xpose.msra.mxu0 0.0
        %993 = vmatprep.subr.mxu0 0.0
        %994 = vmatpush1.xpose.msra.mxu0 0.0
        %995 = vmatprep.subr.mxu0 0.0
        %996 = vmatpush1.xpose.msra.mxu0 0.0
        %997 = vmatprep.subr.mxu0 0.0
        %998 = vmatpush1.xpose.msra.mxu0 0.0
        %999 = vmatprep.subr.mxu0 0.0
        %1000 = vmatpush1.xpose.msra.mxu0 0.0
        %1001 = vmatprep.subr.mxu0 0.0
        %1002 = vmatpush1.xpose.msra.mxu0 0.0
        %1003 = vmatprep.subr.mxu0 0.0
        %1004 = vmatpush1.xpose.msra.mxu0 0.0
        %1005 = vmatprep.mubr.f32.mxu0 0.0
        %1006 = vmatmul.mubr.f32.gmra.mrb[0].mxu0 %v936
        %v1007 = vpop.f32.mrb[0].mxu0
        %v1008 = vadd.f32 0.0, %v1007
        %v1009 = vpop.f32.mrb[0].mxu0
        %1010 = vdwg.mxu0
        %v1011 = vlaneseq
        %v1012 = vshrl.u32 %v1011, 7
        %v1013 = vlaneseq
        %v1014 = vand.u32 %v1013, 127
        %vm1015 = vcmp.gt.s32.totalorder %v1014, %v1012
        %v1016 = vsel %vm1015, -1e+30, %v1008
        %vm1017 = vcmask 64512
        %v1018 = vsel %vm1017, %v1016, -inf
        %1019 = vmax.xlane.f32.xlu0 %v1018
        %v1020 = vpop.xlane.xlu0 %1019
        %v1021 = vsub.f32 %v1016, %v1020
        %v1022 = vmul.f32 %v1021, 1.442695
        %v1023 = vpow.pop %v1022
        %v1024 = vsel %vm1017, %v1023, 0.0
        %1025 = vadd.xlane.f32.xlu0 %v1024
        %v1026 = vpop.xlane.xlu0 %1025
        %v1027 = vrcp.pop %v1026
        %v1028 = vmul.f32 %v1023, %v1027
        %vm1029 = vcmp.eq.s32.totalorder %v1014, %v1012
        %v1030 = vsel %vm1029, 0.0, %v1028
        %v1031 = vld [vmem:[#allocation5] sm:$0xff]
        %1032 = vxpose.xlu0.b32.start [1/16] %v1030, 128
        %1033 = vxpose.xlu0.b32.cont [2/16] 0.0, 128
        %1034 = vxpose.xlu0.b32.cont [3/16] 0.0, 128
        %1035 = vxpose.xlu0.b32.cont [4/16] 0.0, 128
        %1036 = vxpose.xlu0.b32.cont [5/16] 0.0, 128
        %1037 = vxpose.xlu0.b32.cont [6/16] 0.0, 128
        %1038 = vxpose.xlu0.b32.cont [7/16] 0.0, 128
        %1039 = vxpose.xlu0.b32.cont [8/16] 0.0, 128
        %1040 = vxpose.xlu0.b32.cont [9/16] 0.0, 128
        %1041 = vxpose.xlu0.b32.cont [10/16] 0.0, 128
        %1042 = vxpose.xlu0.b32.cont [11/16] 0.0, 128
        %1043 = vxpose.xlu0.b32.cont [12/16] 0.0, 128
        %1044 = vxpose.xlu0.b32.cont [13/16] 0.0, 128
        %1045 = vxpose.xlu0.b32.cont [14/16] 0.0, 128
        %1046 = vxpose.xlu0.b32.cont [15/16] 0.0, 128
        %1047 = vxpose.xlu0.b32.end [16/16] 0.0, 128
        %v1048 = vpop.trf.xlu0
        %v1049 = vpop.trf.xlu0
        %v1050 = vpop.trf.xlu0
        %v1051 = vpop.trf.xlu0
        %v1052 = vpop.trf.xlu0
        %v1053 = vpop.trf.xlu0
        %v1054 = vpop.trf.xlu0
        %v1055 = vpop.trf.xlu0
        %v1056 = vpop.trf.xlu0
        %v1057 = vpop.trf.xlu0
        %v1058 = vpop.trf.xlu0
        %v1059 = vpop.trf.xlu0
        %v1060 = vpop.trf.xlu0
        %v1061 = vpop.trf.xlu0
        %v1062 = vpop.trf.xlu0
        %v1063 = vpop.trf.xlu0
        %v1065 = vsel %vm1017, %v1048, 0
        %1067 = vmatprep.subr.mxu0 0.0
        %1068 = vmatpush1.msra.mxu0 %v934
        %1069 = vmatprep.subr.mxu0 0.0
        %1070 = vmatpush1.msra.mxu0 0.0
        %1071 = vmatprep.subr.mxu0 0.0
        %1072 = vmatpush1.msra.mxu0 0.0
        %1073 = vmatprep.subr.mxu0 0.0
        %1074 = vmatpush1.msra.mxu0 0.0
        %1075 = vmatprep.subr.mxu0 0.0
        %1076 = vmatpush1.msra.mxu0 0.0
        %1077 = vmatprep.subr.mxu0 0.0
        %1078 = vmatpush1.msra.mxu0 0.0
        %1079 = vmatprep.subr.mxu0 0.0
        %1080 = vmatpush1.msra.mxu0 0.0
        %1081 = vmatprep.subr.mxu0 0.0
        %1082 = vmatpush1.msra.mxu0 0.0
        %1083 = vmatprep.subr.mxu0 0.0
        %1084 = vmatpush1.msra.mxu0 0.0
        %1085 = vmatprep.subr.mxu0 0.0
        %1086 = vmatpush1.msra.mxu0 0.0
        %1087 = vmatprep.subr.mxu0 0.0
        %1088 = vmatpush1.msra.mxu0 0.0
        %1089 = vmatprep.subr.mxu0 0.0
        %1090 = vmatpush1.msra.mxu0 0.0
        %1091 = vmatprep.subr.mxu0 0.0
        %1092 = vmatpush1.msra.mxu0 0.0
        %1093 = vmatprep.subr.mxu0 0.0
        %1094 = vmatpush1.msra.mxu0 0.0
        %1095 = vmatprep.subr.mxu0 0.0
        %1096 = vmatpush1.msra.mxu0 0.0
        %1097 = vmatprep.subr.mxu0 0.0
        %1098 = vmatpush1.msra.mxu0 0.0
        %1099 = vmatprep.subr.mxu0 0.0
        %1100 = vmatpush1.msra.mxu0 0.0
        %1101 = vmatprep.subr.mxu0 0.0
        %1102 = vmatpush1.msra.mxu0 0.0
        %1103 = vmatprep.subr.mxu0 0.0
        %1104 = vmatpush1.msra.mxu0 0.0
        %1105 = vmatprep.subr.mxu0 0.0
        %1106 = vmatpush1.msra.mxu0 0.0
        %1107 = vmatprep.subr.mxu0 0.0
        %1108 = vmatpush1.msra.mxu0 0.0
        %1109 = vmatprep.subr.mxu0 0.0
        %1110 = vmatpush1.msra.mxu0 0.0
        %1111 = vmatprep.subr.mxu0 0.0
        %1112 = vmatpush1.msra.mxu0 0.0
        %1113 = vmatprep.subr.mxu0 0.0
        %1114 = vmatpush1.msra.mxu0 0.0
        %1115 = vmatprep.subr.mxu0 0.0
        %1116 = vmatpush1.msra.mxu0 0.0
        %1117 = vmatprep.subr.mxu0 0.0
        %1118 = vmatpush1.msra.mxu0 0.0
        %1119 = vmatprep.subr.mxu0 0.0
        %1120 = vmatpush1.msra.mxu0 0.0
        %1121 = vmatprep.subr.mxu0 0.0
        %1122 = vmatpush1.msra.mxu0 0.0
        %1123 = vmatprep.subr.mxu0 0.0
        %1124 = vmatpush1.msra.mxu0 0.0
        %1125 = vmatprep.subr.mxu0 0.0
        %1126 = vmatpush1.msra.mxu0 0.0
        %1127 = vmatprep.subr.mxu0 0.0
        %1128 = vmatpush1.msra.mxu0 0.0
        %1129 = vmatprep.subr.mxu0 0.0
        %1130 = vmatpush1.msra.mxu0 0.0
        %1131 = vmatprep.mubr.f32.mxu0 0.0
        %1132 = vmatmul.mubr.f32.gmra.mrb[0].mxu0 %v1065
        %v1133 = vpop.f32.mrb[0].mxu0
        %v1134 = vadd.f32 0.0, %v1133
        %v1135 = vpop.f32.mrb[0].mxu0
        %1136 = vdwg.mxu0
        %v1137 = vadd.f32 %v1031, %v1134
        %1138 = vst.msk [vmem:[#allocation5] sm:$0xff] %vm528, %v1137
        %v1139 = vld [vmem:[%s917] sm:$0xff]
        %v1140 = vld [vmem:[%s923] sm:$0xff]
        %v1141 = vld [vmem:[%s929] sm:$0xff]
        %v1143 = vsel %vm528, %v1139, 0
        %v1146 = vsel %vm528, %v1140, 0
        %1148 = vmatprep.subr.mxu0 0.0
        %1149 = vmatpush1.xpose.msra.mxu0 %v1146
        %1150 = vmatprep.subr.mxu0 0.0
        %1151 = vmatpush1.xpose.msra.mxu0 0.0
        %1152 = vmatprep.subr.mxu0 0.0
        %1153 = vmatpush1.xpose.msra.mxu0 0.0
        %1154 = vmatprep.subr.mxu0 0.0
        %1155 = vmatpush1.xpose.msra.mxu0 0.0
        %1156 = vmatprep.subr.mxu0 0.0
        %1157 = vmatpush1.xpose.msra.mxu0 0.0
        %1158 = vmatprep.subr.mxu0 0.0
        %1159 = vmatpush1.xpose.msra.mxu0 0.0
        %1160 = vmatprep.subr.mxu0 0.0
        %1161 = vmatpush1.xpose.msra.mxu0 0.0
        %1162 = vmatprep.subr.mxu0 0.0
        %1163 = vmatpush1.xpose.msra.mxu0 0.0
        %1164 = vmatprep.subr.mxu0 0.0
        %1165 = vmatpush1.xpose.msra.mxu0 0.0
        %1166 = vmatprep.subr.mxu0 0.0
        %1167 = vmatpush1.xpose.msra.mxu0 0.0
        %1168 = vmatprep.subr.mxu0 0.0
        %1169 = vmatpush1.xpose.msra.mxu0 0.0
        %1170 = vmatprep.subr.mxu0 0.0
        %1171 = vmatpush1.xpose.msra.mxu0 0.0
        %1172 = vmatprep.subr.mxu0 0.0
        %1173 = vmatpush1.xpose.msra.mxu0 0.0
        %1174 = vmatprep.subr.mxu0 0.0
        %1175 = vmatpush1.xpose.msra.mxu0 0.0
        %1176 = vmatprep.subr.mxu0 0.0
        %1177 = vmatpush1.xpose.msra.mxu0 0.0
        %1178 = vmatprep.subr.mxu0 0.0
        %1179 = vmatpush1.xpose.msra.mxu0 0.0
        %1180 = vmatprep.subr.mxu0 0.0
        %1181 = vmatpush1.xpose.msra.mxu0 0.0
        %1182 = vmatprep.subr.mxu0 0.0
        %1183 = vmatpush1.xpose.msra.mxu0 0.0
        %1184 = vmatprep.subr.mxu0 0.0
        %1185 = vmatpush1.xpose.msra.mxu0 0.0
        %1186 = vmatprep.subr.mxu0 0.0
        %1187 = vmatpush1.xpose.msra.mxu0 0.0
        %1188 = vmatprep.subr.mxu0 0.0
        %1189 = vmatpush1.xpose.msra.mxu0 0.0
        %1190 = vmatprep.subr.mxu0 0.0
        %1191 = vmatpush1.xpose.msra.mxu0 0.0
        %1192 = vmatprep.subr.mxu0 0.0
        %1193 = vmatpush1.xpose.msra.mxu0 0.0
        %1194 = vmatprep.subr.mxu0 0.0
        %1195 = vmatpush1.xpose.msra.mxu0 0.0
        %1196 = vmatprep.subr.mxu0 0.0
        %1197 = vmatpush1.xpose.msra.mxu0 0.0
        %1198 = vmatprep.subr.mxu0 0.0
        %1199 = vmatpush1.xpose.msra.mxu0 0.0
        %1200 = vmatprep.subr.mxu0 0.0
        %1201 = vmatpush1.xpose.msra.mxu0 0.0
        %1202 = vmatprep.subr.mxu0 0.0
        %1203 = vmatpush1.xpose.msra.mxu0 0.0
        %1204 = vmatprep.subr.mxu0 0.0
        %1205 = vmatpush1.xpose.msra.mxu0 0.0
        %1206 = vmatprep.subr.mxu0 0.0
        %1207 = vmatpush1.xpose.msra.mxu0 0.0
        %1208 = vmatprep.subr.mxu0 0.0
        %1209 = vmatpush1.xpose.msra.mxu0 0.0
        %1210 = vmatprep.subr.mxu0 0.0
        %1211 = vmatpush1.xpose.msra.mxu0 0.0
        %1212 = vmatprep.mubr.f32.mxu0 0.0
        %1213 = vmatmul.mubr.f32.gmra.mrb[0].mxu0 %v1143
        %v1214 = vpop.f32.mrb[0].mxu0
        %v1215 = vadd.f32 0.0, %v1214
        %v1216 = vpop.f32.mrb[0].mxu0
        %1217 = vdwg.mxu0
        %v1218 = vsel %vm1015, -1e+30, %v1215
        %v1219 = vsel %vm1017, %v1218, -inf
        %1220 = vmax.xlane.f32.xlu0 %v1219
        %v1221 = vpop.xlane.xlu0 %1220
        %v1222 = vsub.f32 %v1218, %v1221
        %v1223 = vmul.f32 %v1222, 1.442695
        %v1224 = vpow.pop %v1223
        %v1225 = vsel %vm1017, %v1224, 0.0
        %1226 = vadd.xlane.f32.xlu0 %v1225
        %v1227 = vpop.xlane.xlu0 %1226
        %v1228 = vrcp.pop %v1227
        %v1229 = vmul.f32 %v1224, %v1228
        %v1230 = vsel %vm1029, 0.0, %v1229
        %v1231 = vld [vmem:[#allocation5] sm:$0xff]
        %1232 = vxpose.xlu0.b32.start [1/16] %v1230, 128
        %1233 = vxpose.xlu0.b32.cont [2/16] 0.0, 128
        %1234 = vxpose.xlu0.b32.cont [3/16] 0.0, 128
        %1235 = vxpose.xlu0.b32.cont [4/16] 0.0, 128
        %1236 = vxpose.xlu0.b32.cont [5/16] 0.0, 128
        %1237 = vxpose.xlu0.b32.cont [6/16] 0.0, 128
        %1238 = vxpose.xlu0.b32.cont [7/16] 0.0, 128
        %1239 = vxpose.xlu0.b32.cont [8/16] 0.0, 128
        %1240 = vxpose.xlu0.b32.cont [9/16] 0.0, 128
        %1241 = vxpose.xlu0.b32.cont [10/16] 0.0, 128
        %1242 = vxpose.xlu0.b32.cont [11/16] 0.0, 128
        %1243 = vxpose.xlu0.b32.cont [12/16] 0.0, 128
        %1244 = vxpose.xlu0.b32.cont [13/16] 0.0, 128
        %1245 = vxpose.xlu0.b32.cont [14/16] 0.0, 128
        %1246 = vxpose.xlu0.b32.cont [15/16] 0.0, 128
        %1247 = vxpose.xlu0.b32.end [16/16] 0.0, 128
        %v1248 = vpop.trf.xlu0
        %v1249 = vpop.trf.xlu0
        %v1250 = vpop.trf.xlu0
        %v1251 = vpop.trf.xlu0
        %v1252 = vpop.trf.xlu0
        %v1253 = vpop.trf.xlu0
        %v1254 = vpop.trf.xlu0
        %v1255 = vpop.trf.xlu0
        %v1256 = vpop.trf.xlu0
        %v1257 = vpop.trf.xlu0
        %v1258 = vpop.trf.xlu0
        %v1259 = vpop.trf.xlu0
        %v1260 = vpop.trf.xlu0
        %v1261 = vpop.trf.xlu0
        %v1262 = vpop.trf.xlu0
        %v1263 = vpop.trf.xlu0
        %v1265 = vsel %vm1017, %v1248, 0
        %1267 = vmatprep.subr.mxu0 0.0
        %1268 = vmatpush1.msra.mxu0 %v1141
        %1269 = vmatprep.subr.mxu0 0.0
        %1270 = vmatpush1.msra.mxu0 0.0
        %1271 = vmatprep.subr.mxu0 0.0
        %1272 = vmatpush1.msra.mxu0 0.0
        %1273 = vmatprep.subr.mxu0 0.0
        %1274 = vmatpush1.msra.mxu0 0.0
        %1275 = vmatprep.subr.mxu0 0.0
        %1276 = vmatpush1.msra.mxu0 0.0
        %1277 = vmatprep.subr.mxu0 0.0
        %1278 = vmatpush1.msra.mxu0 0.0
        %1279 = vmatprep.subr.mxu0 0.0
        %1280 = vmatpush1.msra.mxu0 0.0
        %1281 = vmatprep.subr.mxu0 0.0
        %1282 = vmatpush1.msra.mxu0 0.0
        %1283 = vmatprep.subr.mxu0 0.0
        %1284 = vmatpush1.msra.mxu0 0.0
        %1285 = vmatprep.subr.mxu0 0.0
        %1286 = vmatpush1.msra.mxu0 0.0
        %1287 = vmatprep.subr.mxu0 0.0
        %1288 = vmatpush1.msra.mxu0 0.0
        %1289 = vmatprep.subr.mxu0 0.0
        %1290 = vmatpush1.msra.mxu0 0.0
        %1291 = vmatprep.subr.mxu0 0.0
        %1292 = vmatpush1.msra.mxu0 0.0
        %1293 = vmatprep.subr.mxu0 0.0
        %1294 = vmatpush1.msra.mxu0 0.0
        %1295 = vmatprep.subr.mxu0 0.0
        %1296 = vmatpush1.msra.mxu0 0.0
        %1297 = vmatprep.subr.mxu0 0.0
        %1298 = vmatpush1.msra.mxu0 0.0
        %1299 = vmatprep.subr.mxu0 0.0
        %1300 = vmatpush1.msra.mxu0 0.0
        %1301 = vmatprep.subr.mxu0 0.0
        %1302 = vmatpush1.msra.mxu0 0.0
        %1303 = vmatprep.subr.mxu0 0.0
        %1304 = vmatpush1.msra.mxu0 0.0
        %1305 = vmatprep.subr.mxu0 0.0
        %1306 = vmatpush1.msra.mxu0 0.0
        %1307 = vmatprep.subr.mxu0 0.0
        %1308 = vmatpush1.msra.mxu0 0.0
        %1309 = vmatprep.subr.mxu0 0.0
        %1310 = vmatpush1.msra.mxu0 0.0
        %1311 = vmatprep.subr.mxu0 0.0
        %1312 = vmatpush1.msra.mxu0 0.0
        %1313 = vmatprep.subr.mxu0 0.0
        %1314 = vmatpush1.msra.mxu0 0.0
        %1315 = vmatprep.subr.mxu0 0.0
        %1316 = vmatpush1.msra.mxu0 0.0
        %1317 = vmatprep.subr.mxu0 0.0
        %1318 = vmatpush1.msra.mxu0 0.0
        %1319 = vmatprep.subr.mxu0 0.0
        %1320 = vmatpush1.msra.mxu0 0.0
        %1321 = vmatprep.subr.mxu0 0.0
        %1322 = vmatpush1.msra.mxu0 0.0
        %1323 = vmatprep.subr.mxu0 0.0
        %1324 = vmatpush1.msra.mxu0 0.0
        %1325 = vmatprep.subr.mxu0 0.0
        %1326 = vmatpush1.msra.mxu0 0.0
        %1327 = vmatprep.subr.mxu0 0.0
        %1328 = vmatpush1.msra.mxu0 0.0
        %1329 = vmatprep.subr.mxu0 0.0
        %1330 = vmatpush1.msra.mxu0 0.0
        %1331 = vmatprep.mubr.f32.mxu0 0.0
        %1332 = vmatmul.mubr.f32.gmra.mrb[0].mxu0 %v1265
        %v1333 = vpop.f32.mrb[0].mxu0
        %v1334 = vadd.f32 0.0, %v1333
        %v1335 = vpop.f32.mrb[0].mxu0
        %1336 = vdwg.mxu0
        %v1337 = vadd.f32 %v1231, %v1334
        %1338 = vst.msk [vmem:[#allocation5] sm:$0xff] %vm528, %v1337
        %v1339 = vld [vmem:[#allocation5] sm:$0xff]
        %1340 = vst.msk [vmem:[%s518] sm:$0xff] %vm528, %v1339
        %s1341 = sand.u32 %s266, 1
        %s1342 = scalar_lea.sflag [#allocation8], %s1341
        %s1343 = sand.u32 %s266, 1
        %s1344 = smul.addr %s1343, 8
        %s1345 = scalar_lea.vmem [#allocation20], %s1344
        // Predicated region
        $region93: #{tpu_custom_call.1} parent=59 // pred_check
          %p1346 = pneg %p276
        $region94: #{tpu_custom_call.1} parent=59 // pred_check_branch
          %1348 = sbr.rel (%p1346) target = $region96
        $region95: #{tpu_custom_call.1} parent=59 // pred_region
          %s1350 = ssub.s32 128, 128
          %1351 = vsyncadd %s1342, %s1350
          %s1352 = smul.addr %s33, 128
          %s1353 = scalar_lea.hbm %s10, %s1352
          %s1355 = sshll.u32 %s1345, 4
          %s1356 = int_to_ptr.vmem [resolvable:$true] %s1355
          %1358 = dma.vmem_to_hbm [thread:$0]  %s1356, 128, %s1353, %s1342
        $region96: #{tpu_custom_call.1} parent=59 // pred_fallthru
          _
      $region60: #{tpu_custom_call.1} parent=5 // pred_fallthru
        _
      %p1359 = scmp.le.s32.totalorder 2, %s28
      // Predicated region
      $region97: #{tpu_custom_call.1} parent=5 // pred_check
        %p1360 = pneg %p1359
      $region98: #{tpu_custom_call.1} parent=5 // pred_check_branch
        %1362 = sbr.rel (%p1360) target = $region100
      $region99: #{tpu_custom_call.1} parent=5 // pred_region
        %s1363 = ssub.s32 %s28, 2
        // Predicated region
        $region101: #{tpu_custom_call.1} parent=99 // pred_check
          %p1364 = pneg %p282
        $region102: #{tpu_custom_call.1} parent=99 // pred_check_branch
          %1366 = sbr.rel (%p1364) target = $region104
        $region103: #{tpu_custom_call.1} parent=99 // pred_region
          %s1367 = sand.u32 %s267, 1
          %s1368 = scalar_lea.sflag [#allocation8], %s1367
          %s1369 = sand.u32 %s267, 1
          %s1370 = smul.addr %s1369, 8
          %s1371 = scalar_lea.vmem [#allocation20], %s1370
          %1372 = dma.done %s1368, 128
        $region104: #{tpu_custom_call.1} parent=99 // pred_fallthru
          _
      $region100: #{tpu_custom_call.1} parent=5 // pred_fallthru
        _
    $region6: #{tpu_custom_call.1} parent=1 // loop_footer
      %s32 = sadd.s32 1, %s28
    $region7: #{tpu_custom_call.1} parent=1 // loop_footer_branch
      %27 = sbr.rel target = $region3
    $region8: #{tpu_custom_call.1} parent=1 // loop_exit
      _
    %1373 = vsyncpa [#allocation7], 1
    %s1374 = scalar_lea.sflag [#allocation7], 1
    %1375 = vsyncpa %s1374, 1
    %1376 = vsyncpa [#allocation10], 1
    %s1377 = scalar_lea.sflag [#allocation10], 1
    %1378 = vsyncpa %s1377, 1
    %1379 = vsyncpa [#allocation13], 1
    %1380 = vsyncpa [#allocation16], 1
    %1381 = vsyncpa [#allocation19], 1
    %1382 = vsyncpa [#allocation8], 1
    %s1383 = scalar_lea.sflag [#allocation8], 1
    %1384 = vsyncpa %s1383, 1

// kernel: tpu_custom_call.1
$region0: #{tpu_custom_call.1}
  #allocation0 [shape = 'u32[]', space=smem, size = 0x4, offset = 0x4, fixed_abs, tag = 'smem constant byte address 0x4 - core index']
  #allocation1 [shape = 'u32[144,128]{1,0:T(1,128)}', space=vmem, size = 0x12000, scoped, tag = 'internal scratch']
  #allocation2 [shape = 'f32[2,8,32]{2,1,0:T(8,128)}', space=vmem, size = 0x2000, scoped, tag = 'scratch operand']
  #allocation3 [shape = 'f32[2,8,32]{2,1,0:T(8,128)}', space=vmem, size = 0x2000, scoped, tag = 'scratch operand']
  #allocation4 [shape = 'f32[2,8,32]{2,1,0:T(8,128)}', space=vmem, size = 0x2000, scoped, tag = 'scratch operand']
  #allocation5 [shape = 'f32[8,32]{1,0:T(8,128)}', space=vmem, size = 0x1000, scoped, tag = 'scratch operand']
  %s0 = inlined_call_operand.hbm [shape: f32[2,8,32], index: 0, kind: input, shape index: {}]
  %s1 = inlined_call_operand.hbm [shape: f32[2,8,32], index: 1, kind: input, shape index: {}]
  %s2 = inlined_call_operand.hbm [shape: f32[2,8,32], index: 2, kind: input, shape index: {}]
  %s3 = inlined_call_operand.hbm [shape: f32[32,64], index: 3, kind: input, shape index: {}]
  %s4 = inlined_call_operand.hbm [shape: f32[32,64], index: 4, kind: input, shape index: {}]
  %s5 = inlined_call_operand.hbm [shape: f32[32,64], index: 5, kind: input, shape index: {}]
  %s6 = inlined_call_operand.hbm [shape: f32[32,64], index: 6, kind: input, shape index: {}]
  %s7 = inlined_call_operand.hbm [shape: f32[32,64], index: 7, kind: input, shape index: {}]
  %s8 = inlined_call_operand.vmem [shape: f32[8,64], index: 8, kind: input, shape index: {}]
  %s9 = inlined_call_operand.vmem [shape: f32[8,64], index: 9, kind: input, shape index: {}]
  %s10 = inlined_call_operand.hbm [shape: f32[2,8,32], index: 10, kind: output, shape index: {}]
  %s11 = sld [smem:[#allocation0]]
  $region105: #{tpu_custom_call.1} parent=0
    _
  %s13 = ssub.s32 1, %s11
  %s14 = scalar_select 0, %s13, %s11
  $region1: #{tpu_custom_call.1} parent=0
    #allocation6 [shape = 'u8[8192]{0}', space=vmem, size = 0x2000, scoped, tag = 'input window, operand 0']
    #allocation7 [shape = 's32[2]{0}', space=sflag, size = 0x8, scoped, tag = 'scoped memory for tpu_custom_call.1']
    #allocation8 [shape = 's32[2]{0}', space=sflag, size = 0x8, scoped, tag = 'scoped memory for tpu_custom_call.1']
    #allocation9 [shape = 'u8[8192]{0}', space=vmem, size = 0x2000, scoped, tag = 'input window, operand 1']
    #allocation10 [shape = 's32[2]{0}', space=sflag, size = 0x8, scoped, tag = 'scoped memory for tpu_custom_call.1']
    #allocation11 [shape = 'u8[8192]{0}', space=vmem, size = 0x2000, scoped, tag = 'input window, operand 2']
    #allocation12 [shape = 'u8[16384]{0}', space=vmem, size = 0x4000, scoped, tag = 'input window, operand 3, single buffered']
    #allocation13 [shape = 's32[1]{0}', space=sflag, size = 0x4, scoped, tag = 'scoped memory for tpu_custom_call.1']
    #allocation14 [shape = 'u8[16384]{0}', space=vmem, size = 0x4000, scoped, tag = 'input window, operand 4, single buffered']
    #allocation15 [shape = 'u8[16384]{0}', space=vmem, size = 0x4000, scoped, tag = 'input window, operand 5, single buffered']
    #allocation16 [shape = 's32[1]{0}', space=sflag, size = 0x4, scoped, tag = 'scoped memory for tpu_custom_call.1']
    #allocation17 [shape = 'u8[16384]{0}', space=vmem, size = 0x4000, scoped, tag = 'input window, operand 6, single buffered']
    #allocation18 [shape = 'u8[16384]{0}', space=vmem, size = 0x4000, scoped, tag = 'input window, operand 7, single buffered']
    #allocation19 [shape = 's32[1]{0}', space=sflag, size = 0x4, scoped, tag = 'scoped memory for tpu_custom_call.1']
    #allocation20 [shape = 'u8[8192]{0}', space=vmem, size = 0x2000, scoped, tag = 'output window, operand 0']
    %15 = vsyncpa [#allocation7], 0
    %s16 = scalar_lea.sflag [#allocation7], 1
    %17 = vsyncpa %s16, 0
    %18 = vsyncpa [#allocation10], 0
    %s19 = scalar_lea.sflag [#allocation10], 1
    %20 = vsyncpa %s19, 0
    %21 = vsyncpa [#allocation13], 0
    %22 = vsyncpa [#allocation16], 0
    %23 = vsyncpa [#allocation19], 0
    %24 = vsyncpa [#allocation8], 0
    %s25 = scalar_lea.sflag [#allocation8], 1
    %26 = vsyncpa %s25, 0
    loop: start=0, step=1, limit=4
    $region2: #{tpu_custom_call.1} parent=1 // loop_pre_header
      _
    $region3: #{tpu_custom_call.1} parent=1 // loop_header
      %s28 = sphi 0, %s32
      %p29 = scmp.ge.s32.totalorder %s28, 4
      %s38 = sphi 0, %s40
      %s41 = sphi 0, %s38
      %s42 = sphi 0, %s41
      %s58 = sphi 0, %s42
      %s64 = sphi 0, %s66
      %s67 = sphi 0, %s64
      %s68 = sphi 0, %s67
      %s84 = sphi 0, %s68
      %s90 = sphi 0, %s92
      %s93 = sphi 0, %s90
      %s94 = sphi 0, %s93
      %s110 = sphi 0, %s94
      %s114 = sphi 0, %s114
      %s116 = sphi 0, %s114
      %s117 = sphi 0, %s116
      %s131 = sphi 0, %s117
      %s135 = sphi 0, %s135
      %s137 = sphi 0, %s135
      %s138 = sphi 0, %s137
      %s152 = sphi 0, %s138
      %s156 = sphi 0, %s156
      %s158 = sphi 0, %s156
      %s159 = sphi 0, %s158
      %s173 = sphi 0, %s159
      %s177 = sphi 0, %s177
      %s179 = sphi 0, %s177
      %s180 = sphi 0, %s179
      %s194 = sphi 0, %s180
      %s198 = sphi 0, %s198
      %s200 = sphi 0, %s198
      %s201 = sphi 0, %s200
      %s215 = sphi 0, %s201
      %s219 = sphi 0, %s219
      %s221 = sphi 0, %s219
      %s222 = sphi 0, %s221
      %s236 = sphi 0, %s222
      %s240 = sphi 0, %s240
      %s242 = sphi 0, %s240
      %s243 = sphi 0, %s242
      %s257 = sphi 0, %s243
      %s263 = sphi 0, %s265
      %s266 = sphi 0, %s263
      %s267 = sphi 0, %s266
      %s283 = sphi 0, %s267
    $region4: #{tpu_custom_call.1} parent=1 // loop_header_branch
      %31 = sbr.rel (%p29) target = $region8
    $region5: #{tpu_custom_call.1} parent=1 // loop_body
      %s33 = ssub.s32 %s28, 1
      %s34 = ssub.s32 %s28, 2
      %s35 = sadd.s32 %s28, 1
      %s36 = ssub.s32 %s28, %s35
      %p37 = scmp.eq.s32.totalorder %s36, 0
      %s39 = sadd.s32 %s38, 1
      %s40 = scalar_select %p37, %s38, %s39
      %p43 = pneg %p37
      %p44 = scmp.eq.s32.totalorder %s28, 1
      %p45 = por %p43, %p44
      %p46 = scmp.ne.s32.totalorder %s38, %s41
      %p47 = scmp.eq.s32.totalorder %s28, 0
      %p48 = por %p46, %p47
      %p49 = scmp.ne.s32.totalorder %s38, %s41
      %p50 = scmp.eq.s32.totalorder %s33, 1
      %p51 = por %p49, %p50
      %p52 = scmp.ne.s32.totalorder %s41, %s42
      %p53 = scmp.eq.s32.totalorder %s33, 0
      %p54 = por %p52, %p53
      %p55 = scmp.ne.s32.totalorder %s41, %s42
      %p56 = scmp.eq.s32.totalorder %s34, 1
      %p57 = por %p55, %p56
      %p59 = scmp.ne.s32.totalorder %s42, %s58
      %p60 = scmp.eq.s32.totalorder %s34, 0
      %p61 = por %p59, %p60
      %s62 = ssub.s32 %s28, %s35
      %p63 = scmp.eq.s32.totalorder %s62, 0
      %s65 = sadd.s32 %s64, 1
      %s66 = scalar_select %p63, %s64, %s65
      %p69 = pneg %p63
      %p70 = scmp.eq.s32.totalorder %s28, 1
      %p71 = por %p69, %p70
      %p72 = scmp.ne.s32.totalorder %s64, %s67
      %p73 = scmp.eq.s32.totalorder %s28, 0
      %p74 = por %p72, %p73
      %p75 = scmp.ne.s32.totalorder %s64, %s67
      %p76 = scmp.eq.s32.totalorder %s33, 1
      %p77 = por %p75, %p76
      %p78 = scmp.ne.s32.totalorder %s67, %s68
      %p79 = scmp.eq.s32.totalorder %s33, 0
      %p80 = por %p78, %p79
      %p81 = scmp.ne.s32.totalorder %s67, %s68
      %p82 = scmp.eq.s32.totalorder %s34, 1
      %p83 = por %p81, %p82
      %p85 = scmp.ne.s32.totalorder %s68, %s84
      %p86 = scmp.eq.s32.totalorder %s34, 0
      %p87 = por %p85, %p86
      %s88 = ssub.s32 %s28, %s35
      %p89 = scmp.eq.s32.totalorder %s88, 0
      %s91 = sadd.s32 %s90, 1
      %s92 = scalar_select %p89, %s90, %s91
      %p95 = pneg %p89
      %p96 = scmp.eq.s32.totalorder %s28, 1
      %p97 = por %p95, %p96
      %p98 = scmp.ne.s32.totalorder %s90, %s93
      %p99 = scmp.eq.s32.totalorder %s28, 0
      %p100 = por %p98, %p99
      %p101 = scmp.ne.s32.totalorder %s90, %s93
      %p102 = scmp.eq.s32.totalorder %s33, 1
      %p103 = por %p101, %p102
      %p104 = scmp.ne.s32.totalorder %s93, %s94
      %p105 = scmp.eq.s32.totalorder %s33, 0
      %p106 = por %p104, %p105
      %p107 = scmp.ne.s32.totalorder %s93, %s94
      %p108 = scmp.eq.s32.totalorder %s34, 1
      %p109 = por %p107, %p108
      %p111 = scmp.ne.s32.totalorder %s94, %s110
      %p112 = scmp.eq.s32.totalorder %s34, 0
      %p113 = por %p111, %p112
      %s115 = sadd.s32 %s114, 1
      %p118 = scmp.eq.s32.totalorder %s28, 1
      %p119 = scmp.ne.s32.totalorder %s114, %s116
      %p120 = scmp.eq.s32.totalorder %s28, 0
      %p121 = por %p119, %p120
      %p122 = scmp.ne.s32.totalorder %s114, %s116
      %p123 = scmp.eq.s32.totalorder %s33, 1
      %p124 = por %p122, %p123
      %p125 = scmp.ne.s32.totalorder %s116, %s117
      %p126 = scmp.eq.s32.totalorder %s33, 0
      %p127 = por %p125, %p126
      %p128 = scmp.ne.s32.totalorder %s116, %s117
      %p129 = scmp.eq.s32.totalorder %s34, 1
      %p130 = por %p128, %p129
      %p132 = scmp.ne.s32.totalorder %s117, %s131
      %p133 = scmp.eq.s32.totalorder %s34, 0
      %p134 = por %p132, %p133
      %s136 = sadd.s32 %s135, 1
      %p139 = scmp.eq.s32.totalorder %s28, 1
      %p140 = scmp.ne.s32.totalorder %s135, %s137
      %p141 = scmp.eq.s32.totalorder %s28, 0
      %p142 = por %p140, %p141
      %p143 = scmp.ne.s32.totalorder %s135, %s137
      %p144 = scmp.eq.s32.totalorder %s33, 1
      %p145 = por %p143, %p144
      %p146 = scmp.ne.s32.totalorder %s137, %s138
      %p147 = scmp.eq.s32.totalorder %s33, 0
      %p148 = por %p146, %p147
      %p149 = scmp.ne.s32.totalorder %s137, %s138
      %p150 = scmp.eq.s32.totalorder %s34, 1
      %p151 = por %p149, %p150
      %p153 = scmp.ne.s32.totalorder %s138, %s152
      %p154 = scmp.eq.s32.totalorder %s34, 0
      %p155 = por %p153, %p154
      %s157 = sadd.s32 %s156, 1
      %p160 = scmp.eq.s32.totalorder %s28, 1
      %p161 = scmp.ne.s32.totalorder %s156, %s158
      %p162 = scmp.eq.s32.totalorder %s28, 0
      %p163 = por %p161, %p162
      %p164 = scmp.ne.s32.totalorder %s156, %s158
      %p165 = scmp.eq.s32.totalorder %s33, 1
      %p166 = por %p164, %p165
      %p167 = scmp.ne.s32.totalorder %s158, %s159
      %p168 = scmp.eq.s32.totalorder %s33, 0
      %p169 = por %p167, %p168
      %p170 = scmp.ne.s32.totalorder %s158, %s159
      %p171 = scmp.eq.s32.totalorder %s34, 1
      %p172 = por %p170, %p171
      %p174 = scmp.ne.s32.totalorder %s159, %s173
      %p175 = scmp.eq.s32.totalorder %s34, 0
      %p176 = por %p174, %p175
      %s178 = sadd.s32 %s177, 1
      %p181 = scmp.eq.s32.totalorder %s28, 1
      %p182 = scmp.ne.s32.totalorder %s177, %s179
      %p183 = scmp.eq.s32.totalorder %s28, 0
      %p184 = por %p182, %p183
      %p185 = scmp.ne.s32.totalorder %s177, %s179
      %p186 = scmp.eq.s32.totalorder %s33, 1
      %p187 = por %p185, %p186
      %p188 = scmp.ne.s32.totalorder %s179, %s180
      %p189 = scmp.eq.s32.totalorder %s33, 0
      %p190 = por %p188, %p189
      %p191 = scmp.ne.s32.totalorder %s179, %s180
      %p192 = scmp.eq.s32.totalorder %s34, 1
      %p193 = por %p191, %p192
      %p195 = scmp.ne.s32.totalorder %s180, %s194
      %p196 = scmp.eq.s32.totalorder %s34, 0
      %p197 = por %p195, %p196
      %s199 = sadd.s32 %s198, 1
      %p202 = scmp.eq.s32.totalorder %s28, 1
      %p203 = scmp.ne.s32.totalorder %s198, %s200
      %p204 = scmp.eq.s32.totalorder %s28, 0
      %p205 = por %p203, %p204
      %p206 = scmp.ne.s32.totalorder %s198, %s200
      %p207 = scmp.eq.s32.totalorder %s33, 1
      %p208 = por %p206, %p207
      %p209 = scmp.ne.s32.totalorder %s200, %s201
      %p210 = scmp.eq.s32.totalorder %s33, 0
      %p211 = por %p209, %p210
      %p212 = scmp.ne.s32.totalorder %s200, %s201
      %p213 = scmp.eq.s32.totalorder %s34, 1
      %p214 = por %p212, %p213
      %p216 = scmp.ne.s32.totalorder %s201, %s215
      %p217 = scmp.eq.s32.totalorder %s34, 0
      %p218 = por %p216, %p217
      %s220 = sadd.s32 %s219, 1
      %p223 = scmp.eq.s32.totalorder %s28, 1
      %p224 = scmp.ne.s32.totalorder %s219, %s221
      %p225 = scmp.eq.s32.totalorder %s28, 0
      %p226 = por %p224, %p225
      %p227 = scmp.ne.s32.totalorder %s219, %s221
      %p228 = scmp.eq.s32.totalorder %s33, 1
      %p229 = por %p227, %p228
      %p230 = scmp.ne.s32.totalorder %s221, %s222
      %p231 = scmp.eq.s32.totalorder %s33, 0
      %p232 = por %p230, %p231
      %p233 = scmp.ne.s32.totalorder %s221, %s222
      %p234 = scmp.eq.s32.totalorder %s34, 1
      %p235 = por %p233, %p234
      %p237 = scmp.ne.s32.totalorder %s222, %s236
      %p238 = scmp.eq.s32.totalorder %s34, 0
      %p239 = por %p237, %p238
      %s241 = sadd.s32 %s240, 1
      %p244 = scmp.eq.s32.totalorder %s28, 1
      %p245 = scmp.ne.s32.totalorder %s240, %s242
      %p246 = scmp.eq.s32.totalorder %s28, 0
      %p247 = por %p245, %p246
      %p248 = scmp.ne.s32.totalorder %s240, %s242
      %p249 = scmp.eq.s32.totalorder %s33, 1
      %p250 = por %p248, %p249
      %p251 = scmp.ne.s32.totalorder %s242, %s243
      %p252 = scmp.eq.s32.totalorder %s33, 0
      %p253 = por %p251, %p252
      %p254 = scmp.ne.s32.totalorder %s242, %s243
      %p255 = scmp.eq.s32.totalorder %s34, 1
      %p256 = por %p254, %p255
      %p258 = scmp.ne.s32.totalorder %s243, %s257
      %p259 = scmp.eq.s32.totalorder %s34, 0
      %p260 = por %p258, %p259
      %s261 = ssub.s32 %s28, %s35
      %p262 = scmp.eq.s32.totalorder %s261, 0
      %s264 = sadd.s32 %s263, 1
      %s265 = scalar_select %p262, %s263, %s264
      %p268 = pneg %p262
      %p269 = scmp.eq.s32.totalorder %s28, 1
      %p270 = por %p268, %p269
      %p271 = scmp.ne.s32.totalorder %s263, %s266
      %p272 = scmp.eq.s32.totalorder %s28, 0
      %p273 = por %p271, %p272
      %p274 = scmp.ne.s32.totalorder %s263, %s266
      %p275 = scmp.eq.s32.totalorder %s33, 1
      %p276 = por %p274, %p275
      %p277 = scmp.ne.s32.totalorder %s266, %s267
      %p278 = scmp.eq.s32.totalorder %s33, 0
      %p279 = por %p277, %p278
      %p280 = scmp.ne.s32.totalorder %s266, %s267
      %p281 = scmp.eq.s32.totalorder %s34, 1
      %p282 = por %p280, %p281
      %p284 = scmp.ne.s32.totalorder %s267, %s283
      %p285 = scmp.eq.s32.totalorder %s34, 0
      %p286 = por %p284, %p285
      %p287 = scmp.le.s32.totalorder 1, %s28
      %p288 = scmp.lt.s32.totalorder %s28, 3
      %p289 = pnand %p287, %p288
      %p290 = pneg %p289
      // Predicated region
      $region9: #{tpu_custom_call.1} parent=5 // pred_check
        _
      $region10: #{tpu_custom_call.1} parent=5 // pred_check_branch
        %292 = sbr.rel (%p289) target = $region12
      $region11: #{tpu_custom_call.1} parent=5 // pred_region
        %s293 = ssub.s32 %s28, 1
        // Predicated region
        $region13: #{tpu_custom_call.1} parent=11 // pred_check
          %p294 = pneg %p127
        $region14: #{tpu_custom_call.1} parent=11 // pred_check_branch
          %296 = sbr.rel (%p294) target = $region16
        $region15: #{tpu_custom_call.1} parent=11 // pred_region
          %s298 = ssub.s32 512, 512
          %299 = vsyncadd [#allocation13], %s298
          %s300 = sshll.u32 [#allocation12], 4
          %s301 = int_to_ptr.vmem [resolvable:$true] %s300
          %306 = dma.hbm_to_vmem [thread:$0]  %s3, 512, %s301, [#allocation13], 128, 128, 8
        $region16: #{tpu_custom_call.1} parent=11 // pred_fallthru
          _
        // Predicated region
        $region17: #{tpu_custom_call.1} parent=11 // pred_check
          %p307 = pneg %p148
        $region18: #{tpu_custom_call.1} parent=11 // pred_check_branch
          %309 = sbr.rel (%p307) target = $region20
        $region19: #{tpu_custom_call.1} parent=11 // pred_region
          %s311 = ssub.s32 512, 512
          %312 = vsyncadd [#allocation13], %s311
          %s313 = sshll.u32 [#allocation14], 4
          %s314 = int_to_ptr.vmem [resolvable:$true] %s313
          %319 = dma.hbm_to_vmem [thread:$0]  %s4, 512, %s314, [#allocation13], 128, 128, 8
        $region20: #{tpu_custom_call.1} parent=11 // pred_fallthru
          _
        // Predicated region
        $region21: #{tpu_custom_call.1} parent=11 // pred_check
          %p320 = pneg %p169
        $region22: #{tpu_custom_call.1} parent=11 // pred_check_branch
          %322 = sbr.rel (%p320) target = $region24
        $region23: #{tpu_custom_call.1} parent=11 // pred_region
          %s324 = ssub.s32 512, 512
          %325 = vsyncadd [#allocation16], %s324
          %s326 = sshll.u32 [#allocation15], 4
          %s327 = int_to_ptr.vmem [resolvable:$true] %s326
          %332 = dma.hbm_to_vmem [thread:$0]  %s5, 512, %s327, [#allocation16], 128, 128, 8
        $region24: #{tpu_custom_call.1} parent=11 // pred_fallthru
          _
        // Predicated region
        $region25: #{tpu_custom_call.1} parent=11 // pred_check
          %p333 = pneg %p190
        $region26: #{tpu_custom_call.1} parent=11 // pred_check_branch
          %335 = sbr.rel (%p333) target = $region28
        $region27: #{tpu_custom_call.1} parent=11 // pred_region
          %s337 = ssub.s32 512, 512
          %338 = vsyncadd [#allocation16], %s337
          %s339 = sshll.u32 [#allocation17], 4
          %s340 = int_to_ptr.vmem [resolvable:$true] %s339
          %345 = dma.hbm_to_vmem [thread:$0]  %s6, 512, %s340, [#allocation16], 128, 128, 8
        $region28: #{tpu_custom_call.1} parent=11 // pred_fallthru
          _
        // Predicated region
        $region29: #{tpu_custom_call.1} parent=11 // pred_check
          %p346 = pneg %p211
        $region30: #{tpu_custom_call.1} parent=11 // pred_check_branch
          %348 = sbr.rel (%p346) target = $region32
        $region31: #{tpu_custom_call.1} parent=11 // pred_region
          %s350 = ssub.s32 512, 512
          %351 = vsyncadd [#allocation19], %s350
          %s352 = sshll.u32 [#allocation18], 4
          %s353 = int_to_ptr.vmem [resolvable:$true] %s352
          %358 = dma.hbm_to_vmem [thread:$0]  %s7, 512, %s353, [#allocation19], 128, 128, 8
        $region32: #{tpu_custom_call.1} parent=11 // pred_fallthru
          _
        // Predicated region
        $region33: #{tpu_custom_call.1} parent=11 // pred_check
          %p359 = pneg %p232
        $region34: #{tpu_custom_call.1} parent=11 // pred_check_branch
          %361 = sbr.rel (%p359) target = $region36
        $region35: #{tpu_custom_call.1} parent=11 // pred_region
          _
        $region36: #{tpu_custom_call.1} parent=11 // pred_fallthru
          _
        // Predicated region
        $region37: #{tpu_custom_call.1} parent=11 // pred_check
          %p362 = pneg %p253
        $region38: #{tpu_custom_call.1} parent=11 // pred_check_branch
          %364 = sbr.rel (%p362) target = $region40
        $region39: #{tpu_custom_call.1} parent=11 // pred_region
          _
        $region40: #{tpu_custom_call.1} parent=11 // pred_fallthru
          _
      $region12: #{tpu_custom_call.1} parent=5 // pred_fallthru
        _
      %p365 = scmp.lt.s32.totalorder %s28, 2
      // Predicated region
      $region41: #{tpu_custom_call.1} parent=5 // pred_check
        %p366 = pneg %p365
      $region42: #{tpu_custom_call.1} parent=5 // pred_check_branch
        %368 = sbr.rel (%p366) target = $region44
      $region43: #{tpu_custom_call.1} parent=5 // pred_region
        // Predicated region
        $region45: #{tpu_custom_call.1} parent=43 // pred_check
          %p369 = pneg %p48
        $region46: #{tpu_custom_call.1} parent=43 // pred_check_branch
          %371 = sbr.rel (%p369) target = $region48
        $region47: #{tpu_custom_call.1} parent=43 // pred_region
          %s372 = sand.u32 %s38, 1
          %s373 = scalar_lea.sflag [#allocation7], %s372
          %s374 = sand.u32 %s38, 1
          %s375 = smul.addr %s374, 8
          %s376 = scalar_lea.vmem [#allocation6], %s375
          %s378 = ssub.s32 128, 128
          %379 = vsyncadd %s373, %s378
          %s380 = smul.addr %s28, 128
          %s381 = scalar_lea.hbm %s0, %s380
          %s383 = sshll.u32 %s376, 4
          %s384 = int_to_ptr.vmem [resolvable:$true] %s383
          %386 = dma.hbm_to_vmem [thread:$0]  %s381, 128, %s384, %s373
        $region48: #{tpu_custom_call.1} parent=43 // pred_fallthru
          _
        // Predicated region
        $region49: #{tpu_custom_call.1} parent=43 // pred_check
          %p387 = pneg %p74
        $region50: #{tpu_custom_call.1} parent=43 // pred_check_branch
          %389 = sbr.rel (%p387) target = $region52
        $region51: #{tpu_custom_call.1} parent=43 // pred_region
          %s390 = sand.u32 %s28, 1
          %s391 = scalar_lea.sflag [#allocation10], %s390
          %s392 = sand.u32 %s64, 1
          %s393 = smul.addr %s392, 8
          %s394 = scalar_lea.vmem [#allocation9], %s393
          %s396 = ssub.s32 128, 128
          %397 = vsyncadd %s391, %s396
          %s398 = smul.addr %s28, 128
          %s399 = scalar_lea.hbm %s1, %s398
          %s401 = sshll.u32 %s394, 4
          %s402 = int_to_ptr.vmem [resolvable:$true] %s401
          %404 = dma.hbm_to_vmem [thread:$0]  %s399, 128, %s402, %s391
        $region52: #{tpu_custom_call.1} parent=43 // pred_fallthru
          _
        // Predicated region
        $region53: #{tpu_custom_call.1} parent=43 // pred_check
          %p405 = pneg %p100
        $region54: #{tpu_custom_call.1} parent=43 // pred_check_branch
          %407 = sbr.rel (%p405) target = $region56
        $region55: #{tpu_custom_call.1} parent=43 // pred_region
          %s408 = sand.u32 %s28, 1
          %s409 = scalar_lea.sflag [#allocation10], %s408
          %s410 = sand.u32 %s90, 1
          %s411 = smul.addr %s410, 8
          %s412 = scalar_lea.vmem [#allocation11], %s411
          %s414 = ssub.s32 128, 128
          %415 = vsyncadd %s409, %s414
          %s416 = smul.addr %s28, 128
          %s417 = scalar_lea.hbm %s2, %s416
          %s419 = sshll.u32 %s412, 4
          %s420 = int_to_ptr.vmem [resolvable:$true] %s419
          %422 = dma.hbm_to_vmem [thread:$0]  %s417, 128, %s420, %s409
        $region56: #{tpu_custom_call.1} parent=43 // pred_fallthru
          _
      $region44: #{tpu_custom_call.1} parent=5 // pred_fallthru
        _
      %p423 = scmp.le.s32.totalorder 1, %s28
      %p424 = scmp.lt.s32.totalorder %s28, 3
      %p425 = pnand %p423, %p424
      %p426 = pneg %p425
      // Predicated region
      $region57: #{tpu_custom_call.1} parent=5 // pred_check
        _
      $region58: #{tpu_custom_call.1} parent=5 // pred_check_branch
        %428 = sbr.rel (%p425) target = $region60
      $region59: #{tpu_custom_call.1} parent=5 // pred_region
        %s429 = ssub.s32 %s28, 1
        %s430 = sand.u32 %s41, 1
        %s431 = scalar_lea.sflag [#allocation7], %s430
        %s432 = sand.u32 %s41, 1
        %s433 = smul.addr %s432, 8
        %s434 = scalar_lea.vmem [#allocation6], %s433
        // Predicated region
        $region61: #{tpu_custom_call.1} parent=59 // pred_check
          %p435 = pneg %p54
        $region62: #{tpu_custom_call.1} parent=59 // pred_check_branch
          %437 = sbr.rel (%p435) target = $region64
        $region63: #{tpu_custom_call.1} parent=59 // pred_region
          %438 = dma.done %s431, 128
        $region64: #{tpu_custom_call.1} parent=59 // pred_fallthru
          _
        %s439 = sand.u32 %s33, 1
        %s440 = scalar_lea.sflag [#allocation10], %s439
        %s441 = sand.u32 %s67, 1
        %s442 = smul.addr %s441, 8
        %s443 = scalar_lea.vmem [#allocation9], %s442
        // Predicated region
        $region65: #{tpu_custom_call.1} parent=59 // pred_check
          %p444 = pneg %p80
        $region66: #{tpu_custom_call.1} parent=59 // pred_check_branch
          %446 = sbr.rel (%p444) target = $region68
        $region67: #{tpu_custom_call.1} parent=59 // pred_region
          %447 = dma.done %s440, 128
        $region68: #{tpu_custom_call.1} parent=59 // pred_fallthru
          _
        %s448 = sand.u32 %s33, 1
        %s449 = scalar_lea.sflag [#allocation10], %s448
        %s450 = sand.u32 %s93, 1
        %s451 = smul.addr %s450, 8
        %s452 = scalar_lea.vmem [#allocation11], %s451
        // Predicated region
        $region69: #{tpu_custom_call.1} parent=59 // pred_check
          %p453 = pneg %p106
        $region70: #{tpu_custom_call.1} parent=59 // pred_check_branch
          %455 = sbr.rel (%p453) target = $region72
        $region71: #{tpu_custom_call.1} parent=59 // pred_region
          %456 = dma.done %s449, 128
        $region72: #{tpu_custom_call.1} parent=59 // pred_fallthru
          _
        // Predicated region
        $region73: #{tpu_custom_call.1} parent=59 // pred_check
          %p457 = pneg %p127
        $region74: #{tpu_custom_call.1} parent=59 // pred_check_branch
          %459 = sbr.rel (%p457) target = $region76
        $region75: #{tpu_custom_call.1} parent=59 // pred_region
          %460 = dma.done [#allocation13], 512
        $region76: #{tpu_custom_call.1} parent=59 // pred_fallthru
          _
        // Predicated region
        $region77: #{tpu_custom_call.1} parent=59 // pred_check
          %p461 = pneg %p148
        $region78: #{tpu_custom_call.1} parent=59 // pred_check_branch
          %463 = sbr.rel (%p461) target = $region80
        $region79: #{tpu_custom_call.1} parent=59 // pred_region
          %464 = dma.done [#allocation13], 512
        $region80: #{tpu_custom_call.1} parent=59 // pred_fallthru
          _
        // Predicated region
        $region81: #{tpu_custom_call.1} parent=59 // pred_check
          %p465 = pneg %p169
        $region82: #{tpu_custom_call.1} parent=59 // pred_check_branch
          %467 = sbr.rel (%p465) target = $region84
        $region83: #{tpu_custom_call.1} parent=59 // pred_region
          %468 = dma.done [#allocation16], 512
        $region84: #{tpu_custom_call.1} parent=59 // pred_fallthru
          _
        // Predicated region
        $region85: #{tpu_custom_call.1} parent=59 // pred_check
          %p469 = pneg %p190
        $region86: #{tpu_custom_call.1} parent=59 // pred_check_branch
          %471 = sbr.rel (%p469) target = $region88
        $region87: #{tpu_custom_call.1} parent=59 // pred_region
          %472 = dma.done [#allocation16], 512
        $region88: #{tpu_custom_call.1} parent=59 // pred_fallthru
          _
        // Predicated region
        $region89: #{tpu_custom_call.1} parent=59 // pred_check
          %p473 = pneg %p211
        $region90: #{tpu_custom_call.1} parent=59 // pred_check_branch
          %475 = sbr.rel (%p473) target = $region92
        $region91: #{tpu_custom_call.1} parent=59 // pred_region
          %476 = dma.done [#allocation19], 512
        $region92: #{tpu_custom_call.1} parent=59 // pred_fallthru
          _
        %s477 = sand.u32 %s41, 1
        %s478 = scalar_lea.sflag [#allocation7], %s477
        %s479 = sand.u32 %s41, 1
        %s480 = smul.addr %s479, 8
        %s481 = scalar_lea.vmem [#allocation6], %s480
        %p482 = pneg %p54
        %p483 = pneg %p51
        %s484 = sand.u32 %s33, 1
        %s485 = scalar_lea.sflag [#allocation10], %s484
        %s486 = sand.u32 %s67, 1
        %s487 = smul.addr %s486, 8
        %s488 = scalar_lea.vmem [#allocation9], %s487
        %p489 = pneg %p80
        %p490 = pneg %p77
        %s491 = sand.u32 %s33, 1
        %s492 = scalar_lea.sflag [#allocation10], %s491
        %s493 = sand.u32 %s93, 1
        %s494 = smul.addr %s493, 8
        %s495 = scalar_lea.vmem [#allocation11], %s494
        %p496 = pneg %p106
        %p497 = pneg %p103
        %p498 = pneg %p127
        %p499 = pneg %p124
        %p500 = pneg %p148
        %p501 = pneg %p145
        %p502 = pneg %p169
        %p503 = pneg %p166
        %p504 = pneg %p190
        %p505 = pneg %p187
        %p506 = pneg %p211
        %p507 = pneg %p208
        %p508 = pneg %p232
        %p509 = pneg %p229
        %p510 = pneg %p253
        %p511 = pneg %p250
        %p512 = pneg %p279
        %p513 = pneg %p276
        %s514 = sand.u32 %s266, 1
        %s515 = scalar_lea.sflag [#allocation8], %s514
        %s516 = sand.u32 %s266, 1
        %s517 = smul.addr %s516, 8
        %s518 = scalar_lea.vmem [#allocation20], %s517
        %v519 = vld [vmem:[%s434] sm:$0xff]
        %v520 = vld [vmem:[%s443] sm:$0xff]
        %v521 = vld [vmem:[%s452] sm:$0xff]
        %v522 = vld [vmem:[%s8] sm:$0xff]
        %v523 = vld [vmem:[%s9] sm:$0xff]
        %v524 = vld [vmem:[#allocation12] sm:$0xff]
        %v525 = vld [vmem:[#allocation12 + $0x8] sm:$0xff]
        %v526 = vld [vmem:[#allocation12 + $0x10] sm:$0xff]
        %v527 = vld [vmem:[#allocation12 + $0x18] sm:$0xff]
        %vm528 = vcmask 261120
        %v530 = vsel %vm528, %v519, 0
        %532 = vmatprep.subr.mxu0 0.0
        %533 = vmatpush1.msra.mxu0 %v524
        %534 = vmatprep.subr.mxu0 0.0
        %535 = vmatpush1.msra.mxu0 %v525
        %536 = vmatprep.subr.mxu0 0.0
        %537 = vmatpush1.msra.mxu0 %v526
        %538 = vmatprep.subr.mxu0 0.0
        %539 = vmatpush1.msra.mxu0 %v527
        %540 = vmatprep.subr.mxu0 0.0
        %541 = vmatpush1.msra.mxu0 0.0
        %542 = vmatprep.subr.mxu0 0.0
        %543 = vmatpush1.msra.mxu0 0.0
        %544 = vmatprep.subr.mxu0 0.0
        %545 = vmatpush1.msra.mxu0 0.0
        %546 = vmatprep.subr.mxu0 0.0
        %547 = vmatpush1.msra.mxu0 0.0
        %548 = vmatprep.subr.mxu0 0.0
        %549 = vmatpush1.msra.mxu0 0.0
        %550 = vmatprep.subr.mxu0 0.0
        %551 = vmatpush1.msra.mxu0 0.0
        %552 = vmatprep.subr.mxu0 0.0
        %553 = vmatpush1.msra.mxu0 0.0
        %554 = vmatprep.subr.mxu0 0.0
        %555 = vmatpush1.msra.mxu0 0.0
        %556 = vmatprep.subr.mxu0 0.0
        %557 = vmatpush1.msra.mxu0 0.0
        %558 = vmatprep.subr.mxu0 0.0
        %559 = vmatpush1.msra.mxu0 0.0
        %560 = vmatprep.subr.mxu0 0.0
        %561 = vmatpush1.msra.mxu0 0.0
        %562 = vmatprep.subr.mxu0 0.0
        %563 = vmatpush1.msra.mxu0 0.0
        %564 = vmatprep.subr.mxu0 0.0
        %565 = vmatpush1.msra.mxu0 0.0
        %566 = vmatprep.subr.mxu0 0.0
        %567 = vmatpush1.msra.mxu0 0.0
        %568 = vmatprep.subr.mxu0 0.0
        %569 = vmatpush1.msra.mxu0 0.0
        %570 = vmatprep.subr.mxu0 0.0
        %571 = vmatpush1.msra.mxu0 0.0
        %572 = vmatprep.subr.mxu0 0.0
        %573 = vmatpush1.msra.mxu0 0.0
        %574 = vmatprep.subr.mxu0 0.0
        %575 = vmatpush1.msra.mxu0 0.0
        %576 = vmatprep.subr.mxu0 0.0
        %577 = vmatpush1.msra.mxu0 0.0
        %578 = vmatprep.subr.mxu0 0.0
        %579 = vmatpush1.msra.mxu0 0.0
        %580 = vmatprep.subr.mxu0 0.0
        %581 = vmatpush1.msra.mxu0 0.0
        %582 = vmatprep.subr.mxu0 0.0
        %583 = vmatpush1.msra.mxu0 0.0
        %584 = vmatprep.subr.mxu0 0.0
        %585 = vmatpush1.msra.mxu0 0.0
        %586 = vmatprep.subr.mxu0 0.0
        %587 = vmatpush1.msra.mxu0 0.0
        %588 = vmatprep.subr.mxu0 0.0
        %589 = vmatpush1.msra.mxu0 0.0
        %590 = vmatprep.subr.mxu0 0.0
        %591 = vmatpush1.msra.mxu0 0.0
        %592 = vmatprep.subr.mxu0 0.0
        %593 = vmatpush1.msra.mxu0 0.0
        %594 = vmatprep.subr.mxu0 0.0
        %595 = vmatpush1.msra.mxu0 0.0
        %596 = vmatprep.mubr.f32.mxu0 0.0
        %597 = vmatmul.mubr.f32.gmra.mrb[0].mxu0 %v530
        %v598 = vpop.f32.mrb[0].mxu0
        %v599 = vadd.f32 0.0, %v598
        %v600 = vpop.f32.mrb[0].mxu0
        %601 = vdwg.mxu0
        %v602 = vmul.f32 %v599, %v522
        %v603 = vld [vmem:[#allocation14] sm:$0xff]
        %v604 = vld [vmem:[#allocation14 + $0x8] sm:$0xff]
        %v605 = vld [vmem:[#allocation14 + $0x10] sm:$0xff]
        %v606 = vld [vmem:[#allocation14 + $0x18] sm:$0xff]
        %607 = vmatprep.subr.mxu0 0.0
        %608 = vmatpush1.msra.mxu0 %v603
        %609 = vmatprep.subr.mxu0 0.0
        %610 = vmatpush1.msra.mxu0 %v604
        %611 = vmatprep.subr.mxu0 0.0
        %612 = vmatpush1.msra.mxu0 %v605
        %613 = vmatprep.subr.mxu0 0.0
        %614 = vmatpush1.msra.mxu0 %v606
        %615 = vmatprep.subr.mxu0 0.0
        %616 = vmatpush1.msra.mxu0 0.0
        %617 = vmatprep.subr.mxu0 0.0
        %618 = vmatpush1.msra.mxu0 0.0
        %619 = vmatprep.subr.mxu0 0.0
        %620 = vmatpush1.msra.mxu0 0.0
        %621 = vmatprep.subr.mxu0 0.0
        %622 = vmatpush1.msra.mxu0 0.0
        %623 = vmatprep.subr.mxu0 0.0
        %624 = vmatpush1.msra.mxu0 0.0
        %625 = vmatprep.subr.mxu0 0.0
        %626 = vmatpush1.msra.mxu0 0.0
        %627 = vmatprep.subr.mxu0 0.0
        %628 = vmatpush1.msra.mxu0 0.0
        %629 = vmatprep.subr.mxu0 0.0
        %630 = vmatpush1.msra.mxu0 0.0
        %631 = vmatprep.subr.mxu0 0.0
        %632 = vmatpush1.msra.mxu0 0.0
        %633 = vmatprep.subr.mxu0 0.0
        %634 = vmatpush1.msra.mxu0 0.0
        %635 = vmatprep.subr.mxu0 0.0
        %636 = vmatpush1.msra.mxu0 0.0
        %637 = vmatprep.subr.mxu0 0.0
        %638 = vmatpush1.msra.mxu0 0.0
        %639 = vmatprep.subr.mxu0 0.0
        %640 = vmatpush1.msra.mxu0 0.0
        %641 = vmatprep.subr.mxu0 0.0
        %642 = vmatpush1.msra.mxu0 0.0
        %643 = vmatprep.subr.mxu0 0.0
        %644 = vmatpush1.msra.mxu0 0.0
        %645 = vmatprep.subr.mxu0 0.0
        %646 = vmatpush1.msra.mxu0 0.0
        %647 = vmatprep.subr.mxu0 0.0
        %648 = vmatpush1.msra.mxu0 0.0
        %649 = vmatprep.subr.mxu0 0.0
        %650 = vmatpush1.msra.mxu0 0.0
        %651 = vmatprep.subr.mxu0 0.0
        %652 = vmatpush1.msra.mxu0 0.0
        %653 = vmatprep.subr.mxu0 0.0
        %654 = vmatpush1.msra.mxu0 0.0
        %655 = vmatprep.subr.mxu0 0.0
        %656 = vmatpush1.msra.mxu0 0.0
        %657 = vmatprep.subr.mxu0 0.0
        %658 = vmatpush1.msra.mxu0 0.0
        %659 = vmatprep.subr.mxu0 0.0
        %660 = vmatpush1.msra.mxu0 0.0
        %661 = vmatprep.subr.mxu0 0.0
        %662 = vmatpush1.msra.mxu0 0.0
        %663 = vmatprep.subr.mxu0 0.0
        %664 = vmatpush1.msra.mxu0 0.0
        %665 = vmatprep.subr.mxu0 0.0
        %666 = vmatpush1.msra.mxu0 0.0
        %667 = vmatprep.subr.mxu0 0.0
        %668 = vmatpush1.msra.mxu0 0.0
        %669 = vmatprep.subr.mxu0 0.0
        %670 = vmatpush1.msra.mxu0 0.0
        %671 = vmatprep.mubr.f32.mxu0 0.0
        %672 = vmatmul.mubr.f32.gmra.mrb[0].mxu0 %v530
        %v673 = vpop.f32.mrb[0].mxu0
        %v674 = vadd.f32 0.0, %v673
        %v675 = vpop.f32.mrb[0].mxu0
        %676 = vdwg.mxu0
        %v677 = vmul.f32 %v674, %v523
        %v678 = vadd.f32 %v602, %v677
        %v679 = vld [vmem:[#allocation15] sm:$0xff]
        %v680 = vld [vmem:[#allocation15 + $0x8] sm:$0xff]
        %v681 = vld [vmem:[#allocation15 + $0x10] sm:$0xff]
        %v682 = vld [vmem:[#allocation15 + $0x18] sm:$0xff]
        %v684 = vsel %vm528, %v520, 0
        %686 = vmatprep.subr.mxu0 0.0
        %687 = vmatpush1.msra.mxu0 %v679
        %688 = vmatprep.subr.mxu0 0.0
        %689 = vmatpush1.msra.mxu0 %v680
        %690 = vmatprep.subr.mxu0 0.0
        %691 = vmatpush1.msra.mxu0 %v681
        %692 = vmatprep.subr.mxu0 0.0
        %693 = vmatpush1.msra.mxu0 %v682
        %694 = vmatprep.subr.mxu0 0.0
        %695 = vmatpush1.msra.mxu0 0.0
        %696 = vmatprep.subr.mxu0 0.0
        %697 = vmatpush1.msra.mxu0 0.0
        %698 = vmatprep.subr.mxu0 0.0
        %699 = vmatpush1.msra.mxu0 0.0
        %700 = vmatprep.subr.mxu0 0.0
        %701 = vmatpush1.msra.mxu0 0.0
        %702 = vmatprep.subr.mxu0 0.0
        %703 = vmatpush1.msra.mxu0 0.0
        %704 = vmatprep.subr.mxu0 0.0
        %705 = vmatpush1.msra.mxu0 0.0
        %706 = vmatprep.subr.mxu0 0.0
        %707 = vmatpush1.msra.mxu0 0.0
        %708 = vmatprep.subr.mxu0 0.0
        %709 = vmatpush1.msra.mxu0 0.0
        %710 = vmatprep.subr.mxu0 0.0
        %711 = vmatpush1.msra.mxu0 0.0
        %712 = vmatprep.subr.mxu0 0.0
        %713 = vmatpush1.msra.mxu0 0.0
        %714 = vmatprep.subr.mxu0 0.0
        %715 = vmatpush1.msra.mxu0 0.0
        %716 = vmatprep.subr.mxu0 0.0
        %717 = vmatpush1.msra.mxu0 0.0
        %718 = vmatprep.subr.mxu0 0.0
        %719 = vmatpush1.msra.mxu0 0.0
        %720 = vmatprep.subr.mxu0 0.0
        %721 = vmatpush1.msra.mxu0 0.0
        %722 = vmatprep.subr.mxu0 0.0
        %723 = vmatpush1.msra.mxu0 0.0
        %724 = vmatprep.subr.mxu0 0.0
        %725 = vmatpush1.msra.mxu0 0.0
        %726 = vmatprep.subr.mxu0 0.0
        %727 = vmatpush1.msra.mxu0 0.0
        %728 = vmatprep.subr.mxu0 0.0
        %729 = vmatpush1.msra.mxu0 0.0
        %730 = vmatprep.subr.mxu0 0.0
        %731 = vmatpush1.msra.mxu0 0.0
        %732 = vmatprep.subr.mxu0 0.0
        %733 = vmatpush1.msra.mxu0 0.0
        %734 = vmatprep.subr.mxu0 0.0
        %735 = vmatpush1.msra.mxu0 0.0
        %736 = vmatprep.subr.mxu0 0.0
        %737 = vmatpush1.msra.mxu0 0.0
        %738 = vmatprep.subr.mxu0 0.0
        %739 = vmatpush1.msra.mxu0 0.0
        %740 = vmatprep.subr.mxu0 0.0
        %741 = vmatpush1.msra.mxu0 0.0
        %742 = vmatprep.subr.mxu0 0.0
        %743 = vmatpush1.msra.mxu0 0.0
        %744 = vmatprep.subr.mxu0 0.0
        %745 = vmatpush1.msra.mxu0 0.0
        %746 = vmatprep.subr.mxu0 0.0
        %747 = vmatpush1.msra.mxu0 0.0
        %748 = vmatprep.subr.mxu0 0.0
        %749 = vmatpush1.msra.mxu0 0.0
        %750 = vmatprep.mubr.f32.mxu0 0.0
        %751 = vmatmul.mubr.f32.gmra.mrb[0].mxu0 %v684
        %v752 = vpop.f32.mrb[0].mxu0
        %v753 = vadd.f32 0.0, %v752
        %v754 = vpop.f32.mrb[0].mxu0
        %755 = vdwg.mxu0
        %v756 = vmul.f32 %v753, %v522
        %v757 = vld [vmem:[#allocation17] sm:$0xff]
        %v758 = vld [vmem:[#allocation17 + $0x8] sm:$0xff]
        %v759 = vld [vmem:[#allocation17 + $0x10] sm:$0xff]
        %v760 = vld [vmem:[#allocation17 + $0x18] sm:$0xff]
        %761 = vmatprep.subr.mxu0 0.0
        %762 = vmatpush1.msra.mxu0 %v757
        %763 = vmatprep.subr.mxu0 0.0
        %764 = vmatpush1.msra.mxu0 %v758
        %765 = vmatprep.subr.mxu0 0.0
        %766 = vmatpush1.msra.mxu0 %v759
        %767 = vmatprep.subr.mxu0 0.0
        %768 = vmatpush1.msra.mxu0 %v760
        %769 = vmatprep.subr.mxu0 0.0
        %770 = vmatpush1.msra.mxu0 0.0
        %771 = vmatprep.subr.mxu0 0.0
        %772 = vmatpush1.msra.mxu0 0.0
        %773 = vmatprep.subr.mxu0 0.0
        %774 = vmatpush1.msra.mxu0 0.0
        %775 = vmatprep.subr.mxu0 0.0
        %776 = vmatpush1.msra.mxu0 0.0
        %777 = vmatprep.subr.mxu0 0.0
        %778 = vmatpush1.msra.mxu0 0.0
        %779 = vmatprep.subr.mxu0 0.0
        %780 = vmatpush1.msra.mxu0 0.0
        %781 = vmatprep.subr.mxu0 0.0
        %782 = vmatpush1.msra.mxu0 0.0
        %783 = vmatprep.subr.mxu0 0.0
        %784 = vmatpush1.msra.mxu0 0.0
        %785 = vmatprep.subr.mxu0 0.0
        %786 = vmatpush1.msra.mxu0 0.0
        %787 = vmatprep.subr.mxu0 0.0
        %788 = vmatpush1.msra.mxu0 0.0
        %789 = vmatprep.subr.mxu0 0.0
        %790 = vmatpush1.msra.mxu0 0.0
        %791 = vmatprep.subr.mxu0 0.0
        %792 = vmatpush1.msra.mxu0 0.0
        %793 = vmatprep.subr.mxu0 0.0
        %794 = vmatpush1.msra.mxu0 0.0
        %795 = vmatprep.subr.mxu0 0.0
        %796 = vmatpush1.msra.mxu0 0.0
        %797 = vmatprep.subr.mxu0 0.0
        %798 = vmatpush1.msra.mxu0 0.0
        %799 = vmatprep.subr.mxu0 0.0
        %800 = vmatpush1.msra.mxu0 0.0
        %801 = vmatprep.subr.mxu0 0.0
        %802 = vmatpush1.msra.mxu0 0.0
        %803 = vmatprep.subr.mxu0 0.0
        %804 = vmatpush1.msra.mxu0 0.0
        %805 = vmatprep.subr.mxu0 0.0
        %806 = vmatpush1.msra.mxu0 0.0
        %807 = vmatprep.subr.mxu0 0.0
        %808 = vmatpush1.msra.mxu0 0.0
        %809 = vmatprep.subr.mxu0 0.0
        %810 = vmatpush1.msra.mxu0 0.0
        %811 = vmatprep.subr.mxu0 0.0
        %812 = vmatpush1.msra.mxu0 0.0
        %813 = vmatprep.subr.mxu0 0.0
        %814 = vmatpush1.msra.mxu0 0.0
        %815 = vmatprep.subr.mxu0 0.0
        %816 = vmatpush1.msra.mxu0 0.0
        %817 = vmatprep.subr.mxu0 0.0
        %818 = vmatpush1.msra.mxu0 0.0
        %819 = vmatprep.subr.mxu0 0.0
        %820 = vmatpush1.msra.mxu0 0.0
        %821 = vmatprep.subr.mxu0 0.0
        %822 = vmatpush1.msra.mxu0 0.0
        %823 = vmatprep.subr.mxu0 0.0
        %824 = vmatpush1.msra.mxu0 0.0
        %825 = vmatprep.mubr.f32.mxu0 0.0
        %826 = vmatmul.mubr.f32.gmra.mrb[0].mxu0 %v684
        %v827 = vpop.f32.mrb[0].mxu0
        %v828 = vadd.f32 0.0, %v827
        %v829 = vpop.f32.mrb[0].mxu0
        %830 = vdwg.mxu0
        %v831 = vmul.f32 %v828, %v523
        %v832 = vadd.f32 %v756, %v831
        %v833 = vld [vmem:[#allocation18] sm:$0xff]
        %v834 = vld [vmem:[#allocation18 + $0x8] sm:$0xff]
        %v835 = vld [vmem:[#allocation18 + $0x10] sm:$0xff]
        %v836 = vld [vmem:[#allocation18 + $0x18] sm:$0xff]
        %v838 = vsel %vm528, %v521, 0
        %840 = vmatprep.subr.mxu0 0.0
        %841 = vmatpush1.msra.mxu0 %v833
        %842 = vmatprep.subr.mxu0 0.0
        %843 = vmatpush1.msra.mxu0 %v834
        %844 = vmatprep.subr.mxu0 0.0
        %845 = vmatpush1.msra.mxu0 %v835
        %846 = vmatprep.subr.mxu0 0.0
        %847 = vmatpush1.msra.mxu0 %v836
        %848 = vmatprep.subr.mxu0 0.0
        %849 = vmatpush1.msra.mxu0 0.0
        %850 = vmatprep.subr.mxu0 0.0
        %851 = vmatpush1.msra.mxu0 0.0
        %852 = vmatprep.subr.mxu0 0.0
        %853 = vmatpush1.msra.mxu0 0.0
        %854 = vmatprep.subr.mxu0 0.0
        %855 = vmatpush1.msra.mxu0 0.0
        %856 = vmatprep.subr.mxu0 0.0
        %857 = vmatpush1.msra.mxu0 0.0
        %858 = vmatprep.subr.mxu0 0.0
        %859 = vmatpush1.msra.mxu0 0.0
        %860 = vmatprep.subr.mxu0 0.0
        %861 = vmatpush1.msra.mxu0 0.0
        %862 = vmatprep.subr.mxu0 0.0
        %863 = vmatpush1.msra.mxu0 0.0
        %864 = vmatprep.subr.mxu0 0.0
        %865 = vmatpush1.msra.mxu0 0.0
        %866 = vmatprep.subr.mxu0 0.0
        %867 = vmatpush1.msra.mxu0 0.0
        %868 = vmatprep.subr.mxu0 0.0
        %869 = vmatpush1.msra.mxu0 0.0
        %870 = vmatprep.subr.mxu0 0.0
        %871 = vmatpush1.msra.mxu0 0.0
        %872 = vmatprep.subr.mxu0 0.0
        %873 = vmatpush1.msra.mxu0 0.0
        %874 = vmatprep.subr.mxu0 0.0
        %875 = vmatpush1.msra.mxu0 0.0
        %876 = vmatprep.subr.mxu0 0.0
        %877 = vmatpush1.msra.mxu0 0.0
        %878 = vmatprep.subr.mxu0 0.0
        %879 = vmatpush1.msra.mxu0 0.0
        %880 = vmatprep.subr.mxu0 0.0
        %881 = vmatpush1.msra.mxu0 0.0
        %882 = vmatprep.subr.mxu0 0.0
        %883 = vmatpush1.msra.mxu0 0.0
        %884 = vmatprep.subr.mxu0 0.0
        %885 = vmatpush1.msra.mxu0 0.0
        %886 = vmatprep.subr.mxu0 0.0
        %887 = vmatpush1.msra.mxu0 0.0
        %888 = vmatprep.subr.mxu0 0.0
        %889 = vmatpush1.msra.mxu0 0.0
        %890 = vmatprep.subr.mxu0 0.0
        %891 = vmatpush1.msra.mxu0 0.0
        %892 = vmatprep.subr.mxu0 0.0
        %893 = vmatpush1.msra.mxu0 0.0
        %894 = vmatprep.subr.mxu0 0.0
        %895 = vmatpush1.msra.mxu0 0.0
        %896 = vmatprep.subr.mxu0 0.0
        %897 = vmatpush1.msra.mxu0 0.0
        %898 = vmatprep.subr.mxu0 0.0
        %899 = vmatpush1.msra.mxu0 0.0
        %900 = vmatprep.subr.mxu0 0.0
        %901 = vmatpush1.msra.mxu0 0.0
        %902 = vmatprep.subr.mxu0 0.0
        %903 = vmatpush1.msra.mxu0 0.0
        %904 = vmatprep.mubr.f32.mxu0 0.0
        %905 = vmatmul.mubr.f32.gmra.mrb[0].mxu0 %v838
        %v906 = vpop.f32.mrb[0].mxu0
        %v907 = vadd.f32 0.0, %v906
        %v908 = vpop.f32.mrb[0].mxu0
        %909 = vdwg.mxu0
        %910 = vst.msk [vmem:[#allocation2] sm:$0xff] %vm528, %v678
        %911 = vst.msk [vmem:[#allocation3] sm:$0xff] %vm528, %v832
        %912 = vst.msk [vmem:[#allocation4] sm:$0xff] %vm528, %v907
        %914 = vrot.lane.b32.xlu0 %v678, 96
        %v915 = vpop.permute.xlu0 %914
        %s917 = scalar_lea.vmem [#allocation2], 8
        %918 = vst.msk [vmem:[%s917] sm:$0xff] %vm528, %v915
        %920 = vrot.lane.b32.xlu0 %v832, 96
        %v921 = vpop.permute.xlu0 %920
        %s923 = scalar_lea.vmem [#allocation3], 8
        %924 = vst.msk [vmem:[%s923] sm:$0xff] %vm528, %v921
        %926 = vrot.lane.b32.xlu0 %v907, 96
        %v927 = vpop.permute.xlu0 %926
        %s929 = scalar_lea.vmem [#allocation4], 8
        %930 = vst.msk [vmem:[%s929] sm:$0xff] %vm528, %v927
        %931 = vst.msk [vmem:[#allocation5] sm:$0xff] %vm528, 0.0
        %v932 = vld [vmem:[#allocation2] sm:$0xff]
        %v933 = vld [vmem:[#allocation3] sm:$0xff]
        %v934 = vld [vmem:[#allocation4] sm:$0xff]
        %v936 = vsel %vm528, %v932, 0
        %v939 = vsel %vm528, %v933, 0
        %941 = vmatprep.subr.mxu0 0.0
        %942 = vmatpush1.xpose.msra.mxu0 %v939
        %943 = vmatprep.subr.mxu0 0.0
        %944 = vmatpush1.xpose.msra.mxu0 0.0
        %945 = vmatprep.subr.mxu0 0.0
        %946 = vmatpush1.xpose.msra.mxu0 0.0
        %947 = vmatprep.subr.mxu0 0.0
        %948 = vmatpush1.xpose.msra.mxu0 0.0
        %949 = vmatprep.subr.mxu0 0.0
        %950 = vmatpush1.xpose.msra.mxu0 0.0
        %951 = vmatprep.subr.mxu0 0.0
        %952 = vmatpush1.xpose.msra.mxu0 0.0
        %953 = vmatprep.subr.mxu0 0.0
        %954 = vmatpush1.xpose.msra.mxu0 0.0
        %955 = vmatprep.subr.mxu0 0.0
        %956 = vmatpush1.xpose.msra.mxu0 0.0
        %957 = vmatprep.subr.mxu0 0.0
        %958 = vmatpush1.xpose.msra.mxu0 0.0
        %959 = vmatprep.subr.mxu0 0.0
        %960 = vmatpush1.xpose.msra.mxu0 0.0
        %961 = vmatprep.subr.mxu0 0.0
        %962 = vmatpush1.xpose.msra.mxu0 0.0
        %963 = vmatprep.subr.mxu0 0.0
        %964 = vmatpush1.xpose.msra.mxu0 0.0
        %965 = vmatprep.subr.mxu0 0.0
        %966 = vmatpush1.xpose.msra.mxu0 0.0
        %967 = vmatprep.subr.mxu0 0.0
        %968 = vmatpush1.xpose.msra.mxu0 0.0
        %969 = vmatprep.subr.mxu0 0.0
        %970 = vmatpush1.xpose.msra.mxu0 0.0
        %971 = vmatprep.subr.mxu0 0.0
        %972 = vmatpush1.xpose.msra.mxu0 0.0
        %973 = vmatprep.subr.mxu0 0.0
        %974 = vmatpush1.xpose.msra.mxu0 0.0
        %975 = vmatprep.subr.mxu0 0.0
        %976 = vmatpush1.xpose.msra.mxu0 0.0
        %977 = vmatprep.subr.mxu0 0.0
        %978 = vmatpush1.xpose.msra.mxu0 0.0
        %979 = vmatprep.subr.mxu0 0.0
        %980 = vmatpush1.xpose.msra.mxu0 0.0
        %981 = vmatprep.subr.mxu0 0.0
        %982 = vmatpush1.xpose.msra.mxu0 0.0
        %983 = vmatprep.subr.mxu0 0.0
        %984 = vmatpush1.xpose.msra.mxu0 0.0
        %985 = vmatprep.subr.mxu0 0.0
        %986 = vmatpush1.xpose.msra.mxu0 0.0
        %987 = vmatprep.subr.mxu0 0.0
        %988 = vmatpush1.xpose.msra.mxu0 0.0
        %989 = vmatprep.subr.mxu0 0.0
        %990 = vmatpush1.xpose.msra.mxu0 0.0
        %991 = vmatprep.subr.mxu0 0.0
        %992 = vmatpush1.xpose.msra.mxu0 0.0
        %993 = vmatprep.subr.mxu0 0.0
        %994 = vmatpush1.xpose.msra.mxu0 0.0
        %995 = vmatprep.subr.mxu0 0.0
        %996 = vmatpush1.xpose.msra.mxu0 0.0
        %997 = vmatprep.subr.mxu0 0.0
        %998 = vmatpush1.xpose.msra.mxu0 0.0
        %999 = vmatprep.subr.mxu0 0.0
        %1000 = vmatpush1.xpose.msra.mxu0 0.0
        %1001 = vmatprep.subr.mxu0 0.0
        %1002 = vmatpush1.xpose.msra.mxu0 0.0
        %1003 = vmatprep.subr.mxu0 0.0
        %1004 = vmatpush1.xpose.msra.mxu0 0.0
        %1005 = vmatprep.mubr.f32.mxu0 0.0
        %1006 = vmatmul.mubr.f32.gmra.mrb[0].mxu0 %v936
        %v1007 = vpop.f32.mrb[0].mxu0
        %v1008 = vadd.f32 0.0, %v1007
        %v1009 = vpop.f32.mrb[0].mxu0
        %1010 = vdwg.mxu0
        %v1011 = vlaneseq
        %v1012 = vshrl.u32 %v1011, 7
        %v1013 = vlaneseq
        %v1014 = vand.u32 %v1013, 127
        %vm1015 = vcmp.gt.s32.totalorder %v1014, %v1012
        %v1016 = vsel %vm1015, -1e+30, %v1008
        %vm1017 = vcmask 64512
        %v1018 = vsel %vm1017, %v1016, -inf
        %1019 = vmax.xlane.f32.xlu0 %v1018
        %v1020 = vpop.xlane.xlu0 %1019
        %v1021 = vsub.f32 %v1016, %v1020
        %v1022 = vmul.f32 %v1021, 1.442695
        %v1023 = vpow.pop %v1022
        %v1024 = vsel %vm1017, %v1023, 0.0
        %1025 = vadd.xlane.f32.xlu0 %v1024
        %v1026 = vpop.xlane.xlu0 %1025
        %v1027 = vrcp.pop %v1026
        %v1028 = vmul.f32 %v1023, %v1027
        %vm1029 = vcmp.eq.s32.totalorder %v1014, %v1012
        %v1030 = vsel %vm1029, 0.0, %v1028
        %v1031 = vld [vmem:[#allocation5] sm:$0xff]
        %1032 = vxpose.xlu0.b32.start [1/16] %v1030, 128
        %1033 = vxpose.xlu0.b32.cont [2/16] 0.0, 128
        %1034 = vxpose.xlu0.b32.cont [3/16] 0.0, 128
        %1035 = vxpose.xlu0.b32.cont [4/16] 0.0, 128
        %1036 = vxpose.xlu0.b32.cont [5/16] 0.0, 128
        %1037 = vxpose.xlu0.b32.cont [6/16] 0.0, 128
        %1038 = vxpose.xlu0.b32.cont [7/16] 0.0, 128
        %1039 = vxpose.xlu0.b32.cont [8/16] 0.0, 128
        %1040 = vxpose.xlu0.b32.cont [9/16] 0.0, 128
        %1041 = vxpose.xlu0.b32.cont [10/16] 0.0, 128
        %1042 = vxpose.xlu0.b32.cont [11/16] 0.0, 128
        %1043 = vxpose.xlu0.b32.cont [12/16] 0.0, 128
        %1044 = vxpose.xlu0.b32.cont [13/16] 0.0, 128
        %1045 = vxpose.xlu0.b32.cont [14/16] 0.0, 128
        %1046 = vxpose.xlu0.b32.cont [15/16] 0.0, 128
        %1047 = vxpose.xlu0.b32.end [16/16] 0.0, 128
        %v1048 = vpop.trf.xlu0
        %v1049 = vpop.trf.xlu0
        %v1050 = vpop.trf.xlu0
        %v1051 = vpop.trf.xlu0
        %v1052 = vpop.trf.xlu0
        %v1053 = vpop.trf.xlu0
        %v1054 = vpop.trf.xlu0
        %v1055 = vpop.trf.xlu0
        %v1056 = vpop.trf.xlu0
        %v1057 = vpop.trf.xlu0
        %v1058 = vpop.trf.xlu0
        %v1059 = vpop.trf.xlu0
        %v1060 = vpop.trf.xlu0
        %v1061 = vpop.trf.xlu0
        %v1062 = vpop.trf.xlu0
        %v1063 = vpop.trf.xlu0
        %v1065 = vsel %vm1017, %v1048, 0
        %1067 = vmatprep.subr.mxu0 0.0
        %1068 = vmatpush1.msra.mxu0 %v934
        %1069 = vmatprep.subr.mxu0 0.0
        %1070 = vmatpush1.msra.mxu0 0.0
        %1071 = vmatprep.subr.mxu0 0.0
        %1072 = vmatpush1.msra.mxu0 0.0
        %1073 = vmatprep.subr.mxu0 0.0
        %1074 = vmatpush1.msra.mxu0 0.0
        %1075 = vmatprep.subr.mxu0 0.0
        %1076 = vmatpush1.msra.mxu0 0.0
        %1077 = vmatprep.subr.mxu0 0.0
        %1078 = vmatpush1.msra.mxu0 0.0
        %1079 = vmatprep.subr.mxu0 0.0
        %1080 = vmatpush1.msra.mxu0 0.0
        %1081 = vmatprep.subr.mxu0 0.0
        %1082 = vmatpush1.msra.mxu0 0.0
        %1083 = vmatprep.subr.mxu0 0.0
        %1084 = vmatpush1.msra.mxu0 0.0
        %1085 = vmatprep.subr.mxu0 0.0
        %1086 = vmatpush1.msra.mxu0 0.0
        %1087 = vmatprep.subr.mxu0 0.0
        %1088 = vmatpush1.msra.mxu0 0.0
        %1089 = vmatprep.subr.mxu0 0.0
        %1090 = vmatpush1.msra.mxu0 0.0
        %1091 = vmatprep.subr.mxu0 0.0
        %1092 = vmatpush1.msra.mxu0 0.0
        %1093 = vmatprep.subr.mxu0 0.0
        %1094 = vmatpush1.msra.mxu0 0.0
        %1095 = vmatprep.subr.mxu0 0.0
        %1096 = vmatpush1.msra.mxu0 0.0
        %1097 = vmatprep.subr.mxu0 0.0
        %1098 = vmatpush1.msra.mxu0 0.0
        %1099 = vmatprep.subr.mxu0 0.0
        %1100 = vmatpush1.msra.mxu0 0.0
        %1101 = vmatprep.subr.mxu0 0.0
        %1102 = vmatpush1.msra.mxu0 0.0
        %1103 = vmatprep.subr.mxu0 0.0
        %1104 = vmatpush1.msra.mxu0 0.0
        %1105 = vmatprep.subr.mxu0 0.0
        %1106 = vmatpush1.msra.mxu0 0.0
        %1107 = vmatprep.subr.mxu0 0.0
        %1108 = vmatpush1.msra.mxu0 0.0
        %1109 = vmatprep.subr.mxu0 0.0
        %1110 = vmatpush1.msra.mxu0 0.0
        %1111 = vmatprep.subr.mxu0 0.0
        %1112 = vmatpush1.msra.mxu0 0.0
        %1113 = vmatprep.subr.mxu0 0.0
        %1114 = vmatpush1.msra.mxu0 0.0
        %1115 = vmatprep.subr.mxu0 0.0
        %1116 = vmatpush1.msra.mxu0 0.0
        %1117 = vmatprep.subr.mxu0 0.0
        %1118 = vmatpush1.msra.mxu0 0.0
        %1119 = vmatprep.subr.mxu0 0.0
        %1120 = vmatpush1.msra.mxu0 0.0
        %1121 = vmatprep.subr.mxu0 0.0
        %1122 = vmatpush1.msra.mxu0 0.0
        %1123 = vmatprep.subr.mxu0 0.0
        %1124 = vmatpush1.msra.mxu0 0.0
        %1125 = vmatprep.subr.mxu0 0.0
        %1126 = vmatpush1.msra.mxu0 0.0
        %1127 = vmatprep.subr.mxu0 0.0
        %1128 = vmatpush1.msra.mxu0 0.0
        %1129 = vmatprep.subr.mxu0 0.0
        %1130 = vmatpush1.msra.mxu0 0.0
        %1131 = vmatprep.mubr.f32.mxu0 0.0
        %1132 = vmatmul.mubr.f32.gmra.mrb[0].mxu0 %v1065
        %v1133 = vpop.f32.mrb[0].mxu0
        %v1134 = vadd.f32 0.0, %v1133
        %v1135 = vpop.f32.mrb[0].mxu0
        %1136 = vdwg.mxu0
        %v1137 = vadd.f32 %v1031, %v1134
        %1138 = vst.msk [vmem:[#allocation5] sm:$0xff] %vm528, %v1137
        %v1139 = vld [vmem:[%s917] sm:$0xff]
        %v1140 = vld [vmem:[%s923] sm:$0xff]
        %v1141 = vld [vmem:[%s929] sm:$0xff]
        %v1143 = vsel %vm528, %v1139, 0
        %v1146 = vsel %vm528, %v1140, 0
        %1148 = vmatprep.subr.mxu0 0.0
        %1149 = vmatpush1.xpose.msra.mxu0 %v1146
        %1150 = vmatprep.subr.mxu0 0.0
        %1151 = vmatpush1.xpose.msra.mxu0 0.0
        %1152 = vmatprep.subr.mxu0 0.0
        %1153 = vmatpush1.xpose.msra.mxu0 0.0
        %1154 = vmatprep.subr.mxu0 0.0
        %1155 = vmatpush1.xpose.msra.mxu0 0.0
        %1156 = vmatprep.subr.mxu0 0.0
        %1157 = vmatpush1.xpose.msra.mxu0 0.0
        %1158 = vmatprep.subr.mxu0 0.0
        %1159 = vmatpush1.xpose.msra.mxu0 0.0
        %1160 = vmatprep.subr.mxu0 0.0
        %1161 = vmatpush1.xpose.msra.mxu0 0.0
        %1162 = vmatprep.subr.mxu0 0.0
        %1163 = vmatpush1.xpose.msra.mxu0 0.0
        %1164 = vmatprep.subr.mxu0 0.0
        %1165 = vmatpush1.xpose.msra.mxu0 0.0
        %1166 = vmatprep.subr.mxu0 0.0
        %1167 = vmatpush1.xpose.msra.mxu0 0.0
        %1168 = vmatprep.subr.mxu0 0.0
        %1169 = vmatpush1.xpose.msra.mxu0 0.0
        %1170 = vmatprep.subr.mxu0 0.0
        %1171 = vmatpush1.xpose.msra.mxu0 0.0
        %1172 = vmatprep.subr.mxu0 0.0
        %1173 = vmatpush1.xpose.msra.mxu0 0.0
        %1174 = vmatprep.subr.mxu0 0.0
        %1175 = vmatpush1.xpose.msra.mxu0 0.0
        %1176 = vmatprep.subr.mxu0 0.0
        %1177 = vmatpush1.xpose.msra.mxu0 0.0
        %1178 = vmatprep.subr.mxu0 0.0
        %1179 = vmatpush1.xpose.msra.mxu0 0.0
        %1180 = vmatprep.subr.mxu0 0.0
        %1181 = vmatpush1.xpose.msra.mxu0 0.0
        %1182 = vmatprep.subr.mxu0 0.0
        %1183 = vmatpush1.xpose.msra.mxu0 0.0
        %1184 = vmatprep.subr.mxu0 0.0
        %1185 = vmatpush1.xpose.msra.mxu0 0.0
        %1186 = vmatprep.subr.mxu0 0.0
        %1187 = vmatpush1.xpose.msra.mxu0 0.0
        %1188 = vmatprep.subr.mxu0 0.0
        %1189 = vmatpush1.xpose.msra.mxu0 0.0
        %1190 = vmatprep.subr.mxu0 0.0
        %1191 = vmatpush1.xpose.msra.mxu0 0.0
        %1192 = vmatprep.subr.mxu0 0.0
        %1193 = vmatpush1.xpose.msra.mxu0 0.0
        %1194 = vmatprep.subr.mxu0 0.0
        %1195 = vmatpush1.xpose.msra.mxu0 0.0
        %1196 = vmatprep.subr.mxu0 0.0
        %1197 = vmatpush1.xpose.msra.mxu0 0.0
        %1198 = vmatprep.subr.mxu0 0.0
        %1199 = vmatpush1.xpose.msra.mxu0 0.0
        %1200 = vmatprep.subr.mxu0 0.0
        %1201 = vmatpush1.xpose.msra.mxu0 0.0
        %1202 = vmatprep.subr.mxu0 0.0
        %1203 = vmatpush1.xpose.msra.mxu0 0.0
        %1204 = vmatprep.subr.mxu0 0.0
        %1205 = vmatpush1.xpose.msra.mxu0 0.0
        %1206 = vmatprep.subr.mxu0 0.0
        %1207 = vmatpush1.xpose.msra.mxu0 0.0
        %1208 = vmatprep.subr.mxu0 0.0
        %1209 = vmatpush1.xpose.msra.mxu0 0.0
        %1210 = vmatprep.subr.mxu0 0.0
        %1211 = vmatpush1.xpose.msra.mxu0 0.0
        %1212 = vmatprep.mubr.f32.mxu0 0.0
        %1213 = vmatmul.mubr.f32.gmra.mrb[0].mxu0 %v1143
        %v1214 = vpop.f32.mrb[0].mxu0
        %v1215 = vadd.f32 0.0, %v1214
        %v1216 = vpop.f32.mrb[0].mxu0
        %1217 = vdwg.mxu0
        %v1218 = vsel %vm1015, -1e+30, %v1215
        %v1219 = vsel %vm1017, %v1218, -inf
        %1220 = vmax.xlane.f32.xlu0 %v1219
        %v1221 = vpop.xlane.xlu0 %1220
        %v1222 = vsub.f32 %v1218, %v1221
        %v1223 = vmul.f32 %v1222, 1.442695
        %v1224 = vpow.pop %v1223
        %v1225 = vsel %vm1017, %v1224, 0.0
        %1226 = vadd.xlane.f32.xlu0 %v1225
        %v1227 = vpop.xlane.xlu0 %1226
        %v1228 = vrcp.pop %v1227
        %v1229 = vmul.f32 %v1224, %v1228
        %v1230 = vsel %vm1029, 0.0, %v1229
        %v1231 = vld [vmem:[#allocation5] sm:$0xff]
        %1232 = vxpose.xlu0.b32.start [1/16] %v1230, 128
        %1233 = vxpose.xlu0.b32.cont [2/16] 0.0, 128
        %1234 = vxpose.xlu0.b32.cont [3/16] 0.0, 128
        %1235 = vxpose.xlu0.b32.cont [4/16] 0.0, 128
        %1236 = vxpose.xlu0.b32.cont [5/16] 0.0, 128
        %1237 = vxpose.xlu0.b32.cont [6/16] 0.0, 128
        %1238 = vxpose.xlu0.b32.cont [7/16] 0.0, 128
        %1239 = vxpose.xlu0.b32.cont [8/16] 0.0, 128
        %1240 = vxpose.xlu0.b32.cont [9/16] 0.0, 128
        %1241 = vxpose.xlu0.b32.cont [10/16] 0.0, 128
        %1242 = vxpose.xlu0.b32.cont [11/16] 0.0, 128
        %1243 = vxpose.xlu0.b32.cont [12/16] 0.0, 128
        %1244 = vxpose.xlu0.b32.cont [13/16] 0.0, 128
        %1245 = vxpose.xlu0.b32.cont [14/16] 0.0, 128
        %1246 = vxpose.xlu0.b32.cont [15/16] 0.0, 128
        %1247 = vxpose.xlu0.b32.end [16/16] 0.0, 128
        %v1248 = vpop.trf.xlu0
        %v1249 = vpop.trf.xlu0
        %v1250 = vpop.trf.xlu0
        %v1251 = vpop.trf.xlu0
        %v1252 = vpop.trf.xlu0
        %v1253 = vpop.trf.xlu0
        %v1254 = vpop.trf.xlu0
        %v1255 = vpop.trf.xlu0
        %v1256 = vpop.trf.xlu0
        %v1257 = vpop.trf.xlu0
        %v1258 = vpop.trf.xlu0
        %v1259 = vpop.trf.xlu0
        %v1260 = vpop.trf.xlu0
        %v1261 = vpop.trf.xlu0
        %v1262 = vpop.trf.xlu0
        %v1263 = vpop.trf.xlu0
        %v1265 = vsel %vm1017, %v1248, 0
        %1267 = vmatprep.subr.mxu0 0.0
        %1268 = vmatpush1.msra.mxu0 %v1141
        %1269 = vmatprep.subr.mxu0 0.0
        %1270 = vmatpush1.msra.mxu0 0.0
        %1271 = vmatprep.subr.mxu0 0.0
        %1272 = vmatpush1.msra.mxu0 0.0
        %1273 = vmatprep.subr.mxu0 0.0
        %1274 = vmatpush1.msra.mxu0 0.0
        %1275 = vmatprep.subr.mxu0 0.0
        %1276 = vmatpush1.msra.mxu0 0.0
        %1277 = vmatprep.subr.mxu0 0.0
        %1278 = vmatpush1.msra.mxu0 0.0
        %1279 = vmatprep.subr.mxu0 0.0
        %1280 = vmatpush1.msra.mxu0 0.0
        %1281 = vmatprep.subr.mxu0 0.0
        %1282 = vmatpush1.msra.mxu0 0.0
        %1283 = vmatprep.subr.mxu0 0.0
        %1284 = vmatpush1.msra.mxu0 0.0
        %1285 = vmatprep.subr.mxu0 0.0
        %1286 = vmatpush1.msra.mxu0 0.0
        %1287 = vmatprep.subr.mxu0 0.0
        %1288 = vmatpush1.msra.mxu0 0.0
        %1289 = vmatprep.subr.mxu0 0.0
        %1290 = vmatpush1.msra.mxu0 0.0
        %1291 = vmatprep.subr.mxu0 0.0
        %1292 = vmatpush1.msra.mxu0 0.0
        %1293 = vmatprep.subr.mxu0 0.0
        %1294 = vmatpush1.msra.mxu0 0.0
        %1295 = vmatprep.subr.mxu0 0.0
        %1296 = vmatpush1.msra.mxu0 0.0
        %1297 = vmatprep.subr.mxu0 0.0
        %1298 = vmatpush1.msra.mxu0 0.0
        %1299 = vmatprep.subr.mxu0 0.0
        %1300 = vmatpush1.msra.mxu0 0.0
        %1301 = vmatprep.subr.mxu0 0.0
        %1302 = vmatpush1.msra.mxu0 0.0
        %1303 = vmatprep.subr.mxu0 0.0
        %1304 = vmatpush1.msra.mxu0 0.0
        %1305 = vmatprep.subr.mxu0 0.0
        %1306 = vmatpush1.msra.mxu0 0.0
        %1307 = vmatprep.subr.mxu0 0.0
        %1308 = vmatpush1.msra.mxu0 0.0
        %1309 = vmatprep.subr.mxu0 0.0
        %1310 = vmatpush1.msra.mxu0 0.0
        %1311 = vmatprep.subr.mxu0 0.0
        %1312 = vmatpush1.msra.mxu0 0.0
        %1313 = vmatprep.subr.mxu0 0.0
        %1314 = vmatpush1.msra.mxu0 0.0
        %1315 = vmatprep.subr.mxu0 0.0
        %1316 = vmatpush1.msra.mxu0 0.0
        %1317 = vmatprep.subr.mxu0 0.0
        %1318 = vmatpush1.msra.mxu0 0.0
        %1319 = vmatprep.subr.mxu0 0.0
        %1320 = vmatpush1.msra.mxu0 0.0
        %1321 = vmatprep.subr.mxu0 0.0
        %1322 = vmatpush1.msra.mxu0 0.0
        %1323 = vmatprep.subr.mxu0 0.0
        %1324 = vmatpush1.msra.mxu0 0.0
        %1325 = vmatprep.subr.mxu0 0.0
        %1326 = vmatpush1.msra.mxu0 0.0
        %1327 = vmatprep.subr.mxu0 0.0
        %1328 = vmatpush1.msra.mxu0 0.0
        %1329 = vmatprep.subr.mxu0 0.0
        %1330 = vmatpush1.msra.mxu0 0.0
        %1331 = vmatprep.mubr.f32.mxu0 0.0
        %1332 = vmatmul.mubr.f32.gmra.mrb[0].mxu0 %v1265
        %v1333 = vpop.f32.mrb[0].mxu0
        %v1334 = vadd.f32 0.0, %v1333
        %v1335 = vpop.f32.mrb[0].mxu0
        %1336 = vdwg.mxu0
        %v1337 = vadd.f32 %v1231, %v1334
        %1338 = vst.msk [vmem:[#allocation5] sm:$0xff] %vm528, %v1337
        %v1339 = vld [vmem:[#allocation5] sm:$0xff]
        %1340 = vst.msk [vmem:[%s518] sm:$0xff] %vm528, %v1339
        %s1341 = sand.u32 %s266, 1
        %s1342 = scalar_lea.sflag [#allocation8], %s1341
        %s1343 = sand.u32 %s266, 1
        %s1344 = smul.addr %s1343, 8
        %s1345 = scalar_lea.vmem [#allocation20], %s1344
        // Predicated region
        $region93: #{tpu_custom_call.1} parent=59 // pred_check
          %p1346 = pneg %p276
        $region94: #{tpu_custom_call.1} parent=59 // pred_check_branch
          %1348 = sbr.rel (%p1346) target = $region96
        $region95: #{tpu_custom_call.1} parent=59 // pred_region
          %s1350 = ssub.s32 128, 128
          %1351 = vsyncadd %s1342, %s1350
          %s1352 = smul.addr %s33, 128
          %s1353 = scalar_lea.hbm %s10, %s1352
          %s1355 = sshll.u32 %s1345, 4
          %s1356 = int_to_ptr.vmem [resolvable:$true] %s1355
          %1358 = dma.vmem_to_hbm [thread:$0]  %s1356, 128, %s1353, %s1342
        $region96: #{tpu_custom_call.1} parent=59 // pred_fallthru
          _
      $region60: #{tpu_custom_call.1} parent=5 // pred_fallthru
        _
      %p1359 = scmp.le.s32.totalorder 2, %s28
      // Predicated region
      $region97: #{tpu_custom_call.1} parent=5 // pred_check
        %p1360 = pneg %p1359
      $region98: #{tpu_custom_call.1} parent=5 // pred_check_branch
        %1362 = sbr.rel (%p1360) target = $region100
      $region99: #{tpu_custom_call.1} parent=5 // pred_region
        %s1363 = ssub.s32 %s28, 2
        // Predicated region
        $region101: #{tpu_custom_call.1} parent=99 // pred_check
          %p1364 = pneg %p282
        $region102: #{tpu_custom_call.1} parent=99 // pred_check_branch
          %1366 = sbr.rel (%p1364) target = $region104
        $region103: #{tpu_custom_call.1} parent=99 // pred_region
          %s1367 = sand.u32 %s267, 1
          %s1368 = scalar_lea.sflag [#allocation8], %s1367
          %s1369 = sand.u32 %s267, 1
          %s1370 = smul.addr %s1369, 8
          %s1371 = scalar_lea.vmem [#allocation20], %s1370
          %1372 = dma.done %s1368, 128
        $region104: #{tpu_custom_call.1} parent=99 // pred_fallthru
          _
      $region100: #{tpu_custom_call.1} parent=5 // pred_fallthru
        _
    $region6: #{tpu_custom_call.1} parent=1 // loop_footer
      %s32 = sadd.s32 1, %s28
    $region7: #{tpu_custom_call.1} parent=1 // loop_footer_branch
      %27 = sbr.rel target = $region3
    $region8: #{tpu_custom_call.1} parent=1 // loop_exit
      _
    %1373 = vsyncpa [#allocation7], 1
    %s1374 = scalar_lea.sflag [#allocation7], 1
    %1375 = vsyncpa %s1374, 1
    %1376 = vsyncpa [#allocation10], 1
    %s1377 = scalar_lea.sflag [#allocation10], 1
    %1378 = vsyncpa %s1377, 1
    %1379 = vsyncpa [#allocation13], 1
    %1380 = vsyncpa [#allocation16], 1
    %1381 = vsyncpa [#allocation19], 1
    %1382 = vsyncpa [#allocation8], 1
    %s1383 = scalar_lea.sflag [#allocation8], 1
    %1384 = vsyncpa %s1383, 1

</llo_original>
